<compile_context>
chip_gen: v5e
topology: v5e:2x2
jax: 0.10.0
libtpu: 0.0.40
codegen_flags: <defaults>
</compile_context>

<pallas_src>
import functools
import math

import jax
import jax.numpy as jnp
from jax.experimental import pallas as pl
from jax.experimental.pallas import tpu as pltpu


def _fused_convlstm2_kernel(
    x_ref, h1_ref, c1_ref, h2_ref, c2_ref,
    w1x_ref, w1h_ref, b1_ref, w2x_ref, w2h_ref, b2_ref,
    h1o_ref, c1o_ref, h2o_ref, c2o_ref,
    *, K1, K2, H, W, Hc1, Hc2):
  """One batch element per grid step.  All spatial tensors are (C, H*W)."""
  HW = H * W
  f32 = jnp.float32

  # x-coordinate of every lane (for masking horizontal taps at row edges).
  xcol = jax.lax.broadcasted_iota(jnp.int32, (1, HW), 1) % W

  def shift2d(v, dy, dx):
    """out[:, y*W + x] = v[:, (y+dy)*W + (x+dx)] if in-bounds else 0."""
    s = dy * W + dx
    C = v.shape[0]
    if s > 0:
      v = jnp.concatenate([v[:, s:], jnp.zeros((C, s), v.dtype)], axis=1)
    elif s < 0:
      v = jnp.concatenate([jnp.zeros((C, -s), v.dtype), v[:, :HW + s]], axis=1)
    # Vertical out-of-range taps fall off the flat range and are zero-filled
    # above; horizontal wrap-around between rows is masked here.
    if dx > 0:
      v = jnp.where(xcol < W - dx, v, 0.0)
    elif dx < 0:
      v = jnp.where(xcol >= -dx, v, 0.0)
    return v

  def cell(K, x_in, h_in, c_in, wx_ref, wh_ref, b_ref, Hc):
    pad = K // 2
    acc = jnp.zeros((4 * Hc, HW), f32)        # lane-dense (4*Hc, 256)
    idx = 0
    for ky in range(K):
      for kx in range(K):
        dy, dx = ky - pad, kx - pad
        acc = acc + jnp.dot(wx_ref[idx], shift2d(x_in, dy, dx),
                            preferred_element_type=f32)
        acc = acc + jnp.dot(wh_ref[idx], shift2d(h_in, dy, dx),
                            preferred_element_type=f32)
        idx += 1
    acc = acc + b_ref[...]                    # (4*Hc, 1) broadcast over lanes
    i = jax.nn.sigmoid(acc[0 * Hc:1 * Hc])
    f = jax.nn.sigmoid(acc[1 * Hc:2 * Hc])
    o = jax.nn.sigmoid(acc[2 * Hc:3 * Hc])
    g = jnp.tanh(acc[3 * Hc:4 * Hc])
    c_next = f * c_in + i * g
    h_next = o * jnp.tanh(c_next)
    return h_next, c_next

  # ---- layer 1 ----
  x = x_ref[...].astype(f32)
  h1 = h1_ref[...].astype(f32)
  c1 = c1_ref[...].astype(f32)
  h1n, c1n = cell(K1, x, h1, c1, w1x_ref, w1h_ref, b1_ref, Hc1)
  h1o_ref[...] = h1n.astype(h1o_ref.dtype)
  c1o_ref[...] = c1n.astype(c1o_ref.dtype)

  # ---- layer 2 (consumes layer-1 h_next directly, never leaves the chip) ----
  h2 = h2_ref[...].astype(f32)
  c2 = c2_ref[...].astype(f32)
  h2n, c2n = cell(K2, h1n, h2, c2, w2x_ref, w2h_ref, b2_ref, Hc2)
  h2o_ref[...] = h2n.astype(h2o_ref.dtype)
  c2o_ref[...] = c2n.astype(c2o_ref.dtype)


@jax.jit
def convlstm2_forward(x, h1, c1, h2, c2, w1x, w1h, b1, w2x, w2h, b2):
  """x, h*, c* in NCHW.  Returns (h1n, c1n, h2n, c2n) in NCHW."""
  B, Cin, H, W = x.shape
  Hc1, Hc2 = h1.shape[1], h2.shape[1]
  K1 = math.isqrt(w1x.shape[0])
  K2 = math.isqrt(w2x.shape[0])
  HW = H * W

  # Layout plumbing only: NCHW -> planar lane-dense (B, C, H*W).
  xf = x.reshape(B, Cin, HW)
  h1f, c1f = h1.reshape(B, Hc1, HW), c1.reshape(B, Hc1, HW)
  h2f, c2f = h2.reshape(B, Hc2, HW), c2.reshape(B, Hc2, HW)

  kernel = functools.partial(_fused_convlstm2_kernel,
                             K1=K1, K2=K2, H=H, W=W, Hc1=Hc1, Hc2=Hc2)

  def per_b(c):  # one batch element per grid step, batch dim squeezed
    return pl.BlockSpec((None, c, HW), lambda b: (b, 0, 0))

  def full(shape):  # weights / biases: same (whole) block every step
    return pl.BlockSpec(shape, lambda b, _s=shape: (0,) * len(_s))

  h1n, c1n, h2n, c2n = pl.pallas_call(
      kernel,
      out_shape=(jax.ShapeDtypeStruct((B, Hc1, HW), x.dtype),
                 jax.ShapeDtypeStruct((B, Hc1, HW), x.dtype),
                 jax.ShapeDtypeStruct((B, Hc2, HW), x.dtype),
                 jax.ShapeDtypeStruct((B, Hc2, HW), x.dtype)),
      grid_spec=pltpu.PrefetchScalarGridSpec(
          num_scalar_prefetch=0,
          grid=(B,),
          in_specs=[
              per_b(Cin), per_b(Hc1), per_b(Hc1), per_b(Hc2), per_b(Hc2),
              full((K1 * K1, 4 * Hc1, Cin)),
              full((K1 * K1, 4 * Hc1, Hc1)),
              full((4 * Hc1, 1)),
              full((K2 * K2, 4 * Hc2, Hc1)),
              full((K2 * K2, 4 * Hc2, Hc2)),
              full((4 * Hc2, 1)),
          ],
          out_specs=[per_b(Hc1), per_b(Hc1), per_b(Hc2), per_b(Hc2)],
      ),
      compiler_params=pltpu.CompilerParams(
          dimension_semantics=("parallel",)),   # batch -> both TCs on v7x
  )(xf, h1f, c1f, h2f, c2f, w1x, w1h, b1, w2x, w2h, b2)

  return (h1n.reshape(B, Hc1, H, W), c1n.reshape(B, Hc1, H, W),
          h2n.reshape(B, Hc2, H, W), c2n.reshape(B, Hc2, H, W))


def _split_tap_weights(w_oihw, cin):
  """OIHW conv weight -> per-tap (K*K, O, cin) and (K*K, O, hidden) matrices."""
  O, Ct, K, _ = w_oihw.shape
  w_tap = jnp.transpose(w_oihw, (2, 3, 0, 1)).reshape(K * K, O, Ct)
  return w_tap[:, :, :cin], w_tap[:, :, cin:]


class PallasConvLSTMModel:
  """JAX/Pallas port of the two-layer ConvLSTM `Model` (NCHW, like PyTorch)."""

  def __init__(self, key, in_ch, hid1, hid2, k1, k2):
    ks = jax.random.split(key, 4)
    # Conv2d-style OIHW weights: (4*hidden, in+hidden, K, K), plus biases.
    self.w1 = 0.1 * jax.random.normal(
        ks[0], (4 * hid1, in_ch + hid1, k1, k1), jnp.float32)
    self.b1 = 0.1 * jax.random.normal(ks[1], (4 * hid1,), jnp.float32)
    self.w2 = 0.1 * jax.random.normal(
        ks[2], (4 * hid2, hid1 + hid2, k2, k2), jnp.float32)
    self.b2 = 0.1 * jax.random.normal(ks[3], (4 * hid2,), jnp.float32)

    # Kernel-layout weights, computed once (not per forward step).
    self.w1x_k, self.w1h_k = _split_tap_weights(self.w1, in_ch)
    self.w2x_k, self.w2h_k = _split_tap_weights(self.w2, hid1)
    self.b1_k = self.b1.reshape(4 * hid1, 1)
    self.b2_k = self.b2.reshape(4 * hid2, 1)

  def forward(self, x_nchw, h1, c1, h2, c2):
    h1n, c1n, h2n, c2n = convlstm2_forward(
        x_nchw, h1, c1, h2, c2,
        self.w1x_k, self.w1h_k, self.b1_k,
        self.w2x_k, self.w2h_k, self.b2_k)
    # tensors.output = convlstm2_out; new hidden/cell states returned too.
    return h2n, (h1n, c1n, h2n, c2n)


# ---------------------------------------------------------------------------
# Pure-JAX reference (for correctness assertion only).
# ---------------------------------------------------------------------------
def _ref_cell(x, h, c, w_oihw, b):
  xh = jnp.concatenate([x, h], axis=1)
  conv = jax.lax.conv_general_dilated(
      xh, w_oihw, window_strides=(1, 1), padding="SAME",
      dimension_numbers=("NCHW", "OIHW", "NCHW"))
  conv = conv + b.reshape(1, -1, 1, 1)
  i, f, o, g = jnp.split(conv, 4, axis=1)
  i, f, o = jax.nn.sigmoid(i), jax.nn.sigmoid(f), jax.nn.sigmoid(o)
  g = jnp.tanh(g)
  c_next = f * c + i * g
  h_next = o * jnp.tanh(c_next)
  return h_next, c_next


if __name__ == "__main__":
  # Small shapes consistent with the module: batch=2, in_ch=4, 16x16 spatial,
  # hidden1=hidden2=8, kernel=3.
  B, Cin, H, W = 2, 4, 16, 16
  HID1, HID2, K = 8, 8, 3

  key = jax.random.PRNGKey(0)
  kx, kh1, kc1, kh2, kc2, kparam = jax.random.split(key, 6)

  # PyTorch-native NCHW layout throughout.
  x = jax.random.normal(kx, (B, Cin, H, W), jnp.float32)
  h1 = jax.random.normal(kh1, (B, HID1, H, W), jnp.float32)
  c1 = jax.random.normal(kc1, (B, HID1, H, W), jnp.float32)
  h2 = jax.random.normal(kh2, (B, HID2, H, W), jnp.float32)
  c2 = jax.random.normal(kc2, (B, HID2, H, W), jnp.float32)

  model = PallasConvLSTMModel(kparam, Cin, HID1, HID2, K, K)

  out, (h1n, c1n, h2n, c2n) = model.forward(x, h1, c1, h2, c2)
  jax.block_until_ready((out, h1n, c1n, h2n, c2n))

  # Correctness check against a pure-JAX reference (all f32).
  rh1, rc1 = _ref_cell(x, h1, c1, model.w1, model.b1)
  rh2, rc2 = _ref_cell(rh1, h2, c2, model.w2, model.b2)
  assert jnp.allclose(h1n, rh1, atol=3e-5), "layer-1 h mismatch"
  assert jnp.allclose(c1n, rc1, atol=3e-5), "layer-1 c mismatch"
  assert jnp.allclose(out, rh2, atol=3e-5), "layer-2 h mismatch"
  assert jnp.allclose(c2n, rc2, atol=3e-5), "layer-2 c mismatch"

  print("KERNEL_OK")
</pallas_src>

<mosaic_0001>
module attributes {stable_mosaic.version = 11 : i64} {
  func.func @_fused_convlstm2_kernel(%arg0: i32, %arg1: memref<1x4x256xf32, #tpu.memory_space<vmem>>, %arg2: memref<1x8x256xf32, #tpu.memory_space<vmem>>, %arg3: memref<1x8x256xf32, #tpu.memory_space<vmem>>, %arg4: memref<1x8x256xf32, #tpu.memory_space<vmem>>, %arg5: memref<1x8x256xf32, #tpu.memory_space<vmem>>, %arg6: memref<9x32x4xf32, #tpu.memory_space<vmem>>, %arg7: memref<9x32x8xf32, #tpu.memory_space<vmem>>, %arg8: memref<32x1xf32, #tpu.memory_space<vmem>>, %arg9: memref<9x32x8xf32, #tpu.memory_space<vmem>>, %arg10: memref<9x32x8xf32, #tpu.memory_space<vmem>>, %arg11: memref<32x1xf32, #tpu.memory_space<vmem>>, %arg12: memref<1x8x256xf32, #tpu.memory_space<vmem>>, %arg13: memref<1x8x256xf32, #tpu.memory_space<vmem>>, %arg14: memref<1x8x256xf32, #tpu.memory_space<vmem>>, %arg15: memref<1x8x256xf32, #tpu.memory_space<vmem>>) attributes {dimension_semantics = [#tpu.dimension_semantics<parallel>], iteration_bounds = array<i64: 2>, scalar_prefetch = 0 : i64, scratch_operands = 0 : i64, tpu.core_type = #tpu.core_type<tc>, window_params = [{transform_indices = @transform_0, window_bounds = array<i64: 1, 4, 256>}, {transform_indices = @transform_1, window_bounds = array<i64: 1, 8, 256>}, {transform_indices = @transform_2, window_bounds = array<i64: 1, 8, 256>}, {transform_indices = @transform_3, window_bounds = array<i64: 1, 8, 256>}, {transform_indices = @transform_4, window_bounds = array<i64: 1, 8, 256>}, {pipeline_mode = #tpu.pipeline_mode<synchronous>, transform_indices = @transform_5, window_bounds = array<i64: 9, 32, 4>}, {pipeline_mode = #tpu.pipeline_mode<synchronous>, transform_indices = @transform_6, window_bounds = array<i64: 9, 32, 8>}, {pipeline_mode = #tpu.pipeline_mode<synchronous>, transform_indices = @transform_7, window_bounds = array<i64: 32, 1>}, {pipeline_mode = #tpu.pipeline_mode<synchronous>, transform_indices = @transform_8, window_bounds = array<i64: 9, 32, 8>}, {pipeline_mode = #tpu.pipeline_mode<synchronous>, transform_indices = @transform_9, window_bounds = array<i64: 9, 32, 8>}, {pipeline_mode = #tpu.pipeline_mode<synchronous>, transform_indices = @transform_10, window_bounds = array<i64: 32, 1>}, {transform_indices = @transform_11, window_bounds = array<i64: 1, 8, 256>}, {transform_indices = @transform_12, window_bounds = array<i64: 1, 8, 256>}, {transform_indices = @transform_13, window_bounds = array<i64: 1, 8, 256>}, {transform_indices = @transform_14, window_bounds = array<i64: 1, 8, 256>}]} {
    %0 = tpu.iota {dimensions = array<i32: 1>} : vector<1x256xi32>
    %c16_i32 = arith.constant 16 : i32
    %c0_i32 = arith.constant 0 : i32
    %1 = arith.cmpi eq, %c16_i32, %c0_i32 : i32
    %c1_i32 = arith.constant 1 : i32
    %2 = arith.select %1, %c1_i32, %c16_i32 : i32
    %3 = vector.broadcast %2 : i32 to vector<1x256xi32>
    %4 = arith.remsi %0, %3 : vector<1x256xi32>
    %c0_i32_0 = arith.constant 0 : i32
    %5 = vector.broadcast %c0_i32_0 : i32 to vector<1x256xi32>
    %6 = arith.cmpi ne, %4, %5 : vector<1x256xi32>
    %c0_i32_1 = arith.constant 0 : i32
    %7 = vector.broadcast %c0_i32_1 : i32 to vector<1x256xi32>
    %8 = arith.cmpi slt, %4, %7 : vector<1x256xi32>
    %c0_i32_2 = arith.constant 0 : i32
    %9 = arith.cmpi slt, %2, %c0_i32_2 : i32
    %10 = vector.broadcast %9 : i1 to vector<1x256xi1>
    %11 = vector.broadcast %10 : vector<1x256xi1> to vector<1x256xi1>
    %12 = arith.xori %8, %11 : vector<1x256xi1>
    %13 = arith.andi %12, %6 : vector<1x256xi1>
    %14 = vector.broadcast %2 : i32 to vector<1x256xi32>
    %15 = arith.addi %4, %14 : vector<1x256xi32>
    %16 = arith.select %13, %15, %4 : vector<1x256xi1>, vector<1x256xi32>
    %c0 = arith.constant 0 : index
    %c0_3 = arith.constant 0 : index
    %c0_4 = arith.constant 0 : index
    %17 = vector.load %arg1[%c0, %c0_3, %c0_4] : memref<1x4x256xf32, #tpu.memory_space<vmem>>, vector<1x4x256xf32>
    %18 = vector.shape_cast %17 : vector<1x4x256xf32> to vector<4x256xf32>
    %c0_5 = arith.constant 0 : index
    %c0_6 = arith.constant 0 : index
    %c0_7 = arith.constant 0 : index
    %19 = vector.load %arg2[%c0_5, %c0_6, %c0_7] : memref<1x8x256xf32, #tpu.memory_space<vmem>>, vector<1x8x256xf32>
    %20 = vector.shape_cast %19 : vector<1x8x256xf32> to vector<8x256xf32>
    %c0_8 = arith.constant 0 : index
    %c0_9 = arith.constant 0 : index
    %c0_10 = arith.constant 0 : index
    %21 = vector.load %arg3[%c0_8, %c0_9, %c0_10] : memref<1x8x256xf32, #tpu.memory_space<vmem>>, vector<1x8x256xf32>
    %22 = vector.shape_cast %21 : vector<1x8x256xf32> to vector<8x256xf32>
    %cst = arith.constant 0.000000e+00 : f32
    %23 = vector.broadcast %cst : f32 to vector<32x256xf32>
    %c0_11 = arith.constant 0 : index
    %c0_12 = arith.constant 0 : index
    %c0_13 = arith.constant 0 : index
    %24 = vector.load %arg6[%c0_11, %c0_12, %c0_13] : memref<9x32x4xf32, #tpu.memory_space<vmem>>, vector<1x32x4xf32>
    %25 = vector.shape_cast %24 : vector<1x32x4xf32> to vector<32x4xf32>
    %cst_14 = arith.constant 0.000000e+00 : f32
    %26 = vector.broadcast %cst_14 : f32 to vector<4x17xf32>
    %27 = vector.extract_strided_slice %18 {offsets = [0, 0], sizes = [4, 239], strides = [1, 1]} : vector<4x256xf32> to vector<4x239xf32>
    %28 = tpu.concatenate %26, %27 in 1 : vector<4x17xf32>, vector<4x239xf32> -> vector<4x256xf32>
    %c1_i32_15 = arith.constant 1 : i32
    %29 = vector.broadcast %c1_i32_15 : i32 to vector<1x256xi32>
    %30 = arith.cmpi sge, %16, %29 : vector<1x256xi32>
    %cst_16 = arith.constant 0.000000e+00 : f32
    %31 = vector.shape_cast %30 : vector<1x256xi1> to vector<1x256xi1>
    %32 = vector.broadcast %31 : vector<1x256xi1> to vector<4x256xi1>
    %33 = vector.broadcast %cst_16 : f32 to vector<4x256xf32>
    %34 = arith.select %32, %28, %33 : vector<4x256xi1>, vector<4x256xf32>
    %cst_17 = arith.constant dense<0.000000e+00> : vector<32x256xf32>
    %35 = tpu.matmul %25, %34, %cst_17 {dimension_numbers = #tpu.dot_dimension_numbers<[1], [0], [0], [1], [0, 0, 1, 1], [], []>} : vector<32x4xf32>, vector<4x256xf32>, vector<32x256xf32> -> vector<32x256xf32>
    %36 = arith.addf %23, %35 : vector<32x256xf32>
    %c0_18 = arith.constant 0 : index
    %c0_19 = arith.constant 0 : index
    %c0_20 = arith.constant 0 : index
    %37 = vector.load %arg7[%c0_18, %c0_19, %c0_20] : memref<9x32x8xf32, #tpu.memory_space<vmem>>, vector<1x32x8xf32>
    %38 = vector.shape_cast %37 : vector<1x32x8xf32> to vector<32x8xf32>
    %cst_21 = arith.constant 0.000000e+00 : f32
    %39 = vector.broadcast %cst_21 : f32 to vector<8x17xf32>
    %40 = vector.extract_strided_slice %20 {offsets = [0, 0], sizes = [8, 239], strides = [1, 1]} : vector<8x256xf32> to vector<8x239xf32>
    %41 = tpu.concatenate %39, %40 in 1 : vector<8x17xf32>, vector<8x239xf32> -> vector<8x256xf32>
    %c1_i32_22 = arith.constant 1 : i32
    %42 = vector.broadcast %c1_i32_22 : i32 to vector<1x256xi32>
    %43 = arith.cmpi sge, %16, %42 : vector<1x256xi32>
    %cst_23 = arith.constant 0.000000e+00 : f32
    %44 = vector.shape_cast %43 : vector<1x256xi1> to vector<1x256xi1>
    %45 = vector.broadcast %44 : vector<1x256xi1> to vector<8x256xi1>
    %46 = vector.broadcast %cst_23 : f32 to vector<8x256xf32>
    %47 = arith.select %45, %41, %46 : vector<8x256xi1>, vector<8x256xf32>
    %cst_24 = arith.constant dense<0.000000e+00> : vector<32x256xf32>
    %48 = tpu.matmul %38, %47, %cst_24 {dimension_numbers = #tpu.dot_dimension_numbers<[1], [0], [0], [1], [0, 0, 1, 1], [], []>} : vector<32x8xf32>, vector<8x256xf32>, vector<32x256xf32> -> vector<32x256xf32>
    %49 = arith.addf %36, %48 : vector<32x256xf32>
    %c1 = arith.constant 1 : index
    %c0_25 = arith.constant 0 : index
    %c0_26 = arith.constant 0 : index
    %50 = vector.load %arg6[%c1, %c0_25, %c0_26] : memref<9x32x4xf32, #tpu.memory_space<vmem>>, vector<1x32x4xf32>
    %51 = vector.shape_cast %50 : vector<1x32x4xf32> to vector<32x4xf32>
    %cst_27 = arith.constant 0.000000e+00 : f32
    %52 = vector.broadcast %cst_27 : f32 to vector<4x16xf32>
    %53 = vector.extract_strided_slice %18 {offsets = [0, 0], sizes = [4, 240], strides = [1, 1]} : vector<4x256xf32> to vector<4x240xf32>
    %54 = tpu.concatenate %52, %53 in 1 : vector<4x16xf32>, vector<4x240xf32> -> vector<4x256xf32>
    %cst_28 = arith.constant dense<0.000000e+00> : vector<32x256xf32>
    %55 = tpu.matmul %51, %54, %cst_28 {dimension_numbers = #tpu.dot_dimension_numbers<[1], [0], [0], [1], [0, 0, 1, 1], [], []>} : vector<32x4xf32>, vector<4x256xf32>, vector<32x256xf32> -> vector<32x256xf32>
    %56 = arith.addf %49, %55 : vector<32x256xf32>
    %c1_29 = arith.constant 1 : index
    %c0_30 = arith.constant 0 : index
    %c0_31 = arith.constant 0 : index
    %57 = vector.load %arg7[%c1_29, %c0_30, %c0_31] : memref<9x32x8xf32, #tpu.memory_space<vmem>>, vector<1x32x8xf32>
    %58 = vector.shape_cast %57 : vector<1x32x8xf32> to vector<32x8xf32>
    %cst_32 = arith.constant 0.000000e+00 : f32
    %59 = vector.broadcast %cst_32 : f32 to vector<8x16xf32>
    %60 = vector.extract_strided_slice %20 {offsets = [0, 0], sizes = [8, 240], strides = [1, 1]} : vector<8x256xf32> to vector<8x240xf32>
    %61 = tpu.concatenate %59, %60 in 1 : vector<8x16xf32>, vector<8x240xf32> -> vector<8x256xf32>
    %cst_33 = arith.constant dense<0.000000e+00> : vector<32x256xf32>
    %62 = tpu.matmul %58, %61, %cst_33 {dimension_numbers = #tpu.dot_dimension_numbers<[1], [0], [0], [1], [0, 0, 1, 1], [], []>} : vector<32x8xf32>, vector<8x256xf32>, vector<32x256xf32> -> vector<32x256xf32>
    %63 = arith.addf %56, %62 : vector<32x256xf32>
    %c2 = arith.constant 2 : index
    %c0_34 = arith.constant 0 : index
    %c0_35 = arith.constant 0 : index
    %64 = vector.load %arg6[%c2, %c0_34, %c0_35] : memref<9x32x4xf32, #tpu.memory_space<vmem>>, vector<1x32x4xf32>
    %65 = vector.shape_cast %64 : vector<1x32x4xf32> to vector<32x4xf32>
    %cst_36 = arith.constant 0.000000e+00 : f32
    %66 = vector.broadcast %cst_36 : f32 to vector<4x15xf32>
    %67 = vector.extract_strided_slice %18 {offsets = [0, 0], sizes = [4, 241], strides = [1, 1]} : vector<4x256xf32> to vector<4x241xf32>
    %68 = tpu.concatenate %66, %67 in 1 : vector<4x15xf32>, vector<4x241xf32> -> vector<4x256xf32>
    %c15_i32 = arith.constant 15 : i32
    %69 = vector.broadcast %c15_i32 : i32 to vector<1x256xi32>
    %70 = arith.cmpi slt, %16, %69 : vector<1x256xi32>
    %cst_37 = arith.constant 0.000000e+00 : f32
    %71 = vector.shape_cast %70 : vector<1x256xi1> to vector<1x256xi1>
    %72 = vector.broadcast %71 : vector<1x256xi1> to vector<4x256xi1>
    %73 = vector.broadcast %cst_37 : f32 to vector<4x256xf32>
    %74 = arith.select %72, %68, %73 : vector<4x256xi1>, vector<4x256xf32>
    %cst_38 = arith.constant dense<0.000000e+00> : vector<32x256xf32>
    %75 = tpu.matmul %65, %74, %cst_38 {dimension_numbers = #tpu.dot_dimension_numbers<[1], [0], [0], [1], [0, 0, 1, 1], [], []>} : vector<32x4xf32>, vector<4x256xf32>, vector<32x256xf32> -> vector<32x256xf32>
    %76 = arith.addf %63, %75 : vector<32x256xf32>
    %c2_39 = arith.constant 2 : index
    %c0_40 = arith.constant 0 : index
    %c0_41 = arith.constant 0 : index
    %77 = vector.load %arg7[%c2_39, %c0_40, %c0_41] : memref<9x32x8xf32, #tpu.memory_space<vmem>>, vector<1x32x8xf32>
    %78 = vector.shape_cast %77 : vector<1x32x8xf32> to vector<32x8xf32>
    %cst_42 = arith.constant 0.000000e+00 : f32
    %79 = vector.broadcast %cst_42 : f32 to vector<8x15xf32>
    %80 = vector.extract_strided_slice %20 {offsets = [0, 0], sizes = [8, 241], strides = [1, 1]} : vector<8x256xf32> to vector<8x241xf32>
    %81 = tpu.concatenate %79, %80 in 1 : vector<8x15xf32>, vector<8x241xf32> -> vector<8x256xf32>
    %c15_i32_43 = arith.constant 15 : i32
    %82 = vector.broadcast %c15_i32_43 : i32 to vector<1x256xi32>
    %83 = arith.cmpi slt, %16, %82 : vector<1x256xi32>
    %cst_44 = arith.constant 0.000000e+00 : f32
    %84 = vector.shape_cast %83 : vector<1x256xi1> to vector<1x256xi1>
    %85 = vector.broadcast %84 : vector<1x256xi1> to vector<8x256xi1>
    %86 = vector.broadcast %cst_44 : f32 to vector<8x256xf32>
    %87 = arith.select %85, %81, %86 : vector<8x256xi1>, vector<8x256xf32>
    %cst_45 = arith.constant dense<0.000000e+00> : vector<32x256xf32>
    %88 = tpu.matmul %78, %87, %cst_45 {dimension_numbers = #tpu.dot_dimension_numbers<[1], [0], [0], [1], [0, 0, 1, 1], [], []>} : vector<32x8xf32>, vector<8x256xf32>, vector<32x256xf32> -> vector<32x256xf32>
    %89 = arith.addf %76, %88 : vector<32x256xf32>
    %c3 = arith.constant 3 : index
    %c0_46 = arith.constant 0 : index
    %c0_47 = arith.constant 0 : index
    %90 = vector.load %arg6[%c3, %c0_46, %c0_47] : memref<9x32x4xf32, #tpu.memory_space<vmem>>, vector<1x32x4xf32>
    %91 = vector.shape_cast %90 : vector<1x32x4xf32> to vector<32x4xf32>
    %cst_48 = arith.constant 0.000000e+00 : f32
    %92 = vector.broadcast %cst_48 : f32 to vector<4x1xf32>
    %93 = vector.extract_strided_slice %18 {offsets = [0, 0], sizes = [4, 255], strides = [1, 1]} : vector<4x256xf32> to vector<4x255xf32>
    %94 = tpu.concatenate %92, %93 in 1 : vector<4x1xf32>, vector<4x255xf32> -> vector<4x256xf32>
    %c1_i32_49 = arith.constant 1 : i32
    %95 = vector.broadcast %c1_i32_49 : i32 to vector<1x256xi32>
    %96 = arith.cmpi sge, %16, %95 : vector<1x256xi32>
    %cst_50 = arith.constant 0.000000e+00 : f32
    %97 = vector.shape_cast %96 : vector<1x256xi1> to vector<1x256xi1>
    %98 = vector.broadcast %97 : vector<1x256xi1> to vector<4x256xi1>
    %99 = vector.broadcast %cst_50 : f32 to vector<4x256xf32>
    %100 = arith.select %98, %94, %99 : vector<4x256xi1>, vector<4x256xf32>
    %cst_51 = arith.constant dense<0.000000e+00> : vector<32x256xf32>
    %101 = tpu.matmul %91, %100, %cst_51 {dimension_numbers = #tpu.dot_dimension_numbers<[1], [0], [0], [1], [0, 0, 1, 1], [], []>} : vector<32x4xf32>, vector<4x256xf32>, vector<32x256xf32> -> vector<32x256xf32>
    %102 = arith.addf %89, %101 : vector<32x256xf32>
    %c3_52 = arith.constant 3 : index
    %c0_53 = arith.constant 0 : index
    %c0_54 = arith.constant 0 : index
    %103 = vector.load %arg7[%c3_52, %c0_53, %c0_54] : memref<9x32x8xf32, #tpu.memory_space<vmem>>, vector<1x32x8xf32>
    %104 = vector.shape_cast %103 : vector<1x32x8xf32> to vector<32x8xf32>
    %cst_55 = arith.constant 0.000000e+00 : f32
    %105 = vector.broadcast %cst_55 : f32 to vector<8x1xf32>
    %106 = vector.extract_strided_slice %20 {offsets = [0, 0], sizes = [8, 255], strides = [1, 1]} : vector<8x256xf32> to vector<8x255xf32>
    %107 = tpu.concatenate %105, %106 in 1 : vector<8x1xf32>, vector<8x255xf32> -> vector<8x256xf32>
    %c1_i32_56 = arith.constant 1 : i32
    %108 = vector.broadcast %c1_i32_56 : i32 to vector<1x256xi32>
    %109 = arith.cmpi sge, %16, %108 : vector<1x256xi32>
    %cst_57 = arith.constant 0.000000e+00 : f32
    %110 = vector.shape_cast %109 : vector<1x256xi1> to vector<1x256xi1>
    %111 = vector.broadcast %110 : vector<1x256xi1> to vector<8x256xi1>
    %112 = vector.broadcast %cst_57 : f32 to vector<8x256xf32>
    %113 = arith.select %111, %107, %112 : vector<8x256xi1>, vector<8x256xf32>
    %cst_58 = arith.constant dense<0.000000e+00> : vector<32x256xf32>
    %114 = tpu.matmul %104, %113, %cst_58 {dimension_numbers = #tpu.dot_dimension_numbers<[1], [0], [0], [1], [0, 0, 1, 1], [], []>} : vector<32x8xf32>, vector<8x256xf32>, vector<32x256xf32> -> vector<32x256xf32>
    %115 = arith.addf %102, %114 : vector<32x256xf32>
    %c4 = arith.constant 4 : index
    %c0_59 = arith.constant 0 : index
    %c0_60 = arith.constant 0 : index
    %116 = vector.load %arg6[%c4, %c0_59, %c0_60] : memref<9x32x4xf32, #tpu.memory_space<vmem>>, vector<1x32x4xf32>
    %117 = vector.shape_cast %116 : vector<1x32x4xf32> to vector<32x4xf32>
    %cst_61 = arith.constant dense<0.000000e+00> : vector<32x256xf32>
    %118 = tpu.matmul %117, %18, %cst_61 {dimension_numbers = #tpu.dot_dimension_numbers<[1], [0], [0], [1], [0, 0, 1, 1], [], []>} : vector<32x4xf32>, vector<4x256xf32>, vector<32x256xf32> -> vector<32x256xf32>
    %119 = arith.addf %115, %118 : vector<32x256xf32>
    %c4_62 = arith.constant 4 : index
    %c0_63 = arith.constant 0 : index
    %c0_64 = arith.constant 0 : index
    %120 = vector.load %arg7[%c4_62, %c0_63, %c0_64] : memref<9x32x8xf32, #tpu.memory_space<vmem>>, vector<1x32x8xf32>
    %121 = vector.shape_cast %120 : vector<1x32x8xf32> to vector<32x8xf32>
    %cst_65 = arith.constant dense<0.000000e+00> : vector<32x256xf32>
    %122 = tpu.matmul %121, %20, %cst_65 {dimension_numbers = #tpu.dot_dimension_numbers<[1], [0], [0], [1], [0, 0, 1, 1], [], []>} : vector<32x8xf32>, vector<8x256xf32>, vector<32x256xf32> -> vector<32x256xf32>
    %123 = arith.addf %119, %122 : vector<32x256xf32>
    %c5 = arith.constant 5 : index
    %c0_66 = arith.constant 0 : index
    %c0_67 = arith.constant 0 : index
    %124 = vector.load %arg6[%c5, %c0_66, %c0_67] : memref<9x32x4xf32, #tpu.memory_space<vmem>>, vector<1x32x4xf32>
    %125 = vector.shape_cast %124 : vector<1x32x4xf32> to vector<32x4xf32>
    %126 = vector.extract_strided_slice %18 {offsets = [0, 1], sizes = [4, 255], strides = [1, 1]} : vector<4x256xf32> to vector<4x255xf32>
    %cst_68 = arith.constant 0.000000e+00 : f32
    %127 = vector.broadcast %cst_68 : f32 to vector<4x1xf32>
    %128 = tpu.concatenate %126, %127 in 1 : vector<4x255xf32>, vector<4x1xf32> -> vector<4x256xf32>
    %c15_i32_69 = arith.constant 15 : i32
    %129 = vector.broadcast %c15_i32_69 : i32 to vector<1x256xi32>
    %130 = arith.cmpi slt, %16, %129 : vector<1x256xi32>
    %cst_70 = arith.constant 0.000000e+00 : f32
    %131 = vector.shape_cast %130 : vector<1x256xi1> to vector<1x256xi1>
    %132 = vector.broadcast %131 : vector<1x256xi1> to vector<4x256xi1>
    %133 = vector.broadcast %cst_70 : f32 to vector<4x256xf32>
    %134 = arith.select %132, %128, %133 : vector<4x256xi1>, vector<4x256xf32>
    %cst_71 = arith.constant dense<0.000000e+00> : vector<32x256xf32>
    %135 = tpu.matmul %125, %134, %cst_71 {dimension_numbers = #tpu.dot_dimension_numbers<[1], [0], [0], [1], [0, 0, 1, 1], [], []>} : vector<32x4xf32>, vector<4x256xf32>, vector<32x256xf32> -> vector<32x256xf32>
    %136 = arith.addf %123, %135 : vector<32x256xf32>
    %c5_72 = arith.constant 5 : index
    %c0_73 = arith.constant 0 : index
    %c0_74 = arith.constant 0 : index
    %137 = vector.load %arg7[%c5_72, %c0_73, %c0_74] : memref<9x32x8xf32, #tpu.memory_space<vmem>>, vector<1x32x8xf32>
    %138 = vector.shape_cast %137 : vector<1x32x8xf32> to vector<32x8xf32>
    %139 = vector.extract_strided_slice %20 {offsets = [0, 1], sizes = [8, 255], strides = [1, 1]} : vector<8x256xf32> to vector<8x255xf32>
    %cst_75 = arith.constant 0.000000e+00 : f32
    %140 = vector.broadcast %cst_75 : f32 to vector<8x1xf32>
    %141 = tpu.concatenate %139, %140 in 1 : vector<8x255xf32>, vector<8x1xf32> -> vector<8x256xf32>
    %c15_i32_76 = arith.constant 15 : i32
    %142 = vector.broadcast %c15_i32_76 : i32 to vector<1x256xi32>
    %143 = arith.cmpi slt, %16, %142 : vector<1x256xi32>
    %cst_77 = arith.constant 0.000000e+00 : f32
    %144 = vector.shape_cast %143 : vector<1x256xi1> to vector<1x256xi1>
    %145 = vector.broadcast %144 : vector<1x256xi1> to vector<8x256xi1>
    %146 = vector.broadcast %cst_77 : f32 to vector<8x256xf32>
    %147 = arith.select %145, %141, %146 : vector<8x256xi1>, vector<8x256xf32>
    %cst_78 = arith.constant dense<0.000000e+00> : vector<32x256xf32>
    %148 = tpu.matmul %138, %147, %cst_78 {dimension_numbers = #tpu.dot_dimension_numbers<[1], [0], [0], [1], [0, 0, 1, 1], [], []>} : vector<32x8xf32>, vector<8x256xf32>, vector<32x256xf32> -> vector<32x256xf32>
    %149 = arith.addf %136, %148 : vector<32x256xf32>
    %c6 = arith.constant 6 : index
    %c0_79 = arith.constant 0 : index
    %c0_80 = arith.constant 0 : index
    %150 = vector.load %arg6[%c6, %c0_79, %c0_80] : memref<9x32x4xf32, #tpu.memory_space<vmem>>, vector<1x32x4xf32>
    %151 = vector.shape_cast %150 : vector<1x32x4xf32> to vector<32x4xf32>
    %152 = vector.extract_strided_slice %18 {offsets = [0, 15], sizes = [4, 241], strides = [1, 1]} : vector<4x256xf32> to vector<4x241xf32>
    %cst_81 = arith.constant 0.000000e+00 : f32
    %153 = vector.broadcast %cst_81 : f32 to vector<4x15xf32>
    %154 = tpu.concatenate %152, %153 in 1 : vector<4x241xf32>, vector<4x15xf32> -> vector<4x256xf32>
    %c1_i32_82 = arith.constant 1 : i32
    %155 = vector.broadcast %c1_i32_82 : i32 to vector<1x256xi32>
    %156 = arith.cmpi sge, %16, %155 : vector<1x256xi32>
    %cst_83 = arith.constant 0.000000e+00 : f32
    %157 = vector.shape_cast %156 : vector<1x256xi1> to vector<1x256xi1>
    %158 = vector.broadcast %157 : vector<1x256xi1> to vector<4x256xi1>
    %159 = vector.broadcast %cst_83 : f32 to vector<4x256xf32>
    %160 = arith.select %158, %154, %159 : vector<4x256xi1>, vector<4x256xf32>
    %cst_84 = arith.constant dense<0.000000e+00> : vector<32x256xf32>
    %161 = tpu.matmul %151, %160, %cst_84 {dimension_numbers = #tpu.dot_dimension_numbers<[1], [0], [0], [1], [0, 0, 1, 1], [], []>} : vector<32x4xf32>, vector<4x256xf32>, vector<32x256xf32> -> vector<32x256xf32>
    %162 = arith.addf %149, %161 : vector<32x256xf32>
    %c6_85 = arith.constant 6 : index
    %c0_86 = arith.constant 0 : index
    %c0_87 = arith.constant 0 : index
    %163 = vector.load %arg7[%c6_85, %c0_86, %c0_87] : memref<9x32x8xf32, #tpu.memory_space<vmem>>, vector<1x32x8xf32>
    %164 = vector.shape_cast %163 : vector<1x32x8xf32> to vector<32x8xf32>
    %165 = vector.extract_strided_slice %20 {offsets = [0, 15], sizes = [8, 241], strides = [1, 1]} : vector<8x256xf32> to vector<8x241xf32>
    %cst_88 = arith.constant 0.000000e+00 : f32
    %166 = vector.broadcast %cst_88 : f32 to vector<8x15xf32>
    %167 = tpu.concatenate %165, %166 in 1 : vector<8x241xf32>, vector<8x15xf32> -> vector<8x256xf32>
    %c1_i32_89 = arith.constant 1 : i32
    %168 = vector.broadcast %c1_i32_89 : i32 to vector<1x256xi32>
    %169 = arith.cmpi sge, %16, %168 : vector<1x256xi32>
    %cst_90 = arith.constant 0.000000e+00 : f32
    %170 = vector.shape_cast %169 : vector<1x256xi1> to vector<1x256xi1>
    %171 = vector.broadcast %170 : vector<1x256xi1> to vector<8x256xi1>
    %172 = vector.broadcast %cst_90 : f32 to vector<8x256xf32>
    %173 = arith.select %171, %167, %172 : vector<8x256xi1>, vector<8x256xf32>
    %cst_91 = arith.constant dense<0.000000e+00> : vector<32x256xf32>
    %174 = tpu.matmul %164, %173, %cst_91 {dimension_numbers = #tpu.dot_dimension_numbers<[1], [0], [0], [1], [0, 0, 1, 1], [], []>} : vector<32x8xf32>, vector<8x256xf32>, vector<32x256xf32> -> vector<32x256xf32>
    %175 = arith.addf %162, %174 : vector<32x256xf32>
    %c7 = arith.constant 7 : index
    %c0_92 = arith.constant 0 : index
    %c0_93 = arith.constant 0 : index
    %176 = vector.load %arg6[%c7, %c0_92, %c0_93] : memref<9x32x4xf32, #tpu.memory_space<vmem>>, vector<1x32x4xf32>
    %177 = vector.shape_cast %176 : vector<1x32x4xf32> to vector<32x4xf32>
    %178 = vector.extract_strided_slice %18 {offsets = [0, 16], sizes = [4, 240], strides = [1, 1]} : vector<4x256xf32> to vector<4x240xf32>
    %cst_94 = arith.constant 0.000000e+00 : f32
    %179 = vector.broadcast %cst_94 : f32 to vector<4x16xf32>
    %180 = tpu.concatenate %178, %179 in 1 : vector<4x240xf32>, vector<4x16xf32> -> vector<4x256xf32>
    %cst_95 = arith.constant dense<0.000000e+00> : vector<32x256xf32>
    %181 = tpu.matmul %177, %180, %cst_95 {dimension_numbers = #tpu.dot_dimension_numbers<[1], [0], [0], [1], [0, 0, 1, 1], [], []>} : vector<32x4xf32>, vector<4x256xf32>, vector<32x256xf32> -> vector<32x256xf32>
    %182 = arith.addf %175, %181 : vector<32x256xf32>
    %c7_96 = arith.constant 7 : index
    %c0_97 = arith.constant 0 : index
    %c0_98 = arith.constant 0 : index
    %183 = vector.load %arg7[%c7_96, %c0_97, %c0_98] : memref<9x32x8xf32, #tpu.memory_space<vmem>>, vector<1x32x8xf32>
    %184 = vector.shape_cast %183 : vector<1x32x8xf32> to vector<32x8xf32>
    %185 = vector.extract_strided_slice %20 {offsets = [0, 16], sizes = [8, 240], strides = [1, 1]} : vector<8x256xf32> to vector<8x240xf32>
    %cst_99 = arith.constant 0.000000e+00 : f32
    %186 = vector.broadcast %cst_99 : f32 to vector<8x16xf32>
    %187 = tpu.concatenate %185, %186 in 1 : vector<8x240xf32>, vector<8x16xf32> -> vector<8x256xf32>
    %cst_100 = arith.constant dense<0.000000e+00> : vector<32x256xf32>
    %188 = tpu.matmul %184, %187, %cst_100 {dimension_numbers = #tpu.dot_dimension_numbers<[1], [0], [0], [1], [0, 0, 1, 1], [], []>} : vector<32x8xf32>, vector<8x256xf32>, vector<32x256xf32> -> vector<32x256xf32>
    %189 = arith.addf %182, %188 : vector<32x256xf32>
    %c8 = arith.constant 8 : index
    %c0_101 = arith.constant 0 : index
    %c0_102 = arith.constant 0 : index
    %190 = vector.load %arg6[%c8, %c0_101, %c0_102] : memref<9x32x4xf32, #tpu.memory_space<vmem>>, vector<1x32x4xf32>
    %191 = vector.shape_cast %190 : vector<1x32x4xf32> to vector<32x4xf32>
    %192 = vector.extract_strided_slice %18 {offsets = [0, 17], sizes = [4, 239], strides = [1, 1]} : vector<4x256xf32> to vector<4x239xf32>
    %cst_103 = arith.constant 0.000000e+00 : f32
    %193 = vector.broadcast %cst_103 : f32 to vector<4x17xf32>
    %194 = tpu.concatenate %192, %193 in 1 : vector<4x239xf32>, vector<4x17xf32> -> vector<4x256xf32>
    %c15_i32_104 = arith.constant 15 : i32
    %195 = vector.broadcast %c15_i32_104 : i32 to vector<1x256xi32>
    %196 = arith.cmpi slt, %16, %195 : vector<1x256xi32>
    %cst_105 = arith.constant 0.000000e+00 : f32
    %197 = vector.shape_cast %196 : vector<1x256xi1> to vector<1x256xi1>
    %198 = vector.broadcast %197 : vector<1x256xi1> to vector<4x256xi1>
    %199 = vector.broadcast %cst_105 : f32 to vector<4x256xf32>
    %200 = arith.select %198, %194, %199 : vector<4x256xi1>, vector<4x256xf32>
    %cst_106 = arith.constant dense<0.000000e+00> : vector<32x256xf32>
    %201 = tpu.matmul %191, %200, %cst_106 {dimension_numbers = #tpu.dot_dimension_numbers<[1], [0], [0], [1], [0, 0, 1, 1], [], []>} : vector<32x4xf32>, vector<4x256xf32>, vector<32x256xf32> -> vector<32x256xf32>
    %202 = arith.addf %189, %201 : vector<32x256xf32>
    %c8_107 = arith.constant 8 : index
    %c0_108 = arith.constant 0 : index
    %c0_109 = arith.constant 0 : index
    %203 = vector.load %arg7[%c8_107, %c0_108, %c0_109] : memref<9x32x8xf32, #tpu.memory_space<vmem>>, vector<1x32x8xf32>
    %204 = vector.shape_cast %203 : vector<1x32x8xf32> to vector<32x8xf32>
    %205 = vector.extract_strided_slice %20 {offsets = [0, 17], sizes = [8, 239], strides = [1, 1]} : vector<8x256xf32> to vector<8x239xf32>
    %cst_110 = arith.constant 0.000000e+00 : f32
    %206 = vector.broadcast %cst_110 : f32 to vector<8x17xf32>
    %207 = tpu.concatenate %205, %206 in 1 : vector<8x239xf32>, vector<8x17xf32> -> vector<8x256xf32>
    %c15_i32_111 = arith.constant 15 : i32
    %208 = vector.broadcast %c15_i32_111 : i32 to vector<1x256xi32>
    %209 = arith.cmpi slt, %16, %208 : vector<1x256xi32>
    %cst_112 = arith.constant 0.000000e+00 : f32
    %210 = vector.shape_cast %209 : vector<1x256xi1> to vector<1x256xi1>
    %211 = vector.broadcast %210 : vector<1x256xi1> to vector<8x256xi1>
    %212 = vector.broadcast %cst_112 : f32 to vector<8x256xf32>
    %213 = arith.select %211, %207, %212 : vector<8x256xi1>, vector<8x256xf32>
    %cst_113 = arith.constant dense<0.000000e+00> : vector<32x256xf32>
    %214 = tpu.matmul %204, %213, %cst_113 {dimension_numbers = #tpu.dot_dimension_numbers<[1], [0], [0], [1], [0, 0, 1, 1], [], []>} : vector<32x8xf32>, vector<8x256xf32>, vector<32x256xf32> -> vector<32x256xf32>
    %215 = arith.addf %202, %214 : vector<32x256xf32>
    %c0_114 = arith.constant 0 : index
    %c0_115 = arith.constant 0 : index
    %216 = vector.load %arg8[%c0_114, %c0_115] : memref<32x1xf32, #tpu.memory_space<vmem>>, vector<32x1xf32>
    %217 = vector.broadcast %216 : vector<32x1xf32> to vector<32x256xf32>
    %218 = arith.addf %215, %217 : vector<32x256xf32>
    %219 = vector.extract_strided_slice %218 {offsets = [0, 0], sizes = [8, 256], strides = [1, 1]} : vector<32x256xf32> to vector<8x256xf32>
    %220 = arith.negf %219 : vector<8x256xf32>
    %221 = math.exp %220 : vector<8x256xf32>
    %cst_116 = arith.constant 1.000000e+00 : f32
    %222 = vector.broadcast %cst_116 : f32 to vector<8x256xf32>
    %223 = arith.addf %222, %221 : vector<8x256xf32>
    %224 = arith.divf %222, %223 : vector<8x256xf32>
    %225 = vector.extract_strided_slice %218 {offsets = [8, 0], sizes = [8, 256], strides = [1, 1]} : vector<32x256xf32> to vector<8x256xf32>
    %226 = arith.negf %225 : vector<8x256xf32>
    %227 = math.exp %226 : vector<8x256xf32>
    %cst_117 = arith.constant 1.000000e+00 : f32
    %228 = vector.broadcast %cst_117 : f32 to vector<8x256xf32>
    %229 = arith.addf %228, %227 : vector<8x256xf32>
    %230 = arith.divf %228, %229 : vector<8x256xf32>
    %231 = vector.extract_strided_slice %218 {offsets = [16, 0], sizes = [8, 256], strides = [1, 1]} : vector<32x256xf32> to vector<8x256xf32>
    %232 = arith.negf %231 : vector<8x256xf32>
    %233 = math.exp %232 : vector<8x256xf32>
    %cst_118 = arith.constant 1.000000e+00 : f32
    %234 = vector.broadcast %cst_118 : f32 to vector<8x256xf32>
    %235 = arith.addf %234, %233 : vector<8x256xf32>
    %236 = arith.divf %234, %235 : vector<8x256xf32>
    %237 = vector.extract_strided_slice %218 {offsets = [24, 0], sizes = [8, 256], strides = [1, 1]} : vector<32x256xf32> to vector<8x256xf32>
    %238 = math.tanh %237 : vector<8x256xf32>
    %239 = arith.mulf %230, %22 : vector<8x256xf32>
    %240 = arith.mulf %224, %238 : vector<8x256xf32>
    %241 = arith.addf %239, %240 : vector<8x256xf32>
    %242 = math.tanh %241 : vector<8x256xf32>
    %243 = arith.mulf %236, %242 : vector<8x256xf32>
    %c0_119 = arith.constant 0 : index
    %c0_120 = arith.constant 0 : index
    %c0_121 = arith.constant 0 : index
    %244 = vector.load %arg12[%c0_119, %c0_120, %c0_121] : memref<1x8x256xf32, #tpu.memory_space<vmem>>, vector<1x8x256xf32>
    %245 = vector.shape_cast %244 : vector<1x8x256xf32> to vector<8x256xf32>
    %246 = vector.shape_cast %243 : vector<8x256xf32> to vector<1x8x256xf32>
    tpu.vector_store %arg12[%c0_119, %c0_120, %c0_121], %246 {strides = array<i32>} : memref<1x8x256xf32, #tpu.memory_space<vmem>>, vector<1x8x256xf32>,
    %c0_122 = arith.constant 0 : index
    %c0_123 = arith.constant 0 : index
    %c0_124 = arith.constant 0 : index
    %247 = vector.load %arg13[%c0_122, %c0_123, %c0_124] : memref<1x8x256xf32, #tpu.memory_space<vmem>>, vector<1x8x256xf32>
    %248 = vector.shape_cast %247 : vector<1x8x256xf32> to vector<8x256xf32>
    %249 = vector.shape_cast %241 : vector<8x256xf32> to vector<1x8x256xf32>
    tpu.vector_store %arg13[%c0_122, %c0_123, %c0_124], %249 {strides = array<i32>} : memref<1x8x256xf32, #tpu.memory_space<vmem>>, vector<1x8x256xf32>,
    %c0_125 = arith.constant 0 : index
    %c0_126 = arith.constant 0 : index
    %c0_127 = arith.constant 0 : index
    %250 = vector.load %arg4[%c0_125, %c0_126, %c0_127] : memref<1x8x256xf32, #tpu.memory_space<vmem>>, vector<1x8x256xf32>
    %251 = vector.shape_cast %250 : vector<1x8x256xf32> to vector<8x256xf32>
    %c0_128 = arith.constant 0 : index
    %c0_129 = arith.constant 0 : index
    %c0_130 = arith.constant 0 : index
    %252 = vector.load %arg5[%c0_128, %c0_129, %c0_130] : memref<1x8x256xf32, #tpu.memory_space<vmem>>, vector<1x8x256xf32>
    %253 = vector.shape_cast %252 : vector<1x8x256xf32> to vector<8x256xf32>
    %cst_131 = arith.constant 0.000000e+00 : f32
    %254 = vector.broadcast %cst_131 : f32 to vector<32x256xf32>
    %c0_132 = arith.constant 0 : index
    %c0_133 = arith.constant 0 : index
    %c0_134 = arith.constant 0 : index
    %255 = vector.load %arg9[%c0_132, %c0_133, %c0_134] : memref<9x32x8xf32, #tpu.memory_space<vmem>>, vector<1x32x8xf32>
    %256 = vector.shape_cast %255 : vector<1x32x8xf32> to vector<32x8xf32>
    %cst_135 = arith.constant 0.000000e+00 : f32
    %257 = vector.broadcast %cst_135 : f32 to vector<8x17xf32>
    %258 = vector.extract_strided_slice %243 {offsets = [0, 0], sizes = [8, 239], strides = [1, 1]} : vector<8x256xf32> to vector<8x239xf32>
    %259 = tpu.concatenate %257, %258 in 1 : vector<8x17xf32>, vector<8x239xf32> -> vector<8x256xf32>
    %c1_i32_136 = arith.constant 1 : i32
    %260 = vector.broadcast %c1_i32_136 : i32 to vector<1x256xi32>
    %261 = arith.cmpi sge, %16, %260 : vector<1x256xi32>
    %cst_137 = arith.constant 0.000000e+00 : f32
    %262 = vector.shape_cast %261 : vector<1x256xi1> to vector<1x256xi1>
    %263 = vector.broadcast %262 : vector<1x256xi1> to vector<8x256xi1>
    %264 = vector.broadcast %cst_137 : f32 to vector<8x256xf32>
    %265 = arith.select %263, %259, %264 : vector<8x256xi1>, vector<8x256xf32>
    %cst_138 = arith.constant dense<0.000000e+00> : vector<32x256xf32>
    %266 = tpu.matmul %256, %265, %cst_138 {dimension_numbers = #tpu.dot_dimension_numbers<[1], [0], [0], [1], [0, 0, 1, 1], [], []>} : vector<32x8xf32>, vector<8x256xf32>, vector<32x256xf32> -> vector<32x256xf32>
    %267 = arith.addf %254, %266 : vector<32x256xf32>
    %c0_139 = arith.constant 0 : index
    %c0_140 = arith.constant 0 : index
    %c0_141 = arith.constant 0 : index
    %268 = vector.load %arg10[%c0_139, %c0_140, %c0_141] : memref<9x32x8xf32, #tpu.memory_space<vmem>>, vector<1x32x8xf32>
    %269 = vector.shape_cast %268 : vector<1x32x8xf32> to vector<32x8xf32>
    %cst_142 = arith.constant 0.000000e+00 : f32
    %270 = vector.broadcast %cst_142 : f32 to vector<8x17xf32>
    %271 = vector.extract_strided_slice %251 {offsets = [0, 0], sizes = [8, 239], strides = [1, 1]} : vector<8x256xf32> to vector<8x239xf32>
    %272 = tpu.concatenate %270, %271 in 1 : vector<8x17xf32>, vector<8x239xf32> -> vector<8x256xf32>
    %c1_i32_143 = arith.constant 1 : i32
    %273 = vector.broadcast %c1_i32_143 : i32 to vector<1x256xi32>
    %274 = arith.cmpi sge, %16, %273 : vector<1x256xi32>
    %cst_144 = arith.constant 0.000000e+00 : f32
    %275 = vector.shape_cast %274 : vector<1x256xi1> to vector<1x256xi1>
    %276 = vector.broadcast %275 : vector<1x256xi1> to vector<8x256xi1>
    %277 = vector.broadcast %cst_144 : f32 to vector<8x256xf32>
    %278 = arith.select %276, %272, %277 : vector<8x256xi1>, vector<8x256xf32>
    %cst_145 = arith.constant dense<0.000000e+00> : vector<32x256xf32>
    %279 = tpu.matmul %269, %278, %cst_145 {dimension_numbers = #tpu.dot_dimension_numbers<[1], [0], [0], [1], [0, 0, 1, 1], [], []>} : vector<32x8xf32>, vector<8x256xf32>, vector<32x256xf32> -> vector<32x256xf32>
    %280 = arith.addf %267, %279 : vector<32x256xf32>
    %c1_146 = arith.constant 1 : index
    %c0_147 = arith.constant 0 : index
    %c0_148 = arith.constant 0 : index
    %281 = vector.load %arg9[%c1_146, %c0_147, %c0_148] : memref<9x32x8xf32, #tpu.memory_space<vmem>>, vector<1x32x8xf32>
    %282 = vector.shape_cast %281 : vector<1x32x8xf32> to vector<32x8xf32>
    %cst_149 = arith.constant 0.000000e+00 : f32
    %283 = vector.broadcast %cst_149 : f32 to vector<8x16xf32>
    %284 = vector.extract_strided_slice %243 {offsets = [0, 0], sizes = [8, 240], strides = [1, 1]} : vector<8x256xf32> to vector<8x240xf32>
    %285 = tpu.concatenate %283, %284 in 1 : vector<8x16xf32>, vector<8x240xf32> -> vector<8x256xf32>
    %cst_150 = arith.constant dense<0.000000e+00> : vector<32x256xf32>
    %286 = tpu.matmul %282, %285, %cst_150 {dimension_numbers = #tpu.dot_dimension_numbers<[1], [0], [0], [1], [0, 0, 1, 1], [], []>} : vector<32x8xf32>, vector<8x256xf32>, vector<32x256xf32> -> vector<32x256xf32>
    %287 = arith.addf %280, %286 : vector<32x256xf32>
    %c1_151 = arith.constant 1 : index
    %c0_152 = arith.constant 0 : index
    %c0_153 = arith.constant 0 : index
    %288 = vector.load %arg10[%c1_151, %c0_152, %c0_153] : memref<9x32x8xf32, #tpu.memory_space<vmem>>, vector<1x32x8xf32>
    %289 = vector.shape_cast %288 : vector<1x32x8xf32> to vector<32x8xf32>
    %cst_154 = arith.constant 0.000000e+00 : f32
    %290 = vector.broadcast %cst_154 : f32 to vector<8x16xf32>
    %291 = vector.extract_strided_slice %251 {offsets = [0, 0], sizes = [8, 240], strides = [1, 1]} : vector<8x256xf32> to vector<8x240xf32>
    %292 = tpu.concatenate %290, %291 in 1 : vector<8x16xf32>, vector<8x240xf32> -> vector<8x256xf32>
    %cst_155 = arith.constant dense<0.000000e+00> : vector<32x256xf32>
    %293 = tpu.matmul %289, %292, %cst_155 {dimension_numbers = #tpu.dot_dimension_numbers<[1], [0], [0], [1], [0, 0, 1, 1], [], []>} : vector<32x8xf32>, vector<8x256xf32>, vector<32x256xf32> -> vector<32x256xf32>
    %294 = arith.addf %287, %293 : vector<32x256xf32>
    %c2_156 = arith.constant 2 : index
    %c0_157 = arith.constant 0 : index
    %c0_158 = arith.constant 0 : index
    %295 = vector.load %arg9[%c2_156, %c0_157, %c0_158] : memref<9x32x8xf32, #tpu.memory_space<vmem>>, vector<1x32x8xf32>
    %296 = vector.shape_cast %295 : vector<1x32x8xf32> to vector<32x8xf32>
    %cst_159 = arith.constant 0.000000e+00 : f32
    %297 = vector.broadcast %cst_159 : f32 to vector<8x15xf32>
    %298 = vector.extract_strided_slice %243 {offsets = [0, 0], sizes = [8, 241], strides = [1, 1]} : vector<8x256xf32> to vector<8x241xf32>
    %299 = tpu.concatenate %297, %298 in 1 : vector<8x15xf32>, vector<8x241xf32> -> vector<8x256xf32>
    %c15_i32_160 = arith.constant 15 : i32
    %300 = vector.broadcast %c15_i32_160 : i32 to vector<1x256xi32>
    %301 = arith.cmpi slt, %16, %300 : vector<1x256xi32>
    %cst_161 = arith.constant 0.000000e+00 : f32
    %302 = vector.shape_cast %301 : vector<1x256xi1> to vector<1x256xi1>
    %303 = vector.broadcast %302 : vector<1x256xi1> to vector<8x256xi1>
    %304 = vector.broadcast %cst_161 : f32 to vector<8x256xf32>
    %305 = arith.select %303, %299, %304 : vector<8x256xi1>, vector<8x256xf32>
    %cst_162 = arith.constant dense<0.000000e+00> : vector<32x256xf32>
    %306 = tpu.matmul %296, %305, %cst_162 {dimension_numbers = #tpu.dot_dimension_numbers<[1], [0], [0], [1], [0, 0, 1, 1], [], []>} : vector<32x8xf32>, vector<8x256xf32>, vector<32x256xf32> -> vector<32x256xf32>
    %307 = arith.addf %294, %306 : vector<32x256xf32>
    %c2_163 = arith.constant 2 : index
    %c0_164 = arith.constant 0 : index
    %c0_165 = arith.constant 0 : index
    %308 = vector.load %arg10[%c2_163, %c0_164, %c0_165] : memref<9x32x8xf32, #tpu.memory_space<vmem>>, vector<1x32x8xf32>
    %309 = vector.shape_cast %308 : vector<1x32x8xf32> to vector<32x8xf32>
    %cst_166 = arith.constant 0.000000e+00 : f32
    %310 = vector.broadcast %cst_166 : f32 to vector<8x15xf32>
    %311 = vector.extract_strided_slice %251 {offsets = [0, 0], sizes = [8, 241], strides = [1, 1]} : vector<8x256xf32> to vector<8x241xf32>
    %312 = tpu.concatenate %310, %311 in 1 : vector<8x15xf32>, vector<8x241xf32> -> vector<8x256xf32>
    %c15_i32_167 = arith.constant 15 : i32
    %313 = vector.broadcast %c15_i32_167 : i32 to vector<1x256xi32>
    %314 = arith.cmpi slt, %16, %313 : vector<1x256xi32>
    %cst_168 = arith.constant 0.000000e+00 : f32
    %315 = vector.shape_cast %314 : vector<1x256xi1> to vector<1x256xi1>
    %316 = vector.broadcast %315 : vector<1x256xi1> to vector<8x256xi1>
    %317 = vector.broadcast %cst_168 : f32 to vector<8x256xf32>
    %318 = arith.select %316, %312, %317 : vector<8x256xi1>, vector<8x256xf32>
    %cst_169 = arith.constant dense<0.000000e+00> : vector<32x256xf32>
    %319 = tpu.matmul %309, %318, %cst_169 {dimension_numbers = #tpu.dot_dimension_numbers<[1], [0], [0], [1], [0, 0, 1, 1], [], []>} : vector<32x8xf32>, vector<8x256xf32>, vector<32x256xf32> -> vector<32x256xf32>
    %320 = arith.addf %307, %319 : vector<32x256xf32>
    %c3_170 = arith.constant 3 : index
    %c0_171 = arith.constant 0 : index
    %c0_172 = arith.constant 0 : index
    %321 = vector.load %arg9[%c3_170, %c0_171, %c0_172] : memref<9x32x8xf32, #tpu.memory_space<vmem>>, vector<1x32x8xf32>
    %322 = vector.shape_cast %321 : vector<1x32x8xf32> to vector<32x8xf32>
    %cst_173 = arith.constant 0.000000e+00 : f32
    %323 = vector.broadcast %cst_173 : f32 to vector<8x1xf32>
    %324 = vector.extract_strided_slice %243 {offsets = [0, 0], sizes = [8, 255], strides = [1, 1]} : vector<8x256xf32> to vector<8x255xf32>
    %325 = tpu.concatenate %323, %324 in 1 : vector<8x1xf32>, vector<8x255xf32> -> vector<8x256xf32>
    %c1_i32_174 = arith.constant 1 : i32
    %326 = vector.broadcast %c1_i32_174 : i32 to vector<1x256xi32>
    %327 = arith.cmpi sge, %16, %326 : vector<1x256xi32>
    %cst_175 = arith.constant 0.000000e+00 : f32
    %328 = vector.shape_cast %327 : vector<1x256xi1> to vector<1x256xi1>
    %329 = vector.broadcast %328 : vector<1x256xi1> to vector<8x256xi1>
    %330 = vector.broadcast %cst_175 : f32 to vector<8x256xf32>
    %331 = arith.select %329, %325, %330 : vector<8x256xi1>, vector<8x256xf32>
    %cst_176 = arith.constant dense<0.000000e+00> : vector<32x256xf32>
    %332 = tpu.matmul %322, %331, %cst_176 {dimension_numbers = #tpu.dot_dimension_numbers<[1], [0], [0], [1], [0, 0, 1, 1], [], []>} : vector<32x8xf32>, vector<8x256xf32>, vector<32x256xf32> -> vector<32x256xf32>
    %333 = arith.addf %320, %332 : vector<32x256xf32>
    %c3_177 = arith.constant 3 : index
    %c0_178 = arith.constant 0 : index
    %c0_179 = arith.constant 0 : index
    %334 = vector.load %arg10[%c3_177, %c0_178, %c0_179] : memref<9x32x8xf32, #tpu.memory_space<vmem>>, vector<1x32x8xf32>
    %335 = vector.shape_cast %334 : vector<1x32x8xf32> to vector<32x8xf32>
    %cst_180 = arith.constant 0.000000e+00 : f32
    %336 = vector.broadcast %cst_180 : f32 to vector<8x1xf32>
    %337 = vector.extract_strided_slice %251 {offsets = [0, 0], sizes = [8, 255], strides = [1, 1]} : vector<8x256xf32> to vector<8x255xf32>
    %338 = tpu.concatenate %336, %337 in 1 : vector<8x1xf32>, vector<8x255xf32> -> vector<8x256xf32>
    %c1_i32_181 = arith.constant 1 : i32
    %339 = vector.broadcast %c1_i32_181 : i32 to vector<1x256xi32>
    %340 = arith.cmpi sge, %16, %339 : vector<1x256xi32>
    %cst_182 = arith.constant 0.000000e+00 : f32
    %341 = vector.shape_cast %340 : vector<1x256xi1> to vector<1x256xi1>
    %342 = vector.broadcast %341 : vector<1x256xi1> to vector<8x256xi1>
    %343 = vector.broadcast %cst_182 : f32 to vector<8x256xf32>
    %344 = arith.select %342, %338, %343 : vector<8x256xi1>, vector<8x256xf32>
    %cst_183 = arith.constant dense<0.000000e+00> : vector<32x256xf32>
    %345 = tpu.matmul %335, %344, %cst_183 {dimension_numbers = #tpu.dot_dimension_numbers<[1], [0], [0], [1], [0, 0, 1, 1], [], []>} : vector<32x8xf32>, vector<8x256xf32>, vector<32x256xf32> -> vector<32x256xf32>
    %346 = arith.addf %333, %345 : vector<32x256xf32>
    %c4_184 = arith.constant 4 : index
    %c0_185 = arith.constant 0 : index
    %c0_186 = arith.constant 0 : index
    %347 = vector.load %arg9[%c4_184, %c0_185, %c0_186] : memref<9x32x8xf32, #tpu.memory_space<vmem>>, vector<1x32x8xf32>
    %348 = vector.shape_cast %347 : vector<1x32x8xf32> to vector<32x8xf32>
    %cst_187 = arith.constant dense<0.000000e+00> : vector<32x256xf32>
    %349 = tpu.matmul %348, %243, %cst_187 {dimension_numbers = #tpu.dot_dimension_numbers<[1], [0], [0], [1], [0, 0, 1, 1], [], []>} : vector<32x8xf32>, vector<8x256xf32>, vector<32x256xf32> -> vector<32x256xf32>
    %350 = arith.addf %346, %349 : vector<32x256xf32>
    %c4_188 = arith.constant 4 : index
    %c0_189 = arith.constant 0 : index
    %c0_190 = arith.constant 0 : index
    %351 = vector.load %arg10[%c4_188, %c0_189, %c0_190] : memref<9x32x8xf32, #tpu.memory_space<vmem>>, vector<1x32x8xf32>
    %352 = vector.shape_cast %351 : vector<1x32x8xf32> to vector<32x8xf32>
    %cst_191 = arith.constant dense<0.000000e+00> : vector<32x256xf32>
    %353 = tpu.matmul %352, %251, %cst_191 {dimension_numbers = #tpu.dot_dimension_numbers<[1], [0], [0], [1], [0, 0, 1, 1], [], []>} : vector<32x8xf32>, vector<8x256xf32>, vector<32x256xf32> -> vector<32x256xf32>
    %354 = arith.addf %350, %353 : vector<32x256xf32>
    %c5_192 = arith.constant 5 : index
    %c0_193 = arith.constant 0 : index
    %c0_194 = arith.constant 0 : index
    %355 = vector.load %arg9[%c5_192, %c0_193, %c0_194] : memref<9x32x8xf32, #tpu.memory_space<vmem>>, vector<1x32x8xf32>
    %356 = vector.shape_cast %355 : vector<1x32x8xf32> to vector<32x8xf32>
    %357 = vector.extract_strided_slice %243 {offsets = [0, 1], sizes = [8, 255], strides = [1, 1]} : vector<8x256xf32> to vector<8x255xf32>
    %cst_195 = arith.constant 0.000000e+00 : f32
    %358 = vector.broadcast %cst_195 : f32 to vector<8x1xf32>
    %359 = tpu.concatenate %357, %358 in 1 : vector<8x255xf32>, vector<8x1xf32> -> vector<8x256xf32>
    %c15_i32_196 = arith.constant 15 : i32
    %360 = vector.broadcast %c15_i32_196 : i32 to vector<1x256xi32>
    %361 = arith.cmpi slt, %16, %360 : vector<1x256xi32>
    %cst_197 = arith.constant 0.000000e+00 : f32
    %362 = vector.shape_cast %361 : vector<1x256xi1> to vector<1x256xi1>
    %363 = vector.broadcast %362 : vector<1x256xi1> to vector<8x256xi1>
    %364 = vector.broadcast %cst_197 : f32 to vector<8x256xf32>
    %365 = arith.select %363, %359, %364 : vector<8x256xi1>, vector<8x256xf32>
    %cst_198 = arith.constant dense<0.000000e+00> : vector<32x256xf32>
    %366 = tpu.matmul %356, %365, %cst_198 {dimension_numbers = #tpu.dot_dimension_numbers<[1], [0], [0], [1], [0, 0, 1, 1], [], []>} : vector<32x8xf32>, vector<8x256xf32>, vector<32x256xf32> -> vector<32x256xf32>
    %367 = arith.addf %354, %366 : vector<32x256xf32>
    %c5_199 = arith.constant 5 : index
    %c0_200 = arith.constant 0 : index
    %c0_201 = arith.constant 0 : index
    %368 = vector.load %arg10[%c5_199, %c0_200, %c0_201] : memref<9x32x8xf32, #tpu.memory_space<vmem>>, vector<1x32x8xf32>
    %369 = vector.shape_cast %368 : vector<1x32x8xf32> to vector<32x8xf32>
    %370 = vector.extract_strided_slice %251 {offsets = [0, 1], sizes = [8, 255], strides = [1, 1]} : vector<8x256xf32> to vector<8x255xf32>
    %cst_202 = arith.constant 0.000000e+00 : f32
    %371 = vector.broadcast %cst_202 : f32 to vector<8x1xf32>
    %372 = tpu.concatenate %370, %371 in 1 : vector<8x255xf32>, vector<8x1xf32> -> vector<8x256xf32>
    %c15_i32_203 = arith.constant 15 : i32
    %373 = vector.broadcast %c15_i32_203 : i32 to vector<1x256xi32>
    %374 = arith.cmpi slt, %16, %373 : vector<1x256xi32>
    %cst_204 = arith.constant 0.000000e+00 : f32
    %375 = vector.shape_cast %374 : vector<1x256xi1> to vector<1x256xi1>
    %376 = vector.broadcast %375 : vector<1x256xi1> to vector<8x256xi1>
    %377 = vector.broadcast %cst_204 : f32 to vector<8x256xf32>
    %378 = arith.select %376, %372, %377 : vector<8x256xi1>, vector<8x256xf32>
    %cst_205 = arith.constant dense<0.000000e+00> : vector<32x256xf32>
    %379 = tpu.matmul %369, %378, %cst_205 {dimension_numbers = #tpu.dot_dimension_numbers<[1], [0], [0], [1], [0, 0, 1, 1], [], []>} : vector<32x8xf32>, vector<8x256xf32>, vector<32x256xf32> -> vector<32x256xf32>
    %380 = arith.addf %367, %379 : vector<32x256xf32>
    %c6_206 = arith.constant 6 : index
    %c0_207 = arith.constant 0 : index
    %c0_208 = arith.constant 0 : index
    %381 = vector.load %arg9[%c6_206, %c0_207, %c0_208] : memref<9x32x8xf32, #tpu.memory_space<vmem>>, vector<1x32x8xf32>
    %382 = vector.shape_cast %381 : vector<1x32x8xf32> to vector<32x8xf32>
    %383 = vector.extract_strided_slice %243 {offsets = [0, 15], sizes = [8, 241], strides = [1, 1]} : vector<8x256xf32> to vector<8x241xf32>
    %cst_209 = arith.constant 0.000000e+00 : f32
    %384 = vector.broadcast %cst_209 : f32 to vector<8x15xf32>
    %385 = tpu.concatenate %383, %384 in 1 : vector<8x241xf32>, vector<8x15xf32> -> vector<8x256xf32>
    %c1_i32_210 = arith.constant 1 : i32
    %386 = vector.broadcast %c1_i32_210 : i32 to vector<1x256xi32>
    %387 = arith.cmpi sge, %16, %386 : vector<1x256xi32>
    %cst_211 = arith.constant 0.000000e+00 : f32
    %388 = vector.shape_cast %387 : vector<1x256xi1> to vector<1x256xi1>
    %389 = vector.broadcast %388 : vector<1x256xi1> to vector<8x256xi1>
    %390 = vector.broadcast %cst_211 : f32 to vector<8x256xf32>
    %391 = arith.select %389, %385, %390 : vector<8x256xi1>, vector<8x256xf32>
    %cst_212 = arith.constant dense<0.000000e+00> : vector<32x256xf32>
    %392 = tpu.matmul %382, %391, %cst_212 {dimension_numbers = #tpu.dot_dimension_numbers<[1], [0], [0], [1], [0, 0, 1, 1], [], []>} : vector<32x8xf32>, vector<8x256xf32>, vector<32x256xf32> -> vector<32x256xf32>
    %393 = arith.addf %380, %392 : vector<32x256xf32>
    %c6_213 = arith.constant 6 : index
    %c0_214 = arith.constant 0 : index
    %c0_215 = arith.constant 0 : index
    %394 = vector.load %arg10[%c6_213, %c0_214, %c0_215] : memref<9x32x8xf32, #tpu.memory_space<vmem>>, vector<1x32x8xf32>
    %395 = vector.shape_cast %394 : vector<1x32x8xf32> to vector<32x8xf32>
    %396 = vector.extract_strided_slice %251 {offsets = [0, 15], sizes = [8, 241], strides = [1, 1]} : vector<8x256xf32> to vector<8x241xf32>
    %cst_216 = arith.constant 0.000000e+00 : f32
    %397 = vector.broadcast %cst_216 : f32 to vector<8x15xf32>
    %398 = tpu.concatenate %396, %397 in 1 : vector<8x241xf32>, vector<8x15xf32> -> vector<8x256xf32>
    %c1_i32_217 = arith.constant 1 : i32
    %399 = vector.broadcast %c1_i32_217 : i32 to vector<1x256xi32>
    %400 = arith.cmpi sge, %16, %399 : vector<1x256xi32>
    %cst_218 = arith.constant 0.000000e+00 : f32
    %401 = vector.shape_cast %400 : vector<1x256xi1> to vector<1x256xi1>
    %402 = vector.broadcast %401 : vector<1x256xi1> to vector<8x256xi1>
    %403 = vector.broadcast %cst_218 : f32 to vector<8x256xf32>
    %404 = arith.select %402, %398, %403 : vector<8x256xi1>, vector<8x256xf32>
    %cst_219 = arith.constant dense<0.000000e+00> : vector<32x256xf32>
    %405 = tpu.matmul %395, %404, %cst_219 {dimension_numbers = #tpu.dot_dimension_numbers<[1], [0], [0], [1], [0, 0, 1, 1], [], []>} : vector<32x8xf32>, vector<8x256xf32>, vector<32x256xf32> -> vector<32x256xf32>
    %406 = arith.addf %393, %405 : vector<32x256xf32>
    %c7_220 = arith.constant 7 : index
    %c0_221 = arith.constant 0 : index
    %c0_222 = arith.constant 0 : index
    %407 = vector.load %arg9[%c7_220, %c0_221, %c0_222] : memref<9x32x8xf32, #tpu.memory_space<vmem>>, vector<1x32x8xf32>
    %408 = vector.shape_cast %407 : vector<1x32x8xf32> to vector<32x8xf32>
    %409 = vector.extract_strided_slice %243 {offsets = [0, 16], sizes = [8, 240], strides = [1, 1]} : vector<8x256xf32> to vector<8x240xf32>
    %cst_223 = arith.constant 0.000000e+00 : f32
    %410 = vector.broadcast %cst_223 : f32 to vector<8x16xf32>
    %411 = tpu.concatenate %409, %410 in 1 : vector<8x240xf32>, vector<8x16xf32> -> vector<8x256xf32>
    %cst_224 = arith.constant dense<0.000000e+00> : vector<32x256xf32>
    %412 = tpu.matmul %408, %411, %cst_224 {dimension_numbers = #tpu.dot_dimension_numbers<[1], [0], [0], [1], [0, 0, 1, 1], [], []>} : vector<32x8xf32>, vector<8x256xf32>, vector<32x256xf32> -> vector<32x256xf32>
    %413 = arith.addf %406, %412 : vector<32x256xf32>
    %c7_225 = arith.constant 7 : index
    %c0_226 = arith.constant 0 : index
    %c0_227 = arith.constant 0 : index
    %414 = vector.load %arg10[%c7_225, %c0_226, %c0_227] : memref<9x32x8xf32, #tpu.memory_space<vmem>>, vector<1x32x8xf32>
    %415 = vector.shape_cast %414 : vector<1x32x8xf32> to vector<32x8xf32>
    %416 = vector.extract_strided_slice %251 {offsets = [0, 16], sizes = [8, 240], strides = [1, 1]} : vector<8x256xf32> to vector<8x240xf32>
    %cst_228 = arith.constant 0.000000e+00 : f32
    %417 = vector.broadcast %cst_228 : f32 to vector<8x16xf32>
    %418 = tpu.concatenate %416, %417 in 1 : vector<8x240xf32>, vector<8x16xf32> -> vector<8x256xf32>
    %cst_229 = arith.constant dense<0.000000e+00> : vector<32x256xf32>
    %419 = tpu.matmul %415, %418, %cst_229 {dimension_numbers = #tpu.dot_dimension_numbers<[1], [0], [0], [1], [0, 0, 1, 1], [], []>} : vector<32x8xf32>, vector<8x256xf32>, vector<32x256xf32> -> vector<32x256xf32>
    %420 = arith.addf %413, %419 : vector<32x256xf32>
    %c8_230 = arith.constant 8 : index
    %c0_231 = arith.constant 0 : index
    %c0_232 = arith.constant 0 : index
    %421 = vector.load %arg9[%c8_230, %c0_231, %c0_232] : memref<9x32x8xf32, #tpu.memory_space<vmem>>, vector<1x32x8xf32>
    %422 = vector.shape_cast %421 : vector<1x32x8xf32> to vector<32x8xf32>
    %423 = vector.extract_strided_slice %243 {offsets = [0, 17], sizes = [8, 239], strides = [1, 1]} : vector<8x256xf32> to vector<8x239xf32>
    %cst_233 = arith.constant 0.000000e+00 : f32
    %424 = vector.broadcast %cst_233 : f32 to vector<8x17xf32>
    %425 = tpu.concatenate %423, %424 in 1 : vector<8x239xf32>, vector<8x17xf32> -> vector<8x256xf32>
    %c15_i32_234 = arith.constant 15 : i32
    %426 = vector.broadcast %c15_i32_234 : i32 to vector<1x256xi32>
    %427 = arith.cmpi slt, %16, %426 : vector<1x256xi32>
    %cst_235 = arith.constant 0.000000e+00 : f32
    %428 = vector.shape_cast %427 : vector<1x256xi1> to vector<1x256xi1>
    %429 = vector.broadcast %428 : vector<1x256xi1> to vector<8x256xi1>
    %430 = vector.broadcast %cst_235 : f32 to vector<8x256xf32>
    %431 = arith.select %429, %425, %430 : vector<8x256xi1>, vector<8x256xf32>
    %cst_236 = arith.constant dense<0.000000e+00> : vector<32x256xf32>
    %432 = tpu.matmul %422, %431, %cst_236 {dimension_numbers = #tpu.dot_dimension_numbers<[1], [0], [0], [1], [0, 0, 1, 1], [], []>} : vector<32x8xf32>, vector<8x256xf32>, vector<32x256xf32> -> vector<32x256xf32>
    %433 = arith.addf %420, %432 : vector<32x256xf32>
    %c8_237 = arith.constant 8 : index
    %c0_238 = arith.constant 0 : index
    %c0_239 = arith.constant 0 : index
    %434 = vector.load %arg10[%c8_237, %c0_238, %c0_239] : memref<9x32x8xf32, #tpu.memory_space<vmem>>, vector<1x32x8xf32>
    %435 = vector.shape_cast %434 : vector<1x32x8xf32> to vector<32x8xf32>
    %436 = vector.extract_strided_slice %251 {offsets = [0, 17], sizes = [8, 239], strides = [1, 1]} : vector<8x256xf32> to vector<8x239xf32>
    %cst_240 = arith.constant 0.000000e+00 : f32
    %437 = vector.broadcast %cst_240 : f32 to vector<8x17xf32>
    %438 = tpu.concatenate %436, %437 in 1 : vector<8x239xf32>, vector<8x17xf32> -> vector<8x256xf32>
    %c15_i32_241 = arith.constant 15 : i32
    %439 = vector.broadcast %c15_i32_241 : i32 to vector<1x256xi32>
    %440 = arith.cmpi slt, %16, %439 : vector<1x256xi32>
    %cst_242 = arith.constant 0.000000e+00 : f32
    %441 = vector.shape_cast %440 : vector<1x256xi1> to vector<1x256xi1>
    %442 = vector.broadcast %441 : vector<1x256xi1> to vector<8x256xi1>
    %443 = vector.broadcast %cst_242 : f32 to vector<8x256xf32>
    %444 = arith.select %442, %438, %443 : vector<8x256xi1>, vector<8x256xf32>
    %cst_243 = arith.constant dense<0.000000e+00> : vector<32x256xf32>
    %445 = tpu.matmul %435, %444, %cst_243 {dimension_numbers = #tpu.dot_dimension_numbers<[1], [0], [0], [1], [0, 0, 1, 1], [], []>} : vector<32x8xf32>, vector<8x256xf32>, vector<32x256xf32> -> vector<32x256xf32>
    %446 = arith.addf %433, %445 : vector<32x256xf32>
    %c0_244 = arith.constant 0 : index
    %c0_245 = arith.constant 0 : index
    %447 = vector.load %arg11[%c0_244, %c0_245] : memref<32x1xf32, #tpu.memory_space<vmem>>, vector<32x1xf32>
    %448 = vector.broadcast %447 : vector<32x1xf32> to vector<32x256xf32>
    %449 = arith.addf %446, %448 : vector<32x256xf32>
    %450 = vector.extract_strided_slice %449 {offsets = [0, 0], sizes = [8, 256], strides = [1, 1]} : vector<32x256xf32> to vector<8x256xf32>
    %451 = arith.negf %450 : vector<8x256xf32>
    %452 = math.exp %451 : vector<8x256xf32>
    %cst_246 = arith.constant 1.000000e+00 : f32
    %453 = vector.broadcast %cst_246 : f32 to vector<8x256xf32>
    %454 = arith.addf %453, %452 : vector<8x256xf32>
    %455 = arith.divf %453, %454 : vector<8x256xf32>
    %456 = vector.extract_strided_slice %449 {offsets = [8, 0], sizes = [8, 256], strides = [1, 1]} : vector<32x256xf32> to vector<8x256xf32>
    %457 = arith.negf %456 : vector<8x256xf32>
    %458 = math.exp %457 : vector<8x256xf32>
    %cst_247 = arith.constant 1.000000e+00 : f32
    %459 = vector.broadcast %cst_247 : f32 to vector<8x256xf32>
    %460 = arith.addf %459, %458 : vector<8x256xf32>
    %461 = arith.divf %459, %460 : vector<8x256xf32>
    %462 = vector.extract_strided_slice %449 {offsets = [16, 0], sizes = [8, 256], strides = [1, 1]} : vector<32x256xf32> to vector<8x256xf32>
    %463 = arith.negf %462 : vector<8x256xf32>
    %464 = math.exp %463 : vector<8x256xf32>
    %cst_248 = arith.constant 1.000000e+00 : f32
    %465 = vector.broadcast %cst_248 : f32 to vector<8x256xf32>
    %466 = arith.addf %465, %464 : vector<8x256xf32>
    %467 = arith.divf %465, %466 : vector<8x256xf32>
    %468 = vector.extract_strided_slice %449 {offsets = [24, 0], sizes = [8, 256], strides = [1, 1]} : vector<32x256xf32> to vector<8x256xf32>
    %469 = math.tanh %468 : vector<8x256xf32>
    %470 = arith.mulf %461, %253 : vector<8x256xf32>
    %471 = arith.mulf %455, %469 : vector<8x256xf32>
    %472 = arith.addf %470, %471 : vector<8x256xf32>
    %473 = math.tanh %472 : vector<8x256xf32>
    %474 = arith.mulf %467, %473 : vector<8x256xf32>
    %c0_249 = arith.constant 0 : index
    %c0_250 = arith.constant 0 : index
    %c0_251 = arith.constant 0 : index
    %475 = vector.load %arg14[%c0_249, %c0_250, %c0_251] : memref<1x8x256xf32, #tpu.memory_space<vmem>>, vector<1x8x256xf32>
    %476 = vector.shape_cast %475 : vector<1x8x256xf32> to vector<8x256xf32>
    %477 = vector.shape_cast %474 : vector<8x256xf32> to vector<1x8x256xf32>
    tpu.vector_store %arg14[%c0_249, %c0_250, %c0_251], %477 {strides = array<i32>} : memref<1x8x256xf32, #tpu.memory_space<vmem>>, vector<1x8x256xf32>,
    %c0_252 = arith.constant 0 : index
    %c0_253 = arith.constant 0 : index
    %c0_254 = arith.constant 0 : index
    %478 = vector.load %arg15[%c0_252, %c0_253, %c0_254] : memref<1x8x256xf32, #tpu.memory_space<vmem>>, vector<1x8x256xf32>
    %479 = vector.shape_cast %478 : vector<1x8x256xf32> to vector<8x256xf32>
    %480 = vector.shape_cast %472 : vector<8x256xf32> to vector<1x8x256xf32>
    tpu.vector_store %arg15[%c0_252, %c0_253, %c0_254], %480 {strides = array<i32>} : memref<1x8x256xf32, #tpu.memory_space<vmem>>, vector<1x8x256xf32>,
    return
  }
  func.func @transform_0(%arg0: i32) -> (i32, i32, i32) {
    %c0_i32 = arith.constant 0 : i32
    %c0_i32_0 = arith.constant 0 : i32
    %c0_i32_1 = arith.constant 0 : i32
    return %arg0, %c0_i32, %c0_i32_0 : i32, i32, i32
  }
  func.func @transform_1(%arg0: i32) -> (i32, i32, i32) {
    %c0_i32 = arith.constant 0 : i32
    %c0_i32_0 = arith.constant 0 : i32
    %c0_i32_1 = arith.constant 0 : i32
    return %arg0, %c0_i32, %c0_i32_0 : i32, i32, i32
  }
  func.func @transform_2(%arg0: i32) -> (i32, i32, i32) {
    %c0_i32 = arith.constant 0 : i32
    %c0_i32_0 = arith.constant 0 : i32
    %c0_i32_1 = arith.constant 0 : i32
    return %arg0, %c0_i32, %c0_i32_0 : i32, i32, i32
  }
  func.func @transform_3(%arg0: i32) -> (i32, i32, i32) {
    %c0_i32 = arith.constant 0 : i32
    %c0_i32_0 = arith.constant 0 : i32
    %c0_i32_1 = arith.constant 0 : i32
    return %arg0, %c0_i32, %c0_i32_0 : i32, i32, i32
  }
  func.func @transform_4(%arg0: i32) -> (i32, i32, i32) {
    %c0_i32 = arith.constant 0 : i32
    %c0_i32_0 = arith.constant 0 : i32
    %c0_i32_1 = arith.constant 0 : i32
    return %arg0, %c0_i32, %c0_i32_0 : i32, i32, i32
  }
  func.func @transform_5(%arg0: i32) -> (i32, i32, i32) {
    %c0_i32 = arith.constant 0 : i32
    %c0_i32_0 = arith.constant 0 : i32
    %c0_i32_1 = arith.constant 0 : i32
    %c0_i32_2 = arith.constant 0 : i32
    return %c0_i32, %c0_i32_0, %c0_i32_1 : i32, i32, i32
  }
  func.func @transform_6(%arg0: i32) -> (i32, i32, i32) {
    %c0_i32 = arith.constant 0 : i32
    %c0_i32_0 = arith.constant 0 : i32
    %c0_i32_1 = arith.constant 0 : i32
    %c0_i32_2 = arith.constant 0 : i32
    return %c0_i32, %c0_i32_0, %c0_i32_1 : i32, i32, i32
  }
  func.func @transform_7(%arg0: i32) -> (i32, i32) {
    %c0_i32 = arith.constant 0 : i32
    %c0_i32_0 = arith.constant 0 : i32
    %c0_i32_1 = arith.constant 0 : i32
    return %c0_i32, %c0_i32_0 : i32, i32
  }
  func.func @transform_8(%arg0: i32) -> (i32, i32, i32) {
    %c0_i32 = arith.constant 0 : i32
    %c0_i32_0 = arith.constant 0 : i32
    %c0_i32_1 = arith.constant 0 : i32
    %c0_i32_2 = arith.constant 0 : i32
    return %c0_i32, %c0_i32_0, %c0_i32_1 : i32, i32, i32
  }
  func.func @transform_9(%arg0: i32) -> (i32, i32, i32) {
    %c0_i32 = arith.constant 0 : i32
    %c0_i32_0 = arith.constant 0 : i32
    %c0_i32_1 = arith.constant 0 : i32
    %c0_i32_2 = arith.constant 0 : i32
    return %c0_i32, %c0_i32_0, %c0_i32_1 : i32, i32, i32
  }
  func.func @transform_10(%arg0: i32) -> (i32, i32) {
    %c0_i32 = arith.constant 0 : i32
    %c0_i32_0 = arith.constant 0 : i32
    %c0_i32_1 = arith.constant 0 : i32
    return %c0_i32, %c0_i32_0 : i32, i32
  }
  func.func @transform_11(%arg0: i32) -> (i32, i32, i32) {
    %c0_i32 = arith.constant 0 : i32
    %c0_i32_0 = arith.constant 0 : i32
    %c0_i32_1 = arith.constant 0 : i32
    return %arg0, %c0_i32, %c0_i32_0 : i32, i32, i32
  }
  func.func @transform_12(%arg0: i32) -> (i32, i32, i32) {
    %c0_i32 = arith.constant 0 : i32
    %c0_i32_0 = arith.constant 0 : i32
    %c0_i32_1 = arith.constant 0 : i32
    return %arg0, %c0_i32, %c0_i32_0 : i32, i32, i32
  }
  func.func @transform_13(%arg0: i32) -> (i32, i32, i32) {
    %c0_i32 = arith.constant 0 : i32
    %c0_i32_0 = arith.constant 0 : i32
    %c0_i32_1 = arith.constant 0 : i32
    return %arg0, %c0_i32, %c0_i32_0 : i32, i32, i32
  }
  func.func @transform_14(%arg0: i32) -> (i32, i32, i32) {
    %c0_i32 = arith.constant 0 : i32
    %c0_i32_0 = arith.constant 0 : i32
    %c0_i32_1 = arith.constant 0 : i32
    return %arg0, %c0_i32, %c0_i32_0 : i32, i32, i32
  }
}

</mosaic_0001>

<llo_original>
// kernel: convlstm2_forward.1
$region0: #{convlstm2_forward.1}
  #allocation0 [shape = 'u32[]', space=smem, size = 0x4, offset = 0x4, fixed_abs, tag = 'smem constant byte address 0x4 - core index']
  #allocation1 [shape = 'u32[72,128]{1,0:T(1,128)}', space=vmem, size = 0x9000, scoped, tag = 'internal scratch']
  %s0 = inlined_call_operand.vmem [shape: f32[2,4,256], index: 0, kind: input, shape index: {}]
  %s1 = inlined_call_operand.vmem [shape: f32[2,8,256], index: 1, kind: input, shape index: {}]
  %s2 = inlined_call_operand.vmem [shape: f32[2,8,256], index: 2, kind: input, shape index: {}]
  %s3 = inlined_call_operand.vmem [shape: f32[2,8,256], index: 3, kind: input, shape index: {}]
  %s4 = inlined_call_operand.vmem [shape: f32[2,8,256], index: 4, kind: input, shape index: {}]
  %s5 = inlined_call_operand.vmem [shape: f32[9,32,4], index: 5, kind: input, shape index: {}]
  %s6 = inlined_call_operand.vmem [shape: f32[9,32,8], index: 6, kind: input, shape index: {}]
  %s7 = inlined_call_operand.vmem [shape: f32[32,1], index: 7, kind: input, shape index: {}]
  %s8 = inlined_call_operand.vmem [shape: f32[9,32,8], index: 8, kind: input, shape index: {}]
  %s9 = inlined_call_operand.vmem [shape: f32[9,32,8], index: 9, kind: input, shape index: {}]
  %s10 = inlined_call_operand.vmem [shape: f32[32,1], index: 10, kind: input, shape index: {}]
  %s11 = inlined_call_operand.vmem [shape: f32[2,8,256], index: 11, kind: output, shape index: {0}]
  %s12 = inlined_call_operand.vmem [shape: f32[2,8,256], index: 12, kind: output, shape index: {1}]
  %s13 = inlined_call_operand.vmem [shape: f32[2,8,256], index: 13, kind: output, shape index: {2}]
  %s14 = inlined_call_operand.vmem [shape: f32[2,8,256], index: 14, kind: output, shape index: {3}]
  %15 = xla_tuple %s11, %s12, %s13, %s14
  %s16 = sld [smem:[#allocation0]]
  $region101: #{convlstm2_forward.1} parent=0
    _
  %s18 = ssub.s32 1, %s16
  %s19 = scalar_select 0, %s18, %s16
  loop: start=0, step=1, limit=4
  $region2: #{convlstm2_forward.1} parent=0 // loop_pre_header
    _
  $region3: #{convlstm2_forward.1} parent=0 // loop_header
    %s21 = sphi 0, %s25
    %p22 = scmp.ge.s32.totalorder %s21, 4
    %s31 = sphi 0, %s33
    %s34 = sphi 0, %s31
    %s35 = sphi 0, %s34
    %s51 = sphi 0, %s35
    %s57 = sphi 0, %s59
    %s60 = sphi 0, %s57
    %s61 = sphi 0, %s60
    %s77 = sphi 0, %s61
    %s83 = sphi 0, %s85
    %s86 = sphi 0, %s83
    %s87 = sphi 0, %s86
    %s103 = sphi 0, %s87
    %s109 = sphi 0, %s111
    %s112 = sphi 0, %s109
    %s113 = sphi 0, %s112
    %s129 = sphi 0, %s113
    %s135 = sphi 0, %s137
    %s138 = sphi 0, %s135
    %s139 = sphi 0, %s138
    %s155 = sphi 0, %s139
    %s159 = sphi 0, %s159
    %s161 = sphi 0, %s159
    %s162 = sphi 0, %s161
    %s176 = sphi 0, %s162
    %s180 = sphi 0, %s180
    %s182 = sphi 0, %s180
    %s183 = sphi 0, %s182
    %s197 = sphi 0, %s183
    %s201 = sphi 0, %s201
    %s203 = sphi 0, %s201
    %s204 = sphi 0, %s203
    %s218 = sphi 0, %s204
    %s222 = sphi 0, %s222
    %s224 = sphi 0, %s222
    %s225 = sphi 0, %s224
    %s239 = sphi 0, %s225
    %s243 = sphi 0, %s243
    %s245 = sphi 0, %s243
    %s246 = sphi 0, %s245
    %s260 = sphi 0, %s246
    %s264 = sphi 0, %s264
    %s266 = sphi 0, %s264
    %s267 = sphi 0, %s266
    %s281 = sphi 0, %s267
    %s287 = sphi 0, %s289
    %s290 = sphi 0, %s287
    %s291 = sphi 0, %s290
    %s307 = sphi 0, %s291
    %s313 = sphi 0, %s315
    %s316 = sphi 0, %s313
    %s317 = sphi 0, %s316
    %s333 = sphi 0, %s317
    %s339 = sphi 0, %s341
    %s342 = sphi 0, %s339
    %s343 = sphi 0, %s342
    %s359 = sphi 0, %s343
    %s365 = sphi 0, %s367
    %s368 = sphi 0, %s365
    %s369 = sphi 0, %s368
    %s385 = sphi 0, %s369
  $region4: #{convlstm2_forward.1} parent=0 // loop_header_branch
    %24 = sbr.rel (%p22) target = $region8
  $region5: #{convlstm2_forward.1} parent=0 // loop_body
    %s26 = ssub.s32 %s21, 1
    %s27 = ssub.s32 %s21, 2
    %s28 = sadd.s32 %s21, 1
    %s29 = ssub.s32 %s21, %s28
    %p30 = scmp.eq.s32.totalorder %s29, 0
    %s32 = sadd.s32 %s31, 1
    %s33 = scalar_select %p30, %s31, %s32
    %p36 = pneg %p30
    %p37 = scmp.eq.s32.totalorder %s21, 1
    %p38 = por %p36, %p37
    %p39 = scmp.ne.s32.totalorder %s31, %s34
    %p40 = scmp.eq.s32.totalorder %s21, 0
    %p41 = por %p39, %p40
    %p42 = scmp.ne.s32.totalorder %s31, %s34
    %p43 = scmp.eq.s32.totalorder %s26, 1
    %p44 = por %p42, %p43
    %p45 = scmp.ne.s32.totalorder %s34, %s35
    %p46 = scmp.eq.s32.totalorder %s26, 0
    %p47 = por %p45, %p46
    %p48 = scmp.ne.s32.totalorder %s34, %s35
    %p49 = scmp.eq.s32.totalorder %s27, 1
    %p50 = por %p48, %p49
    %p52 = scmp.ne.s32.totalorder %s35, %s51
    %p53 = scmp.eq.s32.totalorder %s27, 0
    %p54 = por %p52, %p53
    %s55 = ssub.s32 %s21, %s28
    %p56 = scmp.eq.s32.totalorder %s55, 0
    %s58 = sadd.s32 %s57, 1
    %s59 = scalar_select %p56, %s57, %s58
    %p62 = pneg %p56
    %p63 = scmp.eq.s32.totalorder %s21, 1
    %p64 = por %p62, %p63
    %p65 = scmp.ne.s32.totalorder %s57, %s60
    %p66 = scmp.eq.s32.totalorder %s21, 0
    %p67 = por %p65, %p66
    %p68 = scmp.ne.s32.totalorder %s57, %s60
    %p69 = scmp.eq.s32.totalorder %s26, 1
    %p70 = por %p68, %p69
    %p71 = scmp.ne.s32.totalorder %s60, %s61
    %p72 = scmp.eq.s32.totalorder %s26, 0
    %p73 = por %p71, %p72
    %p74 = scmp.ne.s32.totalorder %s60, %s61
    %p75 = scmp.eq.s32.totalorder %s27, 1
    %p76 = por %p74, %p75
    %p78 = scmp.ne.s32.totalorder %s61, %s77
    %p79 = scmp.eq.s32.totalorder %s27, 0
    %p80 = por %p78, %p79
    %s81 = ssub.s32 %s21, %s28
    %p82 = scmp.eq.s32.totalorder %s81, 0
    %s84 = sadd.s32 %s83, 1
    %s85 = scalar_select %p82, %s83, %s84
    %p88 = pneg %p82
    %p89 = scmp.eq.s32.totalorder %s21, 1
    %p90 = por %p88, %p89
    %p91 = scmp.ne.s32.totalorder %s83, %s86
    %p92 = scmp.eq.s32.totalorder %s21, 0
    %p93 = por %p91, %p92
    %p94 = scmp.ne.s32.totalorder %s83, %s86
    %p95 = scmp.eq.s32.totalorder %s26, 1
    %p96 = por %p94, %p95
    %p97 = scmp.ne.s32.totalorder %s86, %s87
    %p98 = scmp.eq.s32.totalorder %s26, 0
    %p99 = por %p97, %p98
    %p100 = scmp.ne.s32.totalorder %s86, %s87
    %p101 = scmp.eq.s32.totalorder %s27, 1
    %p102 = por %p100, %p101
    %p104 = scmp.ne.s32.totalorder %s87, %s103
    %p105 = scmp.eq.s32.totalorder %s27, 0
    %p106 = por %p104, %p105
    %s107 = ssub.s32 %s21, %s28
    %p108 = scmp.eq.s32.totalorder %s107, 0
    %s110 = sadd.s32 %s109, 1
    %s111 = scalar_select %p108, %s109, %s110
    %p114 = pneg %p108
    %p115 = scmp.eq.s32.totalorder %s21, 1
    %p116 = por %p114, %p115
    %p117 = scmp.ne.s32.totalorder %s109, %s112
    %p118 = scmp.eq.s32.totalorder %s21, 0
    %p119 = por %p117, %p118
    %p120 = scmp.ne.s32.totalorder %s109, %s112
    %p121 = scmp.eq.s32.totalorder %s26, 1
    %p122 = por %p120, %p121
    %p123 = scmp.ne.s32.totalorder %s112, %s113
    %p124 = scmp.eq.s32.totalorder %s26, 0
    %p125 = por %p123, %p124
    %p126 = scmp.ne.s32.totalorder %s112, %s113
    %p127 = scmp.eq.s32.totalorder %s27, 1
    %p128 = por %p126, %p127
    %p130 = scmp.ne.s32.totalorder %s113, %s129
    %p131 = scmp.eq.s32.totalorder %s27, 0
    %p132 = por %p130, %p131
    %s133 = ssub.s32 %s21, %s28
    %p134 = scmp.eq.s32.totalorder %s133, 0
    %s136 = sadd.s32 %s135, 1
    %s137 = scalar_select %p134, %s135, %s136
    %p140 = pneg %p134
    %p141 = scmp.eq.s32.totalorder %s21, 1
    %p142 = por %p140, %p141
    %p143 = scmp.ne.s32.totalorder %s135, %s138
    %p144 = scmp.eq.s32.totalorder %s21, 0
    %p145 = por %p143, %p144
    %p146 = scmp.ne.s32.totalorder %s135, %s138
    %p147 = scmp.eq.s32.totalorder %s26, 1
    %p148 = por %p146, %p147
    %p149 = scmp.ne.s32.totalorder %s138, %s139
    %p150 = scmp.eq.s32.totalorder %s26, 0
    %p151 = por %p149, %p150
    %p152 = scmp.ne.s32.totalorder %s138, %s139
    %p153 = scmp.eq.s32.totalorder %s27, 1
    %p154 = por %p152, %p153
    %p156 = scmp.ne.s32.totalorder %s139, %s155
    %p157 = scmp.eq.s32.totalorder %s27, 0
    %p158 = por %p156, %p157
    %s160 = sadd.s32 %s159, 1
    %p163 = scmp.eq.s32.totalorder %s21, 1
    %p164 = scmp.ne.s32.totalorder %s159, %s161
    %p165 = scmp.eq.s32.totalorder %s21, 0
    %p166 = por %p164, %p165
    %p167 = scmp.ne.s32.totalorder %s159, %s161
    %p168 = scmp.eq.s32.totalorder %s26, 1
    %p169 = por %p167, %p168
    %p170 = scmp.ne.s32.totalorder %s161, %s162
    %p171 = scmp.eq.s32.totalorder %s26, 0
    %p172 = por %p170, %p171
    %p173 = scmp.ne.s32.totalorder %s161, %s162
    %p174 = scmp.eq.s32.totalorder %s27, 1
    %p175 = por %p173, %p174
    %p177 = scmp.ne.s32.totalorder %s162, %s176
    %p178 = scmp.eq.s32.totalorder %s27, 0
    %p179 = por %p177, %p178
    %s181 = sadd.s32 %s180, 1
    %p184 = scmp.eq.s32.totalorder %s21, 1
    %p185 = scmp.ne.s32.totalorder %s180, %s182
    %p186 = scmp.eq.s32.totalorder %s21, 0
    %p187 = por %p185, %p186
    %p188 = scmp.ne.s32.totalorder %s180, %s182
    %p189 = scmp.eq.s32.totalorder %s26, 1
    %p190 = por %p188, %p189
    %p191 = scmp.ne.s32.totalorder %s182, %s183
    %p192 = scmp.eq.s32.totalorder %s26, 0
    %p193 = por %p191, %p192
    %p194 = scmp.ne.s32.totalorder %s182, %s183
    %p195 = scmp.eq.s32.totalorder %s27, 1
    %p196 = por %p194, %p195
    %p198 = scmp.ne.s32.totalorder %s183, %s197
    %p199 = scmp.eq.s32.totalorder %s27, 0
    %p200 = por %p198, %p199
    %s202 = sadd.s32 %s201, 1
    %p205 = scmp.eq.s32.totalorder %s21, 1
    %p206 = scmp.ne.s32.totalorder %s201, %s203
    %p207 = scmp.eq.s32.totalorder %s21, 0
    %p208 = por %p206, %p207
    %p209 = scmp.ne.s32.totalorder %s201, %s203
    %p210 = scmp.eq.s32.totalorder %s26, 1
    %p211 = por %p209, %p210
    %p212 = scmp.ne.s32.totalorder %s203, %s204
    %p213 = scmp.eq.s32.totalorder %s26, 0
    %p214 = por %p212, %p213
    %p215 = scmp.ne.s32.totalorder %s203, %s204
    %p216 = scmp.eq.s32.totalorder %s27, 1
    %p217 = por %p215, %p216
    %p219 = scmp.ne.s32.totalorder %s204, %s218
    %p220 = scmp.eq.s32.totalorder %s27, 0
    %p221 = por %p219, %p220
    %s223 = sadd.s32 %s222, 1
    %p226 = scmp.eq.s32.totalorder %s21, 1
    %p227 = scmp.ne.s32.totalorder %s222, %s224
    %p228 = scmp.eq.s32.totalorder %s21, 0
    %p229 = por %p227, %p228
    %p230 = scmp.ne.s32.totalorder %s222, %s224
    %p231 = scmp.eq.s32.totalorder %s26, 1
    %p232 = por %p230, %p231
    %p233 = scmp.ne.s32.totalorder %s224, %s225
    %p234 = scmp.eq.s32.totalorder %s26, 0
    %p235 = por %p233, %p234
    %p236 = scmp.ne.s32.totalorder %s224, %s225
    %p237 = scmp.eq.s32.totalorder %s27, 1
    %p238 = por %p236, %p237
    %p240 = scmp.ne.s32.totalorder %s225, %s239
    %p241 = scmp.eq.s32.totalorder %s27, 0
    %p242 = por %p240, %p241
    %s244 = sadd.s32 %s243, 1
    %p247 = scmp.eq.s32.totalorder %s21, 1
    %p248 = scmp.ne.s32.totalorder %s243, %s245
    %p249 = scmp.eq.s32.totalorder %s21, 0
    %p250 = por %p248, %p249
    %p251 = scmp.ne.s32.totalorder %s243, %s245
    %p252 = scmp.eq.s32.totalorder %s26, 1
    %p253 = por %p251, %p252
    %p254 = scmp.ne.s32.totalorder %s245, %s246
    %p255 = scmp.eq.s32.totalorder %s26, 0
    %p256 = por %p254, %p255
    %p257 = scmp.ne.s32.totalorder %s245, %s246
    %p258 = scmp.eq.s32.totalorder %s27, 1
    %p259 = por %p257, %p258
    %p261 = scmp.ne.s32.totalorder %s246, %s260
    %p262 = scmp.eq.s32.totalorder %s27, 0
    %p263 = por %p261, %p262
    %s265 = sadd.s32 %s264, 1
    %p268 = scmp.eq.s32.totalorder %s21, 1
    %p269 = scmp.ne.s32.totalorder %s264, %s266
    %p270 = scmp.eq.s32.totalorder %s21, 0
    %p271 = por %p269, %p270
    %p272 = scmp.ne.s32.totalorder %s264, %s266
    %p273 = scmp.eq.s32.totalorder %s26, 1
    %p274 = por %p272, %p273
    %p275 = scmp.ne.s32.totalorder %s266, %s267
    %p276 = scmp.eq.s32.totalorder %s26, 0
    %p277 = por %p275, %p276
    %p278 = scmp.ne.s32.totalorder %s266, %s267
    %p279 = scmp.eq.s32.totalorder %s27, 1
    %p280 = por %p278, %p279
    %p282 = scmp.ne.s32.totalorder %s267, %s281
    %p283 = scmp.eq.s32.totalorder %s27, 0
    %p284 = por %p282, %p283
    %s285 = ssub.s32 %s21, %s28
    %p286 = scmp.eq.s32.totalorder %s285, 0
    %s288 = sadd.s32 %s287, 1
    %s289 = scalar_select %p286, %s287, %s288
    %p292 = pneg %p286
    %p293 = scmp.eq.s32.totalorder %s21, 1
    %p294 = por %p292, %p293
    %p295 = scmp.ne.s32.totalorder %s287, %s290
    %p296 = scmp.eq.s32.totalorder %s21, 0
    %p297 = por %p295, %p296
    %p298 = scmp.ne.s32.totalorder %s287, %s290
    %p299 = scmp.eq.s32.totalorder %s26, 1
    %p300 = por %p298, %p299
    %p301 = scmp.ne.s32.totalorder %s290, %s291
    %p302 = scmp.eq.s32.totalorder %s26, 0
    %p303 = por %p301, %p302
    %p304 = scmp.ne.s32.totalorder %s290, %s291
    %p305 = scmp.eq.s32.totalorder %s27, 1
    %p306 = por %p304, %p305
    %p308 = scmp.ne.s32.totalorder %s291, %s307
    %p309 = scmp.eq.s32.totalorder %s27, 0
    %p310 = por %p308, %p309
    %s311 = ssub.s32 %s21, %s28
    %p312 = scmp.eq.s32.totalorder %s311, 0
    %s314 = sadd.s32 %s313, 1
    %s315 = scalar_select %p312, %s313, %s314
    %p318 = pneg %p312
    %p319 = scmp.eq.s32.totalorder %s21, 1
    %p320 = por %p318, %p319
    %p321 = scmp.ne.s32.totalorder %s313, %s316
    %p322 = scmp.eq.s32.totalorder %s21, 0
    %p323 = por %p321, %p322
    %p324 = scmp.ne.s32.totalorder %s313, %s316
    %p325 = scmp.eq.s32.totalorder %s26, 1
    %p326 = por %p324, %p325
    %p327 = scmp.ne.s32.totalorder %s316, %s317
    %p328 = scmp.eq.s32.totalorder %s26, 0
    %p329 = por %p327, %p328
    %p330 = scmp.ne.s32.totalorder %s316, %s317
    %p331 = scmp.eq.s32.totalorder %s27, 1
    %p332 = por %p330, %p331
    %p334 = scmp.ne.s32.totalorder %s317, %s333
    %p335 = scmp.eq.s32.totalorder %s27, 0
    %p336 = por %p334, %p335
    %s337 = ssub.s32 %s21, %s28
    %p338 = scmp.eq.s32.totalorder %s337, 0
    %s340 = sadd.s32 %s339, 1
    %s341 = scalar_select %p338, %s339, %s340
    %p344 = pneg %p338
    %p345 = scmp.eq.s32.totalorder %s21, 1
    %p346 = por %p344, %p345
    %p347 = scmp.ne.s32.totalorder %s339, %s342
    %p348 = scmp.eq.s32.totalorder %s21, 0
    %p349 = por %p347, %p348
    %p350 = scmp.ne.s32.totalorder %s339, %s342
    %p351 = scmp.eq.s32.totalorder %s26, 1
    %p352 = por %p350, %p351
    %p353 = scmp.ne.s32.totalorder %s342, %s343
    %p354 = scmp.eq.s32.totalorder %s26, 0
    %p355 = por %p353, %p354
    %p356 = scmp.ne.s32.totalorder %s342, %s343
    %p357 = scmp.eq.s32.totalorder %s27, 1
    %p358 = por %p356, %p357
    %p360 = scmp.ne.s32.totalorder %s343, %s359
    %p361 = scmp.eq.s32.totalorder %s27, 0
    %p362 = por %p360, %p361
    %s363 = ssub.s32 %s21, %s28
    %p364 = scmp.eq.s32.totalorder %s363, 0
    %s366 = sadd.s32 %s365, 1
    %s367 = scalar_select %p364, %s365, %s366
    %p370 = pneg %p364
    %p371 = scmp.eq.s32.totalorder %s21, 1
    %p372 = por %p370, %p371
    %p373 = scmp.ne.s32.totalorder %s365, %s368
    %p374 = scmp.eq.s32.totalorder %s21, 0
    %p375 = por %p373, %p374
    %p376 = scmp.ne.s32.totalorder %s365, %s368
    %p377 = scmp.eq.s32.totalorder %s26, 1
    %p378 = por %p376, %p377
    %p379 = scmp.ne.s32.totalorder %s368, %s369
    %p380 = scmp.eq.s32.totalorder %s26, 0
    %p381 = por %p379, %p380
    %p382 = scmp.ne.s32.totalorder %s368, %s369
    %p383 = scmp.eq.s32.totalorder %s27, 1
    %p384 = por %p382, %p383
    %p386 = scmp.ne.s32.totalorder %s369, %s385
    %p387 = scmp.eq.s32.totalorder %s27, 0
    %p388 = por %p386, %p387
    %p389 = scmp.le.s32.totalorder 1, %s21
    %p390 = scmp.lt.s32.totalorder %s21, 3
    %p391 = pnand %p389, %p390
    %p392 = pneg %p391
    // Predicated region
    $region9: #{convlstm2_forward.1} parent=5 // pred_check
      _
    $region10: #{convlstm2_forward.1} parent=5 // pred_check_branch
      %394 = sbr.rel (%p391) target = $region12
    $region11: #{convlstm2_forward.1} parent=5 // pred_region
      %s395 = ssub.s32 %s21, 1
      // Predicated region
      $region13: #{convlstm2_forward.1} parent=11 // pred_check
        %p396 = pneg %p172
      $region14: #{convlstm2_forward.1} parent=11 // pred_check_branch
        %398 = sbr.rel (%p396) target = $region16
      $region15: #{convlstm2_forward.1} parent=11 // pred_region
        _
      $region16: #{convlstm2_forward.1} parent=11 // pred_fallthru
        _
      // Predicated region
      $region17: #{convlstm2_forward.1} parent=11 // pred_check
        %p399 = pneg %p193
      $region18: #{convlstm2_forward.1} parent=11 // pred_check_branch
        %401 = sbr.rel (%p399) target = $region20
      $region19: #{convlstm2_forward.1} parent=11 // pred_region
        _
      $region20: #{convlstm2_forward.1} parent=11 // pred_fallthru
        _
      // Predicated region
      $region21: #{convlstm2_forward.1} parent=11 // pred_check
        %p402 = pneg %p214
      $region22: #{convlstm2_forward.1} parent=11 // pred_check_branch
        %404 = sbr.rel (%p402) target = $region24
      $region23: #{convlstm2_forward.1} parent=11 // pred_region
        _
      $region24: #{convlstm2_forward.1} parent=11 // pred_fallthru
        _
      // Predicated region
      $region25: #{convlstm2_forward.1} parent=11 // pred_check
        %p405 = pneg %p235
      $region26: #{convlstm2_forward.1} parent=11 // pred_check_branch
        %407 = sbr.rel (%p405) target = $region28
      $region27: #{convlstm2_forward.1} parent=11 // pred_region
        _
      $region28: #{convlstm2_forward.1} parent=11 // pred_fallthru
        _
      // Predicated region
      $region29: #{convlstm2_forward.1} parent=11 // pred_check
        %p408 = pneg %p256
      $region30: #{convlstm2_forward.1} parent=11 // pred_check_branch
        %410 = sbr.rel (%p408) target = $region32
      $region31: #{convlstm2_forward.1} parent=11 // pred_region
        _
      $region32: #{convlstm2_forward.1} parent=11 // pred_fallthru
        _
      // Predicated region
      $region33: #{convlstm2_forward.1} parent=11 // pred_check
        %p411 = pneg %p277
      $region34: #{convlstm2_forward.1} parent=11 // pred_check_branch
        %413 = sbr.rel (%p411) target = $region36
      $region35: #{convlstm2_forward.1} parent=11 // pred_region
        _
      $region36: #{convlstm2_forward.1} parent=11 // pred_fallthru
        _
    $region12: #{convlstm2_forward.1} parent=5 // pred_fallthru
      _
    %p414 = scmp.lt.s32.totalorder %s21, 2
    // Predicated region
    $region37: #{convlstm2_forward.1} parent=5 // pred_check
      %p415 = pneg %p414
    $region38: #{convlstm2_forward.1} parent=5 // pred_check_branch
      %417 = sbr.rel (%p415) target = $region40
    $region39: #{convlstm2_forward.1} parent=5 // pred_region
      // Predicated region
      $region41: #{convlstm2_forward.1} parent=39 // pred_check
        %p418 = pneg %p41
      $region42: #{convlstm2_forward.1} parent=39 // pred_check_branch
        %420 = sbr.rel (%p418) target = $region44
      $region43: #{convlstm2_forward.1} parent=39 // pred_region
        %p421 = scmp.lt.s32.totalorder %s21, 1
        %s422 = scalar_select %p421, %s21, 1
        %s423 = smul.addr %s422, 2
        %s424 = smul.addr %s423, 4
        %s425 = scalar_lea.vmem %s0, %s424
      $region44: #{convlstm2_forward.1} parent=39 // pred_fallthru
        _
      // Predicated region
      $region45: #{convlstm2_forward.1} parent=39 // pred_check
        %p426 = pneg %p67
      $region46: #{convlstm2_forward.1} parent=39 // pred_check_branch
        %428 = sbr.rel (%p426) target = $region48
      $region47: #{convlstm2_forward.1} parent=39 // pred_region
        %p429 = scmp.lt.s32.totalorder %s21, 1
        %s430 = scalar_select %p429, %s21, 1
        %s431 = smul.addr %s430, 2
        %s432 = smul.addr %s431, 8
        %s433 = scalar_lea.vmem %s1, %s432
      $region48: #{convlstm2_forward.1} parent=39 // pred_fallthru
        _
      // Predicated region
      $region49: #{convlstm2_forward.1} parent=39 // pred_check
        %p434 = pneg %p93
      $region50: #{convlstm2_forward.1} parent=39 // pred_check_branch
        %436 = sbr.rel (%p434) target = $region52
      $region51: #{convlstm2_forward.1} parent=39 // pred_region
        %p437 = scmp.lt.s32.totalorder %s21, 1
        %s438 = scalar_select %p437, %s21, 1
        %s439 = smul.addr %s438, 2
        %s440 = smul.addr %s439, 8
        %s441 = scalar_lea.vmem %s2, %s440
      $region52: #{convlstm2_forward.1} parent=39 // pred_fallthru
        _
      // Predicated region
      $region53: #{convlstm2_forward.1} parent=39 // pred_check
        %p442 = pneg %p119
      $region54: #{convlstm2_forward.1} parent=39 // pred_check_branch
        %444 = sbr.rel (%p442) target = $region56
      $region55: #{convlstm2_forward.1} parent=39 // pred_region
        %p445 = scmp.lt.s32.totalorder %s21, 1
        %s446 = scalar_select %p445, %s21, 1
        %s447 = smul.addr %s446, 2
        %s448 = smul.addr %s447, 8
        %s449 = scalar_lea.vmem %s3, %s448
      $region56: #{convlstm2_forward.1} parent=39 // pred_fallthru
        _
      // Predicated region
      $region57: #{convlstm2_forward.1} parent=39 // pred_check
        %p450 = pneg %p145
      $region58: #{convlstm2_forward.1} parent=39 // pred_check_branch
        %452 = sbr.rel (%p450) target = $region60
      $region59: #{convlstm2_forward.1} parent=39 // pred_region
        %p453 = scmp.lt.s32.totalorder %s21, 1
        %s454 = scalar_select %p453, %s21, 1
        %s455 = smul.addr %s454, 2
        %s456 = smul.addr %s455, 8
        %s457 = scalar_lea.vmem %s4, %s456
      $region60: #{convlstm2_forward.1} parent=39 // pred_fallthru
        _
    $region40: #{convlstm2_forward.1} parent=5 // pred_fallthru
      _
    %p458 = scmp.le.s32.totalorder 1, %s21
    %p459 = scmp.lt.s32.totalorder %s21, 3
    %p460 = pnand %p458, %p459
    %p461 = pneg %p460
    // Predicated region
    $region61: #{convlstm2_forward.1} parent=5 // pred_check
      _
    $region62: #{convlstm2_forward.1} parent=5 // pred_check_branch
      %463 = sbr.rel (%p460) target = $region64
    $region63: #{convlstm2_forward.1} parent=5 // pred_region
      %s464 = ssub.s32 %s21, 1
      %p465 = scmp.lt.s32.totalorder %s26, 1
      %s466 = scalar_select %p465, %s26, 1
      %s467 = smul.addr %s466, 2
      %s468 = smul.addr %s467, 4
      %s469 = scalar_lea.vmem %s0, %s468
      %p470 = pneg %p47
      %p471 = pneg %p44
      %p472 = scmp.lt.s32.totalorder %s26, 1
      %s473 = scalar_select %p472, %s26, 1
      %s474 = smul.addr %s473, 2
      %s475 = smul.addr %s474, 8
      %s476 = scalar_lea.vmem %s1, %s475
      %p477 = pneg %p73
      %p478 = pneg %p70
      %p479 = scmp.lt.s32.totalorder %s26, 1
      %s480 = scalar_select %p479, %s26, 1
      %s481 = smul.addr %s480, 2
      %s482 = smul.addr %s481, 8
      %s483 = scalar_lea.vmem %s2, %s482
      %p484 = pneg %p99
      %p485 = pneg %p96
      %p486 = scmp.lt.s32.totalorder %s26, 1
      %s487 = scalar_select %p486, %s26, 1
      %s488 = smul.addr %s487, 2
      %s489 = smul.addr %s488, 8
      %s490 = scalar_lea.vmem %s3, %s489
      %p491 = pneg %p125
      %p492 = pneg %p122
      %p493 = scmp.lt.s32.totalorder %s26, 1
      %s494 = scalar_select %p493, %s26, 1
      %s495 = smul.addr %s494, 2
      %s496 = smul.addr %s495, 8
      %s497 = scalar_lea.vmem %s4, %s496
      %p498 = pneg %p151
      %p499 = pneg %p148
      %p500 = pneg %p172
      %p501 = pneg %p169
      %p502 = pneg %p193
      %p503 = pneg %p190
      %p504 = pneg %p214
      %p505 = pneg %p211
      %p506 = pneg %p235
      %p507 = pneg %p232
      %p508 = pneg %p256
      %p509 = pneg %p253
      %p510 = pneg %p277
      %p511 = pneg %p274
      %p512 = pneg %p303
      %p513 = pneg %p300
      %p514 = scmp.lt.s32.totalorder %s26, 1
      %s515 = scalar_select %p514, %s26, 1
      %s516 = smul.addr %s515, 2
      %s517 = smul.addr %s516, 8
      %s518 = scalar_lea.vmem %s11, %s517
      %p519 = pneg %p329
      %p520 = pneg %p326
      %p521 = scmp.lt.s32.totalorder %s26, 1
      %s522 = scalar_select %p521, %s26, 1
      %s523 = smul.addr %s522, 2
      %s524 = smul.addr %s523, 8
      %s525 = scalar_lea.vmem %s12, %s524
      %p526 = pneg %p355
      %p527 = pneg %p352
      %p528 = scmp.lt.s32.totalorder %s26, 1
      %s529 = scalar_select %p528, %s26, 1
      %s530 = smul.addr %s529, 2
      %s531 = smul.addr %s530, 8
      %s532 = scalar_lea.vmem %s13, %s531
      %p533 = pneg %p381
      %p534 = pneg %p378
      %p535 = scmp.lt.s32.totalorder %s26, 1
      %s536 = scalar_select %p535, %s26, 1
      %s537 = smul.addr %s536, 2
      %s538 = smul.addr %s537, 8
      %s539 = scalar_lea.vmem %s14, %s538
      %p540 = scmp.lt.s32.totalorder %s26, 1
      %s541 = scalar_select %p540, %s26, 1
      %s542 = smul.addr %s541, 2
      %s543 = smul.addr %s542, 4
      %s544 = scalar_lea.vmem %s0, %s543
      %p545 = scmp.lt.s32.totalorder %s26, 1
      %s546 = scalar_select %p545, %s26, 1
      %s547 = smul.addr %s546, 2
      %s548 = smul.addr %s547, 8
      %s549 = scalar_lea.vmem %s1, %s548
      %p550 = scmp.lt.s32.totalorder %s26, 1
      %s551 = scalar_select %p550, %s26, 1
      %s552 = smul.addr %s551, 2
      %s553 = smul.addr %s552, 8
      %s554 = scalar_lea.vmem %s2, %s553
      %p555 = scmp.lt.s32.totalorder %s26, 1
      %s556 = scalar_select %p555, %s26, 1
      %s557 = smul.addr %s556, 2
      %s558 = smul.addr %s557, 8
      %s559 = scalar_lea.vmem %s3, %s558
      %p560 = scmp.lt.s32.totalorder %s26, 1
      %s561 = scalar_select %p560, %s26, 1
      %s562 = smul.addr %s561, 2
      %s563 = smul.addr %s562, 8
      %s564 = scalar_lea.vmem %s4, %s563
      %p565 = scmp.lt.s32.totalorder %s26, 1
      %s566 = scalar_select %p565, %s26, 1
      %s567 = smul.addr %s566, 2
      %s568 = smul.addr %s567, 8
      %s569 = scalar_lea.vmem %s11, %s568
      %p570 = scmp.lt.s32.totalorder %s26, 1
      %s571 = scalar_select %p570, %s26, 1
      %s572 = smul.addr %s571, 2
      %s573 = smul.addr %s572, 8
      %s574 = scalar_lea.vmem %s12, %s573
      %p575 = scmp.lt.s32.totalorder %s26, 1
      %s576 = scalar_select %p575, %s26, 1
      %s577 = smul.addr %s576, 2
      %s578 = smul.addr %s577, 8
      %s579 = scalar_lea.vmem %s13, %s578
      %p580 = scmp.lt.s32.totalorder %s26, 1
      %s581 = scalar_select %p580, %s26, 1
      %s582 = smul.addr %s581, 2
      %s583 = smul.addr %s582, 8
      %s584 = scalar_lea.vmem %s14, %s583
      %v585 = vlaneseq
      %v586 = vand.u32 %v585, 127
      %v587 = vadd.s32 %v586, 128
      %vm588 = vcmp.lt.s32.totalorder %v586, 0
      %v589 = vsub.s32 0, %v586
      %v590 = vsel %vm588, %v589, %v586
      %v591 = vshrl.u32 %v590, 4
      %v592 = vand.u32 %v590, 15
      %v593 = vsub.s32 0, %v592
      %v594 = vsel %vm588, %v593, %v592
      %vm595 = vcmp.lt.s32.totalorder %v587, 0
      %v596 = vsub.s32 0, %v587
      %v597 = vsel %vm595, %v596, %v587
      %v598 = vshrl.u32 %v597, 4
      %v599 = vand.u32 %v597, 15
      %v600 = vsub.s32 0, %v599
      %v601 = vsel %vm595, %v600, %v599
      %vm602 = vcmp.ne.s32.totalorder %v594, 0
      %vm603 = vcmp.ne.s32.totalorder %v601, 0
      %vm604 = vcmp.lt.s32.totalorder %v594, 0
      %vm605 = vcmp.lt.s32.totalorder %v601, 0
      %vm606 = vmand %vm604, %vm602
      %vm607 = vmand %vm605, %vm603
      %v608 = vadd.s32 %v594, 16
      %v609 = vadd.s32 %v601, 16
      %v610 = vsel %vm606, %v608, %v594
      %v611 = vsel %vm607, %v609, %v601
      %v612 = vld [vmem:[%s544] sm:$0xff]
      %v613 = vld [vmem:[%s549] sm:$0xff]
      %v614 = vld [vmem:[%s549 + $0x8] sm:$0xff]
      %v615 = vld [vmem:[%s554] sm:$0xff]
      %v616 = vld [vmem:[%s554 + $0x8] sm:$0xff]
      %v617 = vld [vmem:[%s5] sm:$0xff]
      %v618 = vld [vmem:[%s5 + $0x8] sm:$0xff]
      %v619 = vld [vmem:[%s5 + $0x10] sm:$0xff]
      %v620 = vld [vmem:[%s5 + $0x18] sm:$0xff]
      %622 = vst [vmem:[#allocation1] ss:$2 sm:$0xff] %v612
      %v623 = vld.sshfl [vmem:[#allocation1] sm:$0xff pattern:$0x75316420]
      %v624 = vld.sshfl [vmem:[#allocation1 + $0x8] sm:$0xff pattern:$0x75316420]
      %625 = vrot.lane.b32.xlu0 %v623, 17
      %v626 = vpop.permute.xlu0 %625
      %627 = vrot.lane.b32.xlu0 %v624, 17
      %v628 = vpop.permute.xlu0 %627
      %vm629 = vcmask 138240
      %v630 = vsel %vm629, %v626, %v628
      %v633 = vsel %vm629, 0.0, %v626
      %vm634 = vcmp.ge.s32.totalorder %v610, 1
      %vm635 = vcmp.ge.s32.totalorder %v611, 1
      %v636 = vsel %vm634, 1, 0
      %v637 = vsel %vm635, 1, 0
      %vm638 = vcmp.eq.s32.totalorder %v636, 1
      %vm639 = vcmp.eq.s32.totalorder %v637, 1
      %v640 = vsel %vm638, %v633, 0.0
      %v641 = vsel %vm639, %v630, 0.0
      %v642 = vld [vmem:[%s6] sm:$0xff]
      %v643 = vld [vmem:[%s6 + $0x8] sm:$0xff]
      %v644 = vld [vmem:[%s6 + $0x10] sm:$0xff]
      %v645 = vld [vmem:[%s6 + $0x18] sm:$0xff]
      %648 = vrot.lane.b32.xlu0 %v613, 17
      %v649 = vpop.permute.xlu0 %648
      %650 = vrot.lane.b32.xlu0 %v614, 17
      %v651 = vpop.permute.xlu0 %650
      %v652 = vsel %vm629, %v649, %v651
      %v655 = vsel %vm629, 0.0, %v649
      %v656 = vsel %vm638, %v655, 0.0
      %v657 = vsel %vm639, %v652, 0.0
      %vm658 = vcmask 64512
      %v660 = vsel %vm658, %v642, 0
      %v663 = vsel %vm658, %v643, 0
      %v666 = vsel %vm658, %v644, 0
      %v669 = vsel %vm658, %v645, 0
      %671 = vmatpush.msra.mxu0 0.0
      %672 = vmatpush.msra.mxu0 0.0
      %673 = vmatpush.msra.mxu0 0.0
      %674 = vmatpush.msra.mxu0 0.0
      %675 = vmatpush.msra.mxu0 0.0
      %676 = vmatpush.msra.mxu0 0.0
      %677 = vmatpush.msra.mxu0 0.0
      %678 = vmatpush.msra.mxu0 0.0
      %679 = vmatpush.msra.mxu0 0.0
      %680 = vmatpush.msra.mxu0 0.0
      %681 = vmatpush.msra.mxu0 0.0
      %682 = vmatpush.msra.mxu0 0.0
      %683 = vmatpush.msra.mxu0 0.0
      %684 = vmatpush.msra.mxu0 0.0
      %685 = vmatpush.msra.mxu0 0.0
      %686 = vmatpush.msra.mxu0 %v656
      %687 = vmatmul.f32.gmra.mxu0 %v660
      %v688 = vpop.f32.mrf.mxu0
      %v689 = vadd.f32 0.0, %v688
      %690 = vmatmul.f32.gmra.mxu0 %v663
      %v691 = vpop.f32.mrf.mxu0
      %v692 = vadd.f32 0.0, %v691
      %693 = vmatmul.f32.gmra.mxu0 %v666
      %v694 = vpop.f32.mrf.mxu0
      %v695 = vadd.f32 0.0, %v694
      %696 = vmatmul.f32.gmra.mxu0 %v669
      %v697 = vpop.f32.mrf.mxu0
      %v698 = vadd.f32 0.0, %v697
      %699 = vdwg.mxu0
      %700 = vmatpush.msra.mxu0 0.0
      %701 = vmatpush.msra.mxu0 0.0
      %702 = vmatpush.msra.mxu0 0.0
      %703 = vmatpush.msra.mxu0 0.0
      %704 = vmatpush.msra.mxu0 0.0
      %705 = vmatpush.msra.mxu0 0.0
      %706 = vmatpush.msra.mxu0 0.0
      %707 = vmatpush.msra.mxu0 0.0
      %708 = vmatpush.msra.mxu0 0.0
      %709 = vmatpush.msra.mxu0 0.0
      %710 = vmatpush.msra.mxu0 0.0
      %711 = vmatpush.msra.mxu0 0.0
      %712 = vmatpush.msra.mxu0 0.0
      %713 = vmatpush.msra.mxu0 0.0
      %714 = vmatpush.msra.mxu0 0.0
      %715 = vmatpush.msra.mxu0 %v657
      %716 = vmatmul.f32.gmra.mxu0 %v660
      %v717 = vpop.f32.mrf.mxu0
      %v718 = vadd.f32 0.0, %v717
      %719 = vmatmul.f32.gmra.mxu0 %v663
      %v720 = vpop.f32.mrf.mxu0
      %v721 = vadd.f32 0.0, %v720
      %722 = vmatmul.f32.gmra.mxu0 %v666
      %v723 = vpop.f32.mrf.mxu0
      %v724 = vadd.f32 0.0, %v723
      %725 = vmatmul.f32.gmra.mxu0 %v669
      %v726 = vpop.f32.mrf.mxu0
      %v727 = vadd.f32 0.0, %v726
      %728 = vdwg.mxu0
      %vm729 = vcmask 31744
      %v731 = vsel %vm729, %v617, 0
      %v734 = vsel %vm729, %v618, 0
      %v737 = vsel %vm729, %v619, 0
      %v740 = vsel %vm729, %v620, 0
      %vm742 = vcmask 1043456
      %v744 = vsel %vm742, %v640, 0
      %v747 = vsel %vm742, %v641, 0
      %749 = vmatpush.msra.mxu0 0.0
      %750 = vmatpush.msra.mxu0 0.0
      %751 = vmatpush.msra.mxu0 0.0
      %752 = vmatpush.msra.mxu0 0.0
      %753 = vmatpush.msra.mxu0 0.0
      %754 = vmatpush.msra.mxu0 0.0
      %755 = vmatpush.msra.mxu0 0.0
      %756 = vmatpush.msra.mxu0 0.0
      %757 = vmatpush.msra.mxu0 0.0
      %758 = vmatpush.msra.mxu0 0.0
      %759 = vmatpush.msra.mxu0 0.0
      %760 = vmatpush.msra.mxu0 0.0
      %761 = vmatpush.msra.mxu0 0.0
      %762 = vmatpush.msra.mxu0 0.0
      %763 = vmatpush.msra.mxu0 0.0
      %764 = vmatpush.msra.mxu0 %v744
      %765 = vmatmul.f32.gmra.mxu0 %v731
      %v766 = vpop.f32.mrf.mxu0
      %v767 = vadd.f32 %v689, %v766
      %768 = vmatmul.f32.gmra.mxu0 %v734
      %v769 = vpop.f32.mrf.mxu0
      %v770 = vadd.f32 %v692, %v769
      %771 = vmatmul.f32.gmra.mxu0 %v737
      %v772 = vpop.f32.mrf.mxu0
      %v773 = vadd.f32 %v695, %v772
      %774 = vmatmul.f32.gmra.mxu0 %v740
      %v775 = vpop.f32.mrf.mxu0
      %v776 = vadd.f32 %v698, %v775
      %777 = vdwg.mxu0
      %778 = vmatpush.msra.mxu0 0.0
      %779 = vmatpush.msra.mxu0 0.0
      %780 = vmatpush.msra.mxu0 0.0
      %781 = vmatpush.msra.mxu0 0.0
      %782 = vmatpush.msra.mxu0 0.0
      %783 = vmatpush.msra.mxu0 0.0
      %784 = vmatpush.msra.mxu0 0.0
      %785 = vmatpush.msra.mxu0 0.0
      %786 = vmatpush.msra.mxu0 0.0
      %787 = vmatpush.msra.mxu0 0.0
      %788 = vmatpush.msra.mxu0 0.0
      %789 = vmatpush.msra.mxu0 0.0
      %790 = vmatpush.msra.mxu0 0.0
      %791 = vmatpush.msra.mxu0 0.0
      %792 = vmatpush.msra.mxu0 0.0
      %793 = vmatpush.msra.mxu0 %v747
      %794 = vmatmul.f32.gmra.mxu0 %v731
      %v795 = vpop.f32.mrf.mxu0
      %v796 = vadd.f32 %v718, %v795
      %797 = vmatmul.f32.gmra.mxu0 %v734
      %v798 = vpop.f32.mrf.mxu0
      %v799 = vadd.f32 %v721, %v798
      %800 = vmatmul.f32.gmra.mxu0 %v737
      %v801 = vpop.f32.mrf.mxu0
      %v802 = vadd.f32 %v724, %v801
      %803 = vmatmul.f32.gmra.mxu0 %v740
      %v804 = vpop.f32.mrf.mxu0
      %v805 = vadd.f32 %v727, %v804
      %806 = vdwg.mxu0
      %s807 = scalar_lea.vmem %s5, 32
      %v808 = vld [vmem:[%s807] sm:$0xff]
      %v809 = vld [vmem:[%s807 + $0x8] sm:$0xff]
      %v810 = vld [vmem:[%s807 + $0x10] sm:$0xff]
      %v811 = vld [vmem:[%s807 + $0x18] sm:$0xff]
      %812 = vst [vmem:[#allocation1] ss:$2 sm:$0xff] %v612
      %v813 = vld.sshfl [vmem:[#allocation1] sm:$0xff pattern:$0x75316420]
      %v814 = vld.sshfl [vmem:[#allocation1 + $0x8] sm:$0xff pattern:$0x75316420]
      %815 = vrot.lane.b32.xlu0 %v813, 16
      %v816 = vpop.permute.xlu0 %815
      %817 = vrot.lane.b32.xlu0 %v814, 16
      %v818 = vpop.permute.xlu0 %817
      %vm819 = vcmask 130048
      %v820 = vsel %vm819, %v816, %v818
      %v822 = vsel %vm819, 0.0, %v816
      %v824 = vsel %vm729, %v808, 0
      %v827 = vsel %vm729, %v809, 0
      %v830 = vsel %vm729, %v810, 0
      %v833 = vsel %vm729, %v811, 0
      %v836 = vsel %vm742, %v822, 0
      %v838 = vsel %vm742, %v820, 0
      %840 = vmatpush.msra.mxu0 0.0
      %841 = vmatpush.msra.mxu0 0.0
      %842 = vmatpush.msra.mxu0 0.0
      %843 = vmatpush.msra.mxu0 0.0
      %844 = vmatpush.msra.mxu0 0.0
      %845 = vmatpush.msra.mxu0 0.0
      %846 = vmatpush.msra.mxu0 0.0
      %847 = vmatpush.msra.mxu0 0.0
      %848 = vmatpush.msra.mxu0 0.0
      %849 = vmatpush.msra.mxu0 0.0
      %850 = vmatpush.msra.mxu0 0.0
      %851 = vmatpush.msra.mxu0 0.0
      %852 = vmatpush.msra.mxu0 0.0
      %853 = vmatpush.msra.mxu0 0.0
      %854 = vmatpush.msra.mxu0 0.0
      %855 = vmatpush.msra.mxu0 %v836
      %856 = vmatmul.f32.gmra.mxu0 %v824
      %v857 = vpop.f32.mrf.mxu0
      %v858 = vadd.f32 0.0, %v857
      %859 = vmatmul.f32.gmra.mxu0 %v827
      %v860 = vpop.f32.mrf.mxu0
      %v861 = vadd.f32 0.0, %v860
      %862 = vmatmul.f32.gmra.mxu0 %v830
      %v863 = vpop.f32.mrf.mxu0
      %v864 = vadd.f32 0.0, %v863
      %865 = vmatmul.f32.gmra.mxu0 %v833
      %v866 = vpop.f32.mrf.mxu0
      %v867 = vadd.f32 0.0, %v866
      %868 = vdwg.mxu0
      %869 = vmatpush.msra.mxu0 0.0
      %870 = vmatpush.msra.mxu0 0.0
      %871 = vmatpush.msra.mxu0 0.0
      %872 = vmatpush.msra.mxu0 0.0
      %873 = vmatpush.msra.mxu0 0.0
      %874 = vmatpush.msra.mxu0 0.0
      %875 = vmatpush.msra.mxu0 0.0
      %876 = vmatpush.msra.mxu0 0.0
      %877 = vmatpush.msra.mxu0 0.0
      %878 = vmatpush.msra.mxu0 0.0
      %879 = vmatpush.msra.mxu0 0.0
      %880 = vmatpush.msra.mxu0 0.0
      %881 = vmatpush.msra.mxu0 0.0
      %882 = vmatpush.msra.mxu0 0.0
      %883 = vmatpush.msra.mxu0 0.0
      %884 = vmatpush.msra.mxu0 %v838
      %885 = vmatmul.f32.gmra.mxu0 %v824
      %v886 = vpop.f32.mrf.mxu0
      %v887 = vadd.f32 0.0, %v886
      %888 = vmatmul.f32.gmra.mxu0 %v827
      %v889 = vpop.f32.mrf.mxu0
      %v890 = vadd.f32 0.0, %v889
      %891 = vmatmul.f32.gmra.mxu0 %v830
      %v892 = vpop.f32.mrf.mxu0
      %v893 = vadd.f32 0.0, %v892
      %894 = vmatmul.f32.gmra.mxu0 %v833
      %v895 = vpop.f32.mrf.mxu0
      %v896 = vadd.f32 0.0, %v895
      %897 = vdwg.mxu0
      %v898 = vadd.f32 %v767, %v858
      %v899 = vadd.f32 %v796, %v887
      %v900 = vadd.f32 %v770, %v861
      %v901 = vadd.f32 %v799, %v890
      %v902 = vadd.f32 %v773, %v864
      %v903 = vadd.f32 %v802, %v893
      %v904 = vadd.f32 %v776, %v867
      %v905 = vadd.f32 %v805, %v896
      %s906 = scalar_lea.vmem %s6, 32
      %v907 = vld [vmem:[%s906] sm:$0xff]
      %v908 = vld [vmem:[%s906 + $0x8] sm:$0xff]
      %v909 = vld [vmem:[%s906 + $0x10] sm:$0xff]
      %v910 = vld [vmem:[%s906 + $0x18] sm:$0xff]
      %911 = vrot.lane.b32.xlu0 %v613, 16
      %v912 = vpop.permute.xlu0 %911
      %913 = vrot.lane.b32.xlu0 %v614, 16
      %v914 = vpop.permute.xlu0 %913
      %v915 = vsel %vm819, %v912, %v914
      %v918 = vsel %vm819, 0.0, %v912
      %v920 = vsel %vm658, %v907, 0
      %v923 = vsel %vm658, %v908, 0
      %v926 = vsel %vm658, %v909, 0
      %v929 = vsel %vm658, %v910, 0
      %931 = vmatpush.msra.mxu0 0.0
      %932 = vmatpush.msra.mxu0 0.0
      %933 = vmatpush.msra.mxu0 0.0
      %934 = vmatpush.msra.mxu0 0.0
      %935 = vmatpush.msra.mxu0 0.0
      %936 = vmatpush.msra.mxu0 0.0
      %937 = vmatpush.msra.mxu0 0.0
      %938 = vmatpush.msra.mxu0 0.0
      %939 = vmatpush.msra.mxu0 0.0
      %940 = vmatpush.msra.mxu0 0.0
      %941 = vmatpush.msra.mxu0 0.0
      %942 = vmatpush.msra.mxu0 0.0
      %943 = vmatpush.msra.mxu0 0.0
      %944 = vmatpush.msra.mxu0 0.0
      %945 = vmatpush.msra.mxu0 0.0
      %946 = vmatpush.msra.mxu0 %v918
      %947 = vmatmul.f32.gmra.mxu0 %v920
      %v948 = vpop.f32.mrf.mxu0
      %v949 = vadd.f32 0.0, %v948
      %950 = vmatmul.f32.gmra.mxu0 %v923
      %v951 = vpop.f32.mrf.mxu0
      %v952 = vadd.f32 0.0, %v951
      %953 = vmatmul.f32.gmra.mxu0 %v926
      %v954 = vpop.f32.mrf.mxu0
      %v955 = vadd.f32 0.0, %v954
      %956 = vmatmul.f32.gmra.mxu0 %v929
      %v957 = vpop.f32.mrf.mxu0
      %v958 = vadd.f32 0.0, %v957
      %959 = vdwg.mxu0
      %960 = vmatpush.msra.mxu0 0.0
      %961 = vmatpush.msra.mxu0 0.0
      %962 = vmatpush.msra.mxu0 0.0
      %963 = vmatpush.msra.mxu0 0.0
      %964 = vmatpush.msra.mxu0 0.0
      %965 = vmatpush.msra.mxu0 0.0
      %966 = vmatpush.msra.mxu0 0.0
      %967 = vmatpush.msra.mxu0 0.0
      %968 = vmatpush.msra.mxu0 0.0
      %969 = vmatpush.msra.mxu0 0.0
      %970 = vmatpush.msra.mxu0 0.0
      %971 = vmatpush.msra.mxu0 0.0
      %972 = vmatpush.msra.mxu0 0.0
      %973 = vmatpush.msra.mxu0 0.0
      %974 = vmatpush.msra.mxu0 0.0
      %975 = vmatpush.msra.mxu0 %v915
      %976 = vmatmul.f32.gmra.mxu0 %v920
      %v977 = vpop.f32.mrf.mxu0
      %v978 = vadd.f32 0.0, %v977
      %979 = vmatmul.f32.gmra.mxu0 %v923
      %v980 = vpop.f32.mrf.mxu0
      %v981 = vadd.f32 0.0, %v980
      %982 = vmatmul.f32.gmra.mxu0 %v926
      %v983 = vpop.f32.mrf.mxu0
      %v984 = vadd.f32 0.0, %v983
      %985 = vmatmul.f32.gmra.mxu0 %v929
      %v986 = vpop.f32.mrf.mxu0
      %v987 = vadd.f32 0.0, %v986
      %988 = vdwg.mxu0
      %v989 = vadd.f32 %v898, %v949
      %v990 = vadd.f32 %v899, %v978
      %v991 = vadd.f32 %v900, %v952
      %v992 = vadd.f32 %v901, %v981
      %v993 = vadd.f32 %v902, %v955
      %v994 = vadd.f32 %v903, %v984
      %v995 = vadd.f32 %v904, %v958
      %v996 = vadd.f32 %v905, %v987
      %s997 = scalar_lea.vmem %s5, 64
      %v998 = vld [vmem:[%s997] sm:$0xff]
      %v999 = vld [vmem:[%s997 + $0x8] sm:$0xff]
      %v1000 = vld [vmem:[%s997 + $0x10] sm:$0xff]
      %v1001 = vld [vmem:[%s997 + $0x18] sm:$0xff]
      %1002 = vst [vmem:[#allocation1] ss:$2 sm:$0xff] %v612
      %v1003 = vld.sshfl [vmem:[#allocation1] sm:$0xff pattern:$0x75316420]
      %v1004 = vld.sshfl [vmem:[#allocation1 + $0x8] sm:$0xff pattern:$0x75316420]
      %1005 = vrot.lane.b32.xlu0 %v1003, 15
      %v1006 = vpop.permute.xlu0 %1005
      %1007 = vrot.lane.b32.xlu0 %v1004, 15
      %v1008 = vpop.permute.xlu0 %1007
      %vm1009 = vcmask 121856
      %v1010 = vsel %vm1009, %v1006, %v1008
      %v1013 = vsel %vm1009, 0.0, %v1006
      %vm1014 = vcmp.lt.s32.totalorder %v610, 15
      %vm1015 = vcmp.lt.s32.totalorder %v611, 15
      %v1016 = vsel %vm1014, 1, 0
      %v1017 = vsel %vm1015, 1, 0
      %vm1018 = vcmp.eq.s32.totalorder %v1016, 1
      %vm1019 = vcmp.eq.s32.totalorder %v1017, 1
      %v1020 = vsel %vm1018, %v1013, 0.0
      %v1021 = vsel %vm1019, %v1010, 0.0
      %v1023 = vsel %vm729, %v998, 0
      %v1026 = vsel %vm729, %v999, 0
      %v1029 = vsel %vm729, %v1000, 0
      %v1032 = vsel %vm729, %v1001, 0
      %v1035 = vsel %vm742, %v1020, 0
      %v1038 = vsel %vm742, %v1021, 0
      %1040 = vmatpush.msra.mxu0 0.0
      %1041 = vmatpush.msra.mxu0 0.0
      %1042 = vmatpush.msra.mxu0 0.0
      %1043 = vmatpush.msra.mxu0 0.0
      %1044 = vmatpush.msra.mxu0 0.0
      %1045 = vmatpush.msra.mxu0 0.0
      %1046 = vmatpush.msra.mxu0 0.0
      %1047 = vmatpush.msra.mxu0 0.0
      %1048 = vmatpush.msra.mxu0 0.0
      %1049 = vmatpush.msra.mxu0 0.0
      %1050 = vmatpush.msra.mxu0 0.0
      %1051 = vmatpush.msra.mxu0 0.0
      %1052 = vmatpush.msra.mxu0 0.0
      %1053 = vmatpush.msra.mxu0 0.0
      %1054 = vmatpush.msra.mxu0 0.0
      %1055 = vmatpush.msra.mxu0 %v1035
      %1056 = vmatmul.f32.gmra.mxu0 %v1023
      %v1057 = vpop.f32.mrf.mxu0
      %v1058 = vadd.f32 0.0, %v1057
      %1059 = vmatmul.f32.gmra.mxu0 %v1026
      %v1060 = vpop.f32.mrf.mxu0
      %v1061 = vadd.f32 0.0, %v1060
      %1062 = vmatmul.f32.gmra.mxu0 %v1029
      %v1063 = vpop.f32.mrf.mxu0
      %v1064 = vadd.f32 0.0, %v1063
      %1065 = vmatmul.f32.gmra.mxu0 %v1032
      %v1066 = vpop.f32.mrf.mxu0
      %v1067 = vadd.f32 0.0, %v1066
      %1068 = vdwg.mxu0
      %1069 = vmatpush.msra.mxu0 0.0
      %1070 = vmatpush.msra.mxu0 0.0
      %1071 = vmatpush.msra.mxu0 0.0
      %1072 = vmatpush.msra.mxu0 0.0
      %1073 = vmatpush.msra.mxu0 0.0
      %1074 = vmatpush.msra.mxu0 0.0
      %1075 = vmatpush.msra.mxu0 0.0
      %1076 = vmatpush.msra.mxu0 0.0
      %1077 = vmatpush.msra.mxu0 0.0
      %1078 = vmatpush.msra.mxu0 0.0
      %1079 = vmatpush.msra.mxu0 0.0
      %1080 = vmatpush.msra.mxu0 0.0
      %1081 = vmatpush.msra.mxu0 0.0
      %1082 = vmatpush.msra.mxu0 0.0
      %1083 = vmatpush.msra.mxu0 0.0
      %1084 = vmatpush.msra.mxu0 %v1038
      %1085 = vmatmul.f32.gmra.mxu0 %v1023
      %v1086 = vpop.f32.mrf.mxu0
      %v1087 = vadd.f32 0.0, %v1086
      %1088 = vmatmul.f32.gmra.mxu0 %v1026
      %v1089 = vpop.f32.mrf.mxu0
      %v1090 = vadd.f32 0.0, %v1089
      %1091 = vmatmul.f32.gmra.mxu0 %v1029
      %v1092 = vpop.f32.mrf.mxu0
      %v1093 = vadd.f32 0.0, %v1092
      %1094 = vmatmul.f32.gmra.mxu0 %v1032
      %v1095 = vpop.f32.mrf.mxu0
      %v1096 = vadd.f32 0.0, %v1095
      %1097 = vdwg.mxu0
      %v1098 = vadd.f32 %v989, %v1058
      %v1099 = vadd.f32 %v990, %v1087
      %v1100 = vadd.f32 %v991, %v1061
      %v1101 = vadd.f32 %v992, %v1090
      %v1102 = vadd.f32 %v993, %v1064
      %v1103 = vadd.f32 %v994, %v1093
      %v1104 = vadd.f32 %v995, %v1067
      %v1105 = vadd.f32 %v996, %v1096
      %s1106 = scalar_lea.vmem %s6, 64
      %v1107 = vld [vmem:[%s1106] sm:$0xff]
      %v1108 = vld [vmem:[%s1106 + $0x8] sm:$0xff]
      %v1109 = vld [vmem:[%s1106 + $0x10] sm:$0xff]
      %v1110 = vld [vmem:[%s1106 + $0x18] sm:$0xff]
      %1111 = vrot.lane.b32.xlu0 %v613, 15
      %v1112 = vpop.permute.xlu0 %1111
      %1113 = vrot.lane.b32.xlu0 %v614, 15
      %v1114 = vpop.permute.xlu0 %1113
      %v1115 = vsel %vm1009, %v1112, %v1114
      %v1118 = vsel %vm1009, 0.0, %v1112
      %v1119 = vsel %vm1018, %v1118, 0.0
      %v1120 = vsel %vm1019, %v1115, 0.0
      %v1122 = vsel %vm658, %v1107, 0
      %v1125 = vsel %vm658, %v1108, 0
      %v1128 = vsel %vm658, %v1109, 0
      %v1131 = vsel %vm658, %v1110, 0
      %1133 = vmatpush.msra.mxu0 0.0
      %1134 = vmatpush.msra.mxu0 0.0
      %1135 = vmatpush.msra.mxu0 0.0
      %1136 = vmatpush.msra.mxu0 0.0
      %1137 = vmatpush.msra.mxu0 0.0
      %1138 = vmatpush.msra.mxu0 0.0
      %1139 = vmatpush.msra.mxu0 0.0
      %1140 = vmatpush.msra.mxu0 0.0
      %1141 = vmatpush.msra.mxu0 0.0
      %1142 = vmatpush.msra.mxu0 0.0
      %1143 = vmatpush.msra.mxu0 0.0
      %1144 = vmatpush.msra.mxu0 0.0
      %1145 = vmatpush.msra.mxu0 0.0
      %1146 = vmatpush.msra.mxu0 0.0
      %1147 = vmatpush.msra.mxu0 0.0
      %1148 = vmatpush.msra.mxu0 %v1119
      %1149 = vmatmul.f32.gmra.mxu0 %v1122
      %v1150 = vpop.f32.mrf.mxu0
      %v1151 = vadd.f32 0.0, %v1150
      %1152 = vmatmul.f32.gmra.mxu0 %v1125
      %v1153 = vpop.f32.mrf.mxu0
      %v1154 = vadd.f32 0.0, %v1153
      %1155 = vmatmul.f32.gmra.mxu0 %v1128
      %v1156 = vpop.f32.mrf.mxu0
      %v1157 = vadd.f32 0.0, %v1156
      %1158 = vmatmul.f32.gmra.mxu0 %v1131
      %v1159 = vpop.f32.mrf.mxu0
      %v1160 = vadd.f32 0.0, %v1159
      %1161 = vdwg.mxu0
      %1162 = vmatpush.msra.mxu0 0.0
      %1163 = vmatpush.msra.mxu0 0.0
      %1164 = vmatpush.msra.mxu0 0.0
      %1165 = vmatpush.msra.mxu0 0.0
      %1166 = vmatpush.msra.mxu0 0.0
      %1167 = vmatpush.msra.mxu0 0.0
      %1168 = vmatpush.msra.mxu0 0.0
      %1169 = vmatpush.msra.mxu0 0.0
      %1170 = vmatpush.msra.mxu0 0.0
      %1171 = vmatpush.msra.mxu0 0.0
      %1172 = vmatpush.msra.mxu0 0.0
      %1173 = vmatpush.msra.mxu0 0.0
      %1174 = vmatpush.msra.mxu0 0.0
      %1175 = vmatpush.msra.mxu0 0.0
      %1176 = vmatpush.msra.mxu0 0.0
      %1177 = vmatpush.msra.mxu0 %v1120
      %1178 = vmatmul.f32.gmra.mxu0 %v1122
      %v1179 = vpop.f32.mrf.mxu0
      %v1180 = vadd.f32 0.0, %v1179
      %1181 = vmatmul.f32.gmra.mxu0 %v1125
      %v1182 = vpop.f32.mrf.mxu0
      %v1183 = vadd.f32 0.0, %v1182
      %1184 = vmatmul.f32.gmra.mxu0 %v1128
      %v1185 = vpop.f32.mrf.mxu0
      %v1186 = vadd.f32 0.0, %v1185
      %1187 = vmatmul.f32.gmra.mxu0 %v1131
      %v1188 = vpop.f32.mrf.mxu0
      %v1189 = vadd.f32 0.0, %v1188
      %1190 = vdwg.mxu0
      %v1191 = vadd.f32 %v1098, %v1151
      %v1192 = vadd.f32 %v1099, %v1180
      %v1193 = vadd.f32 %v1100, %v1154
      %v1194 = vadd.f32 %v1101, %v1183
      %v1195 = vadd.f32 %v1102, %v1157
      %v1196 = vadd.f32 %v1103, %v1186
      %v1197 = vadd.f32 %v1104, %v1160
      %v1198 = vadd.f32 %v1105, %v1189
      %s1199 = scalar_lea.vmem %s5, 96
      %v1200 = vld [vmem:[%s1199] sm:$0xff]
      %v1201 = vld [vmem:[%s1199 + $0x8] sm:$0xff]
      %v1202 = vld [vmem:[%s1199 + $0x10] sm:$0xff]
      %v1203 = vld [vmem:[%s1199 + $0x18] sm:$0xff]
      %1204 = vst [vmem:[#allocation1] ss:$2 sm:$0xff] %v612
      %v1205 = vld.sshfl [vmem:[#allocation1] sm:$0xff pattern:$0x75316420]
      %v1206 = vld.sshfl [vmem:[#allocation1 + $0x8] sm:$0xff pattern:$0x75316420]
      %1207 = vrot.lane.b32.xlu0 %v1205, 1
      %v1208 = vpop.permute.xlu0 %1207
      %1209 = vrot.lane.b32.xlu0 %v1206, 1
      %v1210 = vpop.permute.xlu0 %1209
      %vm1211 = vcmask 7168
      %v1212 = vsel %vm1211, %v1208, %v1210
      %v1215 = vsel %vm1211, 0.0, %v1208
      %v1216 = vsel %vm638, %v1215, 0.0
      %v1217 = vsel %vm639, %v1212, 0.0
      %v1219 = vsel %vm729, %v1200, 0
      %v1222 = vsel %vm729, %v1201, 0
      %v1225 = vsel %vm729, %v1202, 0
      %v1228 = vsel %vm729, %v1203, 0
      %v1231 = vsel %vm742, %v1216, 0
      %v1234 = vsel %vm742, %v1217, 0
      %1236 = vmatpush.msra.mxu0 0.0
      %1237 = vmatpush.msra.mxu0 0.0
      %1238 = vmatpush.msra.mxu0 0.0
      %1239 = vmatpush.msra.mxu0 0.0
      %1240 = vmatpush.msra.mxu0 0.0
      %1241 = vmatpush.msra.mxu0 0.0
      %1242 = vmatpush.msra.mxu0 0.0
      %1243 = vmatpush.msra.mxu0 0.0
      %1244 = vmatpush.msra.mxu0 0.0
      %1245 = vmatpush.msra.mxu0 0.0
      %1246 = vmatpush.msra.mxu0 0.0
      %1247 = vmatpush.msra.mxu0 0.0
      %1248 = vmatpush.msra.mxu0 0.0
      %1249 = vmatpush.msra.mxu0 0.0
      %1250 = vmatpush.msra.mxu0 0.0
      %1251 = vmatpush.msra.mxu0 %v1231
      %1252 = vmatmul.f32.gmra.mxu0 %v1219
      %v1253 = vpop.f32.mrf.mxu0
      %v1254 = vadd.f32 0.0, %v1253
      %1255 = vmatmul.f32.gmra.mxu0 %v1222
      %v1256 = vpop.f32.mrf.mxu0
      %v1257 = vadd.f32 0.0, %v1256
      %1258 = vmatmul.f32.gmra.mxu0 %v1225
      %v1259 = vpop.f32.mrf.mxu0
      %v1260 = vadd.f32 0.0, %v1259
      %1261 = vmatmul.f32.gmra.mxu0 %v1228
      %v1262 = vpop.f32.mrf.mxu0
      %v1263 = vadd.f32 0.0, %v1262
      %1264 = vdwg.mxu0
      %1265 = vmatpush.msra.mxu0 0.0
      %1266 = vmatpush.msra.mxu0 0.0
      %1267 = vmatpush.msra.mxu0 0.0
      %1268 = vmatpush.msra.mxu0 0.0
      %1269 = vmatpush.msra.mxu0 0.0
      %1270 = vmatpush.msra.mxu0 0.0
      %1271 = vmatpush.msra.mxu0 0.0
      %1272 = vmatpush.msra.mxu0 0.0
      %1273 = vmatpush.msra.mxu0 0.0
      %1274 = vmatpush.msra.mxu0 0.0
      %1275 = vmatpush.msra.mxu0 0.0
      %1276 = vmatpush.msra.mxu0 0.0
      %1277 = vmatpush.msra.mxu0 0.0
      %1278 = vmatpush.msra.mxu0 0.0
      %1279 = vmatpush.msra.mxu0 0.0
      %1280 = vmatpush.msra.mxu0 %v1234
      %1281 = vmatmul.f32.gmra.mxu0 %v1219
      %v1282 = vpop.f32.mrf.mxu0
      %v1283 = vadd.f32 0.0, %v1282
      %1284 = vmatmul.f32.gmra.mxu0 %v1222
      %v1285 = vpop.f32.mrf.mxu0
      %v1286 = vadd.f32 0.0, %v1285
      %1287 = vmatmul.f32.gmra.mxu0 %v1225
      %v1288 = vpop.f32.mrf.mxu0
      %v1289 = vadd.f32 0.0, %v1288
      %1290 = vmatmul.f32.gmra.mxu0 %v1228
      %v1291 = vpop.f32.mrf.mxu0
      %v1292 = vadd.f32 0.0, %v1291
      %1293 = vdwg.mxu0
      %v1294 = vadd.f32 %v1191, %v1254
      %v1295 = vadd.f32 %v1192, %v1283
      %v1296 = vadd.f32 %v1193, %v1257
      %v1297 = vadd.f32 %v1194, %v1286
      %v1298 = vadd.f32 %v1195, %v1260
      %v1299 = vadd.f32 %v1196, %v1289
      %v1300 = vadd.f32 %v1197, %v1263
      %v1301 = vadd.f32 %v1198, %v1292
      %s1302 = scalar_lea.vmem %s6, 96
      %v1303 = vld [vmem:[%s1302] sm:$0xff]
      %v1304 = vld [vmem:[%s1302 + $0x8] sm:$0xff]
      %v1305 = vld [vmem:[%s1302 + $0x10] sm:$0xff]
      %v1306 = vld [vmem:[%s1302 + $0x18] sm:$0xff]
      %1307 = vrot.lane.b32.xlu0 %v613, 1
      %v1308 = vpop.permute.xlu0 %1307
      %1309 = vrot.lane.b32.xlu0 %v614, 1
      %v1310 = vpop.permute.xlu0 %1309
      %v1311 = vsel %vm1211, %v1308, %v1310
      %v1314 = vsel %vm1211, 0.0, %v1308
      %v1315 = vsel %vm638, %v1314, 0.0
      %v1316 = vsel %vm639, %v1311, 0.0
      %v1318 = vsel %vm658, %v1303, 0
      %v1321 = vsel %vm658, %v1304, 0
      %v1324 = vsel %vm658, %v1305, 0
      %v1327 = vsel %vm658, %v1306, 0
      %1329 = vmatpush.msra.mxu0 0.0
      %1330 = vmatpush.msra.mxu0 0.0
      %1331 = vmatpush.msra.mxu0 0.0
      %1332 = vmatpush.msra.mxu0 0.0
      %1333 = vmatpush.msra.mxu0 0.0
      %1334 = vmatpush.msra.mxu0 0.0
      %1335 = vmatpush.msra.mxu0 0.0
      %1336 = vmatpush.msra.mxu0 0.0
      %1337 = vmatpush.msra.mxu0 0.0
      %1338 = vmatpush.msra.mxu0 0.0
      %1339 = vmatpush.msra.mxu0 0.0
      %1340 = vmatpush.msra.mxu0 0.0
      %1341 = vmatpush.msra.mxu0 0.0
      %1342 = vmatpush.msra.mxu0 0.0
      %1343 = vmatpush.msra.mxu0 0.0
      %1344 = vmatpush.msra.mxu0 %v1315
      %1345 = vmatmul.f32.gmra.mxu0 %v1318
      %v1346 = vpop.f32.mrf.mxu0
      %v1347 = vadd.f32 0.0, %v1346
      %1348 = vmatmul.f32.gmra.mxu0 %v1321
      %v1349 = vpop.f32.mrf.mxu0
      %v1350 = vadd.f32 0.0, %v1349
      %1351 = vmatmul.f32.gmra.mxu0 %v1324
      %v1352 = vpop.f32.mrf.mxu0
      %v1353 = vadd.f32 0.0, %v1352
      %1354 = vmatmul.f32.gmra.mxu0 %v1327
      %v1355 = vpop.f32.mrf.mxu0
      %v1356 = vadd.f32 0.0, %v1355
      %1357 = vdwg.mxu0
      %1358 = vmatpush.msra.mxu0 0.0
      %1359 = vmatpush.msra.mxu0 0.0
      %1360 = vmatpush.msra.mxu0 0.0
      %1361 = vmatpush.msra.mxu0 0.0
      %1362 = vmatpush.msra.mxu0 0.0
      %1363 = vmatpush.msra.mxu0 0.0
      %1364 = vmatpush.msra.mxu0 0.0
      %1365 = vmatpush.msra.mxu0 0.0
      %1366 = vmatpush.msra.mxu0 0.0
      %1367 = vmatpush.msra.mxu0 0.0
      %1368 = vmatpush.msra.mxu0 0.0
      %1369 = vmatpush.msra.mxu0 0.0
      %1370 = vmatpush.msra.mxu0 0.0
      %1371 = vmatpush.msra.mxu0 0.0
      %1372 = vmatpush.msra.mxu0 0.0
      %1373 = vmatpush.msra.mxu0 %v1316
      %1374 = vmatmul.f32.gmra.mxu0 %v1318
      %v1375 = vpop.f32.mrf.mxu0
      %v1376 = vadd.f32 0.0, %v1375
      %1377 = vmatmul.f32.gmra.mxu0 %v1321
      %v1378 = vpop.f32.mrf.mxu0
      %v1379 = vadd.f32 0.0, %v1378
      %1380 = vmatmul.f32.gmra.mxu0 %v1324
      %v1381 = vpop.f32.mrf.mxu0
      %v1382 = vadd.f32 0.0, %v1381
      %1383 = vmatmul.f32.gmra.mxu0 %v1327
      %v1384 = vpop.f32.mrf.mxu0
      %v1385 = vadd.f32 0.0, %v1384
      %1386 = vdwg.mxu0
      %v1387 = vadd.f32 %v1294, %v1347
      %v1388 = vadd.f32 %v1295, %v1376
      %v1389 = vadd.f32 %v1296, %v1350
      %v1390 = vadd.f32 %v1297, %v1379
      %v1391 = vadd.f32 %v1298, %v1353
      %v1392 = vadd.f32 %v1299, %v1382
      %v1393 = vadd.f32 %v1300, %v1356
      %v1394 = vadd.f32 %v1301, %v1385
      %s1395 = scalar_lea.vmem %s5, 128
      %v1396 = vld [vmem:[%s1395] sm:$0xff]
      %v1397 = vld [vmem:[%s1395 + $0x8] sm:$0xff]
      %v1398 = vld [vmem:[%s1395 + $0x10] sm:$0xff]
      %v1399 = vld [vmem:[%s1395 + $0x18] sm:$0xff]
      %1400 = vst [vmem:[#allocation1] ss:$2 sm:$0xff] %v612
      %v1401 = vld.sshfl [vmem:[#allocation1] sm:$0xff pattern:$0x75316420]
      %v1402 = vld.sshfl [vmem:[#allocation1 + $0x8] sm:$0xff pattern:$0x75316420]
      %v1404 = vsel %vm729, %v1396, 0
      %v1407 = vsel %vm729, %v1397, 0
      %v1410 = vsel %vm729, %v1398, 0
      %v1413 = vsel %vm729, %v1399, 0
      %v1415 = vsel %vm742, %v1401, 0
      %v1417 = vsel %vm742, %v1402, 0
      %1419 = vmatpush.msra.mxu0 0.0
      %1420 = vmatpush.msra.mxu0 0.0
      %1421 = vmatpush.msra.mxu0 0.0
      %1422 = vmatpush.msra.mxu0 0.0
      %1423 = vmatpush.msra.mxu0 0.0
      %1424 = vmatpush.msra.mxu0 0.0
      %1425 = vmatpush.msra.mxu0 0.0
      %1426 = vmatpush.msra.mxu0 0.0
      %1427 = vmatpush.msra.mxu0 0.0
      %1428 = vmatpush.msra.mxu0 0.0
      %1429 = vmatpush.msra.mxu0 0.0
      %1430 = vmatpush.msra.mxu0 0.0
      %1431 = vmatpush.msra.mxu0 0.0
      %1432 = vmatpush.msra.mxu0 0.0
      %1433 = vmatpush.msra.mxu0 0.0
      %1434 = vmatpush.msra.mxu0 %v1415
      %1435 = vmatmul.f32.gmra.mxu0 %v1404
      %v1436 = vpop.f32.mrf.mxu0
      %v1437 = vadd.f32 0.0, %v1436
      %1438 = vmatmul.f32.gmra.mxu0 %v1407
      %v1439 = vpop.f32.mrf.mxu0
      %v1440 = vadd.f32 0.0, %v1439
      %1441 = vmatmul.f32.gmra.mxu0 %v1410
      %v1442 = vpop.f32.mrf.mxu0
      %v1443 = vadd.f32 0.0, %v1442
      %1444 = vmatmul.f32.gmra.mxu0 %v1413
      %v1445 = vpop.f32.mrf.mxu0
      %v1446 = vadd.f32 0.0, %v1445
      %1447 = vdwg.mxu0
      %1448 = vmatpush.msra.mxu0 0.0
      %1449 = vmatpush.msra.mxu0 0.0
      %1450 = vmatpush.msra.mxu0 0.0
      %1451 = vmatpush.msra.mxu0 0.0
      %1452 = vmatpush.msra.mxu0 0.0
      %1453 = vmatpush.msra.mxu0 0.0
      %1454 = vmatpush.msra.mxu0 0.0
      %1455 = vmatpush.msra.mxu0 0.0
      %1456 = vmatpush.msra.mxu0 0.0
      %1457 = vmatpush.msra.mxu0 0.0
      %1458 = vmatpush.msra.mxu0 0.0
      %1459 = vmatpush.msra.mxu0 0.0
      %1460 = vmatpush.msra.mxu0 0.0
      %1461 = vmatpush.msra.mxu0 0.0
      %1462 = vmatpush.msra.mxu0 0.0
      %1463 = vmatpush.msra.mxu0 %v1417
      %1464 = vmatmul.f32.gmra.mxu0 %v1404
      %v1465 = vpop.f32.mrf.mxu0
      %v1466 = vadd.f32 0.0, %v1465
      %1467 = vmatmul.f32.gmra.mxu0 %v1407
      %v1468 = vpop.f32.mrf.mxu0
      %v1469 = vadd.f32 0.0, %v1468
      %1470 = vmatmul.f32.gmra.mxu0 %v1410
      %v1471 = vpop.f32.mrf.mxu0
      %v1472 = vadd.f32 0.0, %v1471
      %1473 = vmatmul.f32.gmra.mxu0 %v1413
      %v1474 = vpop.f32.mrf.mxu0
      %v1475 = vadd.f32 0.0, %v1474
      %1476 = vdwg.mxu0
      %v1477 = vadd.f32 %v1387, %v1437
      %v1478 = vadd.f32 %v1388, %v1466
      %v1479 = vadd.f32 %v1389, %v1440
      %v1480 = vadd.f32 %v1390, %v1469
      %v1481 = vadd.f32 %v1391, %v1443
      %v1482 = vadd.f32 %v1392, %v1472
      %v1483 = vadd.f32 %v1393, %v1446
      %v1484 = vadd.f32 %v1394, %v1475
      %s1485 = scalar_lea.vmem %s6, 128
      %v1486 = vld [vmem:[%s1485] sm:$0xff]
      %v1487 = vld [vmem:[%s1485 + $0x8] sm:$0xff]
      %v1488 = vld [vmem:[%s1485 + $0x10] sm:$0xff]
      %v1489 = vld [vmem:[%s1485 + $0x18] sm:$0xff]
      %v1491 = vsel %vm658, %v1486, 0
      %v1494 = vsel %vm658, %v1487, 0
      %v1497 = vsel %vm658, %v1488, 0
      %v1500 = vsel %vm658, %v1489, 0
      %1502 = vmatpush.msra.mxu0 0.0
      %1503 = vmatpush.msra.mxu0 0.0
      %1504 = vmatpush.msra.mxu0 0.0
      %1505 = vmatpush.msra.mxu0 0.0
      %1506 = vmatpush.msra.mxu0 0.0
      %1507 = vmatpush.msra.mxu0 0.0
      %1508 = vmatpush.msra.mxu0 0.0
      %1509 = vmatpush.msra.mxu0 0.0
      %1510 = vmatpush.msra.mxu0 0.0
      %1511 = vmatpush.msra.mxu0 0.0
      %1512 = vmatpush.msra.mxu0 0.0
      %1513 = vmatpush.msra.mxu0 0.0
      %1514 = vmatpush.msra.mxu0 0.0
      %1515 = vmatpush.msra.mxu0 0.0
      %1516 = vmatpush.msra.mxu0 0.0
      %1517 = vmatpush.msra.mxu0 %v613
      %1518 = vmatmul.f32.gmra.mxu0 %v1491
      %v1519 = vpop.f32.mrf.mxu0
      %v1520 = vadd.f32 0.0, %v1519
      %1521 = vmatmul.f32.gmra.mxu0 %v1494
      %v1522 = vpop.f32.mrf.mxu0
      %v1523 = vadd.f32 0.0, %v1522
      %1524 = vmatmul.f32.gmra.mxu0 %v1497
      %v1525 = vpop.f32.mrf.mxu0
      %v1526 = vadd.f32 0.0, %v1525
      %1527 = vmatmul.f32.gmra.mxu0 %v1500
      %v1528 = vpop.f32.mrf.mxu0
      %v1529 = vadd.f32 0.0, %v1528
      %1530 = vdwg.mxu0
      %1531 = vmatpush.msra.mxu0 0.0
      %1532 = vmatpush.msra.mxu0 0.0
      %1533 = vmatpush.msra.mxu0 0.0
      %1534 = vmatpush.msra.mxu0 0.0
      %1535 = vmatpush.msra.mxu0 0.0
      %1536 = vmatpush.msra.mxu0 0.0
      %1537 = vmatpush.msra.mxu0 0.0
      %1538 = vmatpush.msra.mxu0 0.0
      %1539 = vmatpush.msra.mxu0 0.0
      %1540 = vmatpush.msra.mxu0 0.0
      %1541 = vmatpush.msra.mxu0 0.0
      %1542 = vmatpush.msra.mxu0 0.0
      %1543 = vmatpush.msra.mxu0 0.0
      %1544 = vmatpush.msra.mxu0 0.0
      %1545 = vmatpush.msra.mxu0 0.0
      %1546 = vmatpush.msra.mxu0 %v614
      %1547 = vmatmul.f32.gmra.mxu0 %v1491
      %v1548 = vpop.f32.mrf.mxu0
      %v1549 = vadd.f32 0.0, %v1548
      %1550 = vmatmul.f32.gmra.mxu0 %v1494
      %v1551 = vpop.f32.mrf.mxu0
      %v1552 = vadd.f32 0.0, %v1551
      %1553 = vmatmul.f32.gmra.mxu0 %v1497
      %v1554 = vpop.f32.mrf.mxu0
      %v1555 = vadd.f32 0.0, %v1554
      %1556 = vmatmul.f32.gmra.mxu0 %v1500
      %v1557 = vpop.f32.mrf.mxu0
      %v1558 = vadd.f32 0.0, %v1557
      %1559 = vdwg.mxu0
      %v1560 = vadd.f32 %v1477, %v1520
      %v1561 = vadd.f32 %v1478, %v1549
      %v1562 = vadd.f32 %v1479, %v1523
      %v1563 = vadd.f32 %v1480, %v1552
      %v1564 = vadd.f32 %v1481, %v1526
      %v1565 = vadd.f32 %v1482, %v1555
      %v1566 = vadd.f32 %v1483, %v1529
      %v1567 = vadd.f32 %v1484, %v1558
      %s1568 = scalar_lea.vmem %s5, 160
      %v1569 = vld [vmem:[%s1568] sm:$0xff]
      %v1570 = vld [vmem:[%s1568 + $0x8] sm:$0xff]
      %v1571 = vld [vmem:[%s1568 + $0x10] sm:$0xff]
      %v1572 = vld [vmem:[%s1568 + $0x18] sm:$0xff]
      %1573 = vst [vmem:[#allocation1] ss:$2 sm:$0xff] %v612
      %v1574 = vld.sshfl [vmem:[#allocation1] sm:$0xff pattern:$0x75316420]
      %v1575 = vld.sshfl [vmem:[#allocation1 + $0x8] sm:$0xff pattern:$0x75316420]
      %1576 = vrot.lane.b32.xlu0 %v1574, 127
      %v1577 = vpop.permute.xlu0 %1576
      %1578 = vrot.lane.b32.xlu0 %v1575, 127
      %v1579 = vpop.permute.xlu0 %1578
      %vm1580 = vcmask 1039360
      %v1581 = vsel %vm1580, %v1577, %v1579
      %v1584 = vsel %vm1580, %v1579, 0.0
      %v1585 = vsel %vm1018, %v1581, 0.0
      %v1586 = vsel %vm1019, %v1584, 0.0
      %v1588 = vsel %vm729, %v1569, 0
      %v1591 = vsel %vm729, %v1570, 0
      %v1594 = vsel %vm729, %v1571, 0
      %v1597 = vsel %vm729, %v1572, 0
      %v1600 = vsel %vm742, %v1585, 0
      %v1603 = vsel %vm742, %v1586, 0
      %1605 = vmatpush.msra.mxu0 0.0
      %1606 = vmatpush.msra.mxu0 0.0
      %1607 = vmatpush.msra.mxu0 0.0
      %1608 = vmatpush.msra.mxu0 0.0
      %1609 = vmatpush.msra.mxu0 0.0
      %1610 = vmatpush.msra.mxu0 0.0
      %1611 = vmatpush.msra.mxu0 0.0
      %1612 = vmatpush.msra.mxu0 0.0
      %1613 = vmatpush.msra.mxu0 0.0
      %1614 = vmatpush.msra.mxu0 0.0
      %1615 = vmatpush.msra.mxu0 0.0
      %1616 = vmatpush.msra.mxu0 0.0
      %1617 = vmatpush.msra.mxu0 0.0
      %1618 = vmatpush.msra.mxu0 0.0
      %1619 = vmatpush.msra.mxu0 0.0
      %1620 = vmatpush.msra.mxu0 %v1600
      %1621 = vmatmul.f32.gmra.mxu0 %v1588
      %v1622 = vpop.f32.mrf.mxu0
      %v1623 = vadd.f32 0.0, %v1622
      %1624 = vmatmul.f32.gmra.mxu0 %v1591
      %v1625 = vpop.f32.mrf.mxu0
      %v1626 = vadd.f32 0.0, %v1625
      %1627 = vmatmul.f32.gmra.mxu0 %v1594
      %v1628 = vpop.f32.mrf.mxu0
      %v1629 = vadd.f32 0.0, %v1628
      %1630 = vmatmul.f32.gmra.mxu0 %v1597
      %v1631 = vpop.f32.mrf.mxu0
      %v1632 = vadd.f32 0.0, %v1631
      %1633 = vdwg.mxu0
      %1634 = vmatpush.msra.mxu0 0.0
      %1635 = vmatpush.msra.mxu0 0.0
      %1636 = vmatpush.msra.mxu0 0.0
      %1637 = vmatpush.msra.mxu0 0.0
      %1638 = vmatpush.msra.mxu0 0.0
      %1639 = vmatpush.msra.mxu0 0.0
      %1640 = vmatpush.msra.mxu0 0.0
      %1641 = vmatpush.msra.mxu0 0.0
      %1642 = vmatpush.msra.mxu0 0.0
      %1643 = vmatpush.msra.mxu0 0.0
      %1644 = vmatpush.msra.mxu0 0.0
      %1645 = vmatpush.msra.mxu0 0.0
      %1646 = vmatpush.msra.mxu0 0.0
      %1647 = vmatpush.msra.mxu0 0.0
      %1648 = vmatpush.msra.mxu0 0.0
      %1649 = vmatpush.msra.mxu0 %v1603
      %1650 = vmatmul.f32.gmra.mxu0 %v1588
      %v1651 = vpop.f32.mrf.mxu0
      %v1652 = vadd.f32 0.0, %v1651
      %1653 = vmatmul.f32.gmra.mxu0 %v1591
      %v1654 = vpop.f32.mrf.mxu0
      %v1655 = vadd.f32 0.0, %v1654
      %1656 = vmatmul.f32.gmra.mxu0 %v1594
      %v1657 = vpop.f32.mrf.mxu0
      %v1658 = vadd.f32 0.0, %v1657
      %1659 = vmatmul.f32.gmra.mxu0 %v1597
      %v1660 = vpop.f32.mrf.mxu0
      %v1661 = vadd.f32 0.0, %v1660
      %1662 = vdwg.mxu0
      %v1663 = vadd.f32 %v1560, %v1623
      %v1664 = vadd.f32 %v1561, %v1652
      %v1665 = vadd.f32 %v1562, %v1626
      %v1666 = vadd.f32 %v1563, %v1655
      %v1667 = vadd.f32 %v1564, %v1629
      %v1668 = vadd.f32 %v1565, %v1658
      %v1669 = vadd.f32 %v1566, %v1632
      %v1670 = vadd.f32 %v1567, %v1661
      %s1671 = scalar_lea.vmem %s6, 160
      %v1672 = vld [vmem:[%s1671] sm:$0xff]
      %v1673 = vld [vmem:[%s1671 + $0x8] sm:$0xff]
      %v1674 = vld [vmem:[%s1671 + $0x10] sm:$0xff]
      %v1675 = vld [vmem:[%s1671 + $0x18] sm:$0xff]
      %1676 = vrot.lane.b32.xlu0 %v613, 127
      %v1677 = vpop.permute.xlu0 %1676
      %1678 = vrot.lane.b32.xlu0 %v614, 127
      %v1679 = vpop.permute.xlu0 %1678
      %v1680 = vsel %vm1580, %v1677, %v1679
      %v1683 = vsel %vm1580, %v1679, 0.0
      %v1684 = vsel %vm1018, %v1680, 0.0
      %v1685 = vsel %vm1019, %v1683, 0.0
      %v1687 = vsel %vm658, %v1672, 0
      %v1690 = vsel %vm658, %v1673, 0
      %v1693 = vsel %vm658, %v1674, 0
      %v1696 = vsel %vm658, %v1675, 0
      %1698 = vmatpush.msra.mxu0 0.0
      %1699 = vmatpush.msra.mxu0 0.0
      %1700 = vmatpush.msra.mxu0 0.0
      %1701 = vmatpush.msra.mxu0 0.0
      %1702 = vmatpush.msra.mxu0 0.0
      %1703 = vmatpush.msra.mxu0 0.0
      %1704 = vmatpush.msra.mxu0 0.0
      %1705 = vmatpush.msra.mxu0 0.0
      %1706 = vmatpush.msra.mxu0 0.0
      %1707 = vmatpush.msra.mxu0 0.0
      %1708 = vmatpush.msra.mxu0 0.0
      %1709 = vmatpush.msra.mxu0 0.0
      %1710 = vmatpush.msra.mxu0 0.0
      %1711 = vmatpush.msra.mxu0 0.0
      %1712 = vmatpush.msra.mxu0 0.0
      %1713 = vmatpush.msra.mxu0 %v1684
      %1714 = vmatmul.f32.gmra.mxu0 %v1687
      %v1715 = vpop.f32.mrf.mxu0
      %v1716 = vadd.f32 0.0, %v1715
      %1717 = vmatmul.f32.gmra.mxu0 %v1690
      %v1718 = vpop.f32.mrf.mxu0
      %v1719 = vadd.f32 0.0, %v1718
      %1720 = vmatmul.f32.gmra.mxu0 %v1693
      %v1721 = vpop.f32.mrf.mxu0
      %v1722 = vadd.f32 0.0, %v1721
      %1723 = vmatmul.f32.gmra.mxu0 %v1696
      %v1724 = vpop.f32.mrf.mxu0
      %v1725 = vadd.f32 0.0, %v1724
      %1726 = vdwg.mxu0
      %1727 = vmatpush.msra.mxu0 0.0
      %1728 = vmatpush.msra.mxu0 0.0
      %1729 = vmatpush.msra.mxu0 0.0
      %1730 = vmatpush.msra.mxu0 0.0
      %1731 = vmatpush.msra.mxu0 0.0
      %1732 = vmatpush.msra.mxu0 0.0
      %1733 = vmatpush.msra.mxu0 0.0
      %1734 = vmatpush.msra.mxu0 0.0
      %1735 = vmatpush.msra.mxu0 0.0
      %1736 = vmatpush.msra.mxu0 0.0
      %1737 = vmatpush.msra.mxu0 0.0
      %1738 = vmatpush.msra.mxu0 0.0
      %1739 = vmatpush.msra.mxu0 0.0
      %1740 = vmatpush.msra.mxu0 0.0
      %1741 = vmatpush.msra.mxu0 0.0
      %1742 = vmatpush.msra.mxu0 %v1685
      %1743 = vmatmul.f32.gmra.mxu0 %v1687
      %v1744 = vpop.f32.mrf.mxu0
      %v1745 = vadd.f32 0.0, %v1744
      %1746 = vmatmul.f32.gmra.mxu0 %v1690
      %v1747 = vpop.f32.mrf.mxu0
      %v1748 = vadd.f32 0.0, %v1747
      %1749 = vmatmul.f32.gmra.mxu0 %v1693
      %v1750 = vpop.f32.mrf.mxu0
      %v1751 = vadd.f32 0.0, %v1750
      %1752 = vmatmul.f32.gmra.mxu0 %v1696
      %v1753 = vpop.f32.mrf.mxu0
      %v1754 = vadd.f32 0.0, %v1753
      %1755 = vdwg.mxu0
      %v1756 = vadd.f32 %v1663, %v1716
      %v1757 = vadd.f32 %v1664, %v1745
      %v1758 = vadd.f32 %v1665, %v1719
      %v1759 = vadd.f32 %v1666, %v1748
      %v1760 = vadd.f32 %v1667, %v1722
      %v1761 = vadd.f32 %v1668, %v1751
      %v1762 = vadd.f32 %v1669, %v1725
      %v1763 = vadd.f32 %v1670, %v1754
      %s1764 = scalar_lea.vmem %s5, 192
      %v1765 = vld [vmem:[%s1764] sm:$0xff]
      %v1766 = vld [vmem:[%s1764 + $0x8] sm:$0xff]
      %v1767 = vld [vmem:[%s1764 + $0x10] sm:$0xff]
      %v1768 = vld [vmem:[%s1764 + $0x18] sm:$0xff]
      %1769 = vst [vmem:[#allocation1] ss:$2 sm:$0xff] %v612
      %v1770 = vld.sshfl [vmem:[#allocation1] sm:$0xff pattern:$0x75316420]
      %v1771 = vld.sshfl [vmem:[#allocation1 + $0x8] sm:$0xff pattern:$0x75316420]
      %1772 = vrot.lane.b32.xlu0 %v1770, 113
      %v1773 = vpop.permute.xlu0 %1772
      %1774 = vrot.lane.b32.xlu0 %v1771, 113
      %v1775 = vpop.permute.xlu0 %1774
      %vm1776 = vcmask 924672
      %v1777 = vsel %vm1776, %v1773, %v1775
      %v1780 = vsel %vm1776, %v1775, 0.0
      %v1781 = vsel %vm638, %v1777, 0.0
      %v1782 = vsel %vm639, %v1780, 0.0
      %v1784 = vsel %vm729, %v1765, 0
      %v1787 = vsel %vm729, %v1766, 0
      %v1790 = vsel %vm729, %v1767, 0
      %v1793 = vsel %vm729, %v1768, 0
      %v1796 = vsel %vm742, %v1781, 0
      %v1799 = vsel %vm742, %v1782, 0
      %1801 = vmatpush.msra.mxu0 0.0
      %1802 = vmatpush.msra.mxu0 0.0
      %1803 = vmatpush.msra.mxu0 0.0
      %1804 = vmatpush.msra.mxu0 0.0
      %1805 = vmatpush.msra.mxu0 0.0
      %1806 = vmatpush.msra.mxu0 0.0
      %1807 = vmatpush.msra.mxu0 0.0
      %1808 = vmatpush.msra.mxu0 0.0
      %1809 = vmatpush.msra.mxu0 0.0
      %1810 = vmatpush.msra.mxu0 0.0
      %1811 = vmatpush.msra.mxu0 0.0
      %1812 = vmatpush.msra.mxu0 0.0
      %1813 = vmatpush.msra.mxu0 0.0
      %1814 = vmatpush.msra.mxu0 0.0
      %1815 = vmatpush.msra.mxu0 0.0
      %1816 = vmatpush.msra.mxu0 %v1796
      %1817 = vmatmul.f32.gmra.mxu0 %v1784
      %v1818 = vpop.f32.mrf.mxu0
      %v1819 = vadd.f32 0.0, %v1818
      %1820 = vmatmul.f32.gmra.mxu0 %v1787
      %v1821 = vpop.f32.mrf.mxu0
      %v1822 = vadd.f32 0.0, %v1821
      %1823 = vmatmul.f32.gmra.mxu0 %v1790
      %v1824 = vpop.f32.mrf.mxu0
      %v1825 = vadd.f32 0.0, %v1824
      %1826 = vmatmul.f32.gmra.mxu0 %v1793
      %v1827 = vpop.f32.mrf.mxu0
      %v1828 = vadd.f32 0.0, %v1827
      %1829 = vdwg.mxu0
      %1830 = vmatpush.msra.mxu0 0.0
      %1831 = vmatpush.msra.mxu0 0.0
      %1832 = vmatpush.msra.mxu0 0.0
      %1833 = vmatpush.msra.mxu0 0.0
      %1834 = vmatpush.msra.mxu0 0.0
      %1835 = vmatpush.msra.mxu0 0.0
      %1836 = vmatpush.msra.mxu0 0.0
      %1837 = vmatpush.msra.mxu0 0.0
      %1838 = vmatpush.msra.mxu0 0.0
      %1839 = vmatpush.msra.mxu0 0.0
      %1840 = vmatpush.msra.mxu0 0.0
      %1841 = vmatpush.msra.mxu0 0.0
      %1842 = vmatpush.msra.mxu0 0.0
      %1843 = vmatpush.msra.mxu0 0.0
      %1844 = vmatpush.msra.mxu0 0.0
      %1845 = vmatpush.msra.mxu0 %v1799
      %1846 = vmatmul.f32.gmra.mxu0 %v1784
      %v1847 = vpop.f32.mrf.mxu0
      %v1848 = vadd.f32 0.0, %v1847
      %1849 = vmatmul.f32.gmra.mxu0 %v1787
      %v1850 = vpop.f32.mrf.mxu0
      %v1851 = vadd.f32 0.0, %v1850
      %1852 = vmatmul.f32.gmra.mxu0 %v1790
      %v1853 = vpop.f32.mrf.mxu0
      %v1854 = vadd.f32 0.0, %v1853
      %1855 = vmatmul.f32.gmra.mxu0 %v1793
      %v1856 = vpop.f32.mrf.mxu0
      %v1857 = vadd.f32 0.0, %v1856
      %1858 = vdwg.mxu0
      %v1859 = vadd.f32 %v1756, %v1819
      %v1860 = vadd.f32 %v1757, %v1848
      %v1861 = vadd.f32 %v1758, %v1822
      %v1862 = vadd.f32 %v1759, %v1851
      %v1863 = vadd.f32 %v1760, %v1825
      %v1864 = vadd.f32 %v1761, %v1854
      %v1865 = vadd.f32 %v1762, %v1828
      %v1866 = vadd.f32 %v1763, %v1857
      %s1867 = scalar_lea.vmem %s6, 192
      %v1868 = vld [vmem:[%s1867] sm:$0xff]
      %v1869 = vld [vmem:[%s1867 + $0x8] sm:$0xff]
      %v1870 = vld [vmem:[%s1867 + $0x10] sm:$0xff]
      %v1871 = vld [vmem:[%s1867 + $0x18] sm:$0xff]
      %1872 = vrot.lane.b32.xlu0 %v613, 113
      %v1873 = vpop.permute.xlu0 %1872
      %1874 = vrot.lane.b32.xlu0 %v614, 113
      %v1875 = vpop.permute.xlu0 %1874
      %v1876 = vsel %vm1776, %v1873, %v1875
      %v1879 = vsel %vm1776, %v1875, 0.0
      %v1880 = vsel %vm638, %v1876, 0.0
      %v1881 = vsel %vm639, %v1879, 0.0
      %v1883 = vsel %vm658, %v1868, 0
      %v1886 = vsel %vm658, %v1869, 0
      %v1889 = vsel %vm658, %v1870, 0
      %v1892 = vsel %vm658, %v1871, 0
      %1894 = vmatpush.msra.mxu0 0.0
      %1895 = vmatpush.msra.mxu0 0.0
      %1896 = vmatpush.msra.mxu0 0.0
      %1897 = vmatpush.msra.mxu0 0.0
      %1898 = vmatpush.msra.mxu0 0.0
      %1899 = vmatpush.msra.mxu0 0.0
      %1900 = vmatpush.msra.mxu0 0.0
      %1901 = vmatpush.msra.mxu0 0.0
      %1902 = vmatpush.msra.mxu0 0.0
      %1903 = vmatpush.msra.mxu0 0.0
      %1904 = vmatpush.msra.mxu0 0.0
      %1905 = vmatpush.msra.mxu0 0.0
      %1906 = vmatpush.msra.mxu0 0.0
      %1907 = vmatpush.msra.mxu0 0.0
      %1908 = vmatpush.msra.mxu0 0.0
      %1909 = vmatpush.msra.mxu0 %v1880
      %1910 = vmatmul.f32.gmra.mxu0 %v1883
      %v1911 = vpop.f32.mrf.mxu0
      %v1912 = vadd.f32 0.0, %v1911
      %1913 = vmatmul.f32.gmra.mxu0 %v1886
      %v1914 = vpop.f32.mrf.mxu0
      %v1915 = vadd.f32 0.0, %v1914
      %1916 = vmatmul.f32.gmra.mxu0 %v1889
      %v1917 = vpop.f32.mrf.mxu0
      %v1918 = vadd.f32 0.0, %v1917
      %1919 = vmatmul.f32.gmra.mxu0 %v1892
      %v1920 = vpop.f32.mrf.mxu0
      %v1921 = vadd.f32 0.0, %v1920
      %1922 = vdwg.mxu0
      %1923 = vmatpush.msra.mxu0 0.0
      %1924 = vmatpush.msra.mxu0 0.0
      %1925 = vmatpush.msra.mxu0 0.0
      %1926 = vmatpush.msra.mxu0 0.0
      %1927 = vmatpush.msra.mxu0 0.0
      %1928 = vmatpush.msra.mxu0 0.0
      %1929 = vmatpush.msra.mxu0 0.0
      %1930 = vmatpush.msra.mxu0 0.0
      %1931 = vmatpush.msra.mxu0 0.0
      %1932 = vmatpush.msra.mxu0 0.0
      %1933 = vmatpush.msra.mxu0 0.0
      %1934 = vmatpush.msra.mxu0 0.0
      %1935 = vmatpush.msra.mxu0 0.0
      %1936 = vmatpush.msra.mxu0 0.0
      %1937 = vmatpush.msra.mxu0 0.0
      %1938 = vmatpush.msra.mxu0 %v1881
      %1939 = vmatmul.f32.gmra.mxu0 %v1883
      %v1940 = vpop.f32.mrf.mxu0
      %v1941 = vadd.f32 0.0, %v1940
      %1942 = vmatmul.f32.gmra.mxu0 %v1886
      %v1943 = vpop.f32.mrf.mxu0
      %v1944 = vadd.f32 0.0, %v1943
      %1945 = vmatmul.f32.gmra.mxu0 %v1889
      %v1946 = vpop.f32.mrf.mxu0
      %v1947 = vadd.f32 0.0, %v1946
      %1948 = vmatmul.f32.gmra.mxu0 %v1892
      %v1949 = vpop.f32.mrf.mxu0
      %v1950 = vadd.f32 0.0, %v1949
      %1951 = vdwg.mxu0
      %v1952 = vadd.f32 %v1859, %v1912
      %v1953 = vadd.f32 %v1860, %v1941
      %v1954 = vadd.f32 %v1861, %v1915
      %v1955 = vadd.f32 %v1862, %v1944
      %v1956 = vadd.f32 %v1863, %v1918
      %v1957 = vadd.f32 %v1864, %v1947
      %v1958 = vadd.f32 %v1865, %v1921
      %v1959 = vadd.f32 %v1866, %v1950
      %s1960 = scalar_lea.vmem %s5, 224
      %v1961 = vld [vmem:[%s1960] sm:$0xff]
      %v1962 = vld [vmem:[%s1960 + $0x8] sm:$0xff]
      %v1963 = vld [vmem:[%s1960 + $0x10] sm:$0xff]
      %v1964 = vld [vmem:[%s1960 + $0x18] sm:$0xff]
      %1965 = vst [vmem:[#allocation1] ss:$2 sm:$0xff] %v612
      %v1966 = vld.sshfl [vmem:[#allocation1] sm:$0xff pattern:$0x75316420]
      %v1967 = vld.sshfl [vmem:[#allocation1 + $0x8] sm:$0xff pattern:$0x75316420]
      %1968 = vrot.lane.b32.xlu0 %v1966, 112
      %v1969 = vpop.permute.xlu0 %1968
      %1970 = vrot.lane.b32.xlu0 %v1967, 112
      %v1971 = vpop.permute.xlu0 %1970
      %vm1972 = vcmask 916480
      %v1973 = vsel %vm1972, %v1969, %v1971
      %v1975 = vsel %vm1972, %v1971, 0.0
      %v1977 = vsel %vm729, %v1961, 0
      %v1980 = vsel %vm729, %v1962, 0
      %v1983 = vsel %vm729, %v1963, 0
      %v1986 = vsel %vm729, %v1964, 0
      %v1988 = vsel %vm742, %v1973, 0
      %v1991 = vsel %vm742, %v1975, 0
      %1993 = vmatpush.msra.mxu0 0.0
      %1994 = vmatpush.msra.mxu0 0.0
      %1995 = vmatpush.msra.mxu0 0.0
      %1996 = vmatpush.msra.mxu0 0.0
      %1997 = vmatpush.msra.mxu0 0.0
      %1998 = vmatpush.msra.mxu0 0.0
      %1999 = vmatpush.msra.mxu0 0.0
      %2000 = vmatpush.msra.mxu0 0.0
      %2001 = vmatpush.msra.mxu0 0.0
      %2002 = vmatpush.msra.mxu0 0.0
      %2003 = vmatpush.msra.mxu0 0.0
      %2004 = vmatpush.msra.mxu0 0.0
      %2005 = vmatpush.msra.mxu0 0.0
      %2006 = vmatpush.msra.mxu0 0.0
      %2007 = vmatpush.msra.mxu0 0.0
      %2008 = vmatpush.msra.mxu0 %v1988
      %2009 = vmatmul.f32.gmra.mxu0 %v1977
      %v2010 = vpop.f32.mrf.mxu0
      %v2011 = vadd.f32 0.0, %v2010
      %2012 = vmatmul.f32.gmra.mxu0 %v1980
      %v2013 = vpop.f32.mrf.mxu0
      %v2014 = vadd.f32 0.0, %v2013
      %2015 = vmatmul.f32.gmra.mxu0 %v1983
      %v2016 = vpop.f32.mrf.mxu0
      %v2017 = vadd.f32 0.0, %v2016
      %2018 = vmatmul.f32.gmra.mxu0 %v1986
      %v2019 = vpop.f32.mrf.mxu0
      %v2020 = vadd.f32 0.0, %v2019
      %2021 = vdwg.mxu0
      %2022 = vmatpush.msra.mxu0 0.0
      %2023 = vmatpush.msra.mxu0 0.0
      %2024 = vmatpush.msra.mxu0 0.0
      %2025 = vmatpush.msra.mxu0 0.0
      %2026 = vmatpush.msra.mxu0 0.0
      %2027 = vmatpush.msra.mxu0 0.0
      %2028 = vmatpush.msra.mxu0 0.0
      %2029 = vmatpush.msra.mxu0 0.0
      %2030 = vmatpush.msra.mxu0 0.0
      %2031 = vmatpush.msra.mxu0 0.0
      %2032 = vmatpush.msra.mxu0 0.0
      %2033 = vmatpush.msra.mxu0 0.0
      %2034 = vmatpush.msra.mxu0 0.0
      %2035 = vmatpush.msra.mxu0 0.0
      %2036 = vmatpush.msra.mxu0 0.0
      %2037 = vmatpush.msra.mxu0 %v1991
      %2038 = vmatmul.f32.gmra.mxu0 %v1977
      %v2039 = vpop.f32.mrf.mxu0
      %v2040 = vadd.f32 0.0, %v2039
      %2041 = vmatmul.f32.gmra.mxu0 %v1980
      %v2042 = vpop.f32.mrf.mxu0
      %v2043 = vadd.f32 0.0, %v2042
      %2044 = vmatmul.f32.gmra.mxu0 %v1983
      %v2045 = vpop.f32.mrf.mxu0
      %v2046 = vadd.f32 0.0, %v2045
      %2047 = vmatmul.f32.gmra.mxu0 %v1986
      %v2048 = vpop.f32.mrf.mxu0
      %v2049 = vadd.f32 0.0, %v2048
      %2050 = vdwg.mxu0
      %v2051 = vadd.f32 %v1952, %v2011
      %v2052 = vadd.f32 %v1953, %v2040
      %v2053 = vadd.f32 %v1954, %v2014
      %v2054 = vadd.f32 %v1955, %v2043
      %v2055 = vadd.f32 %v1956, %v2017
      %v2056 = vadd.f32 %v1957, %v2046
      %v2057 = vadd.f32 %v1958, %v2020
      %v2058 = vadd.f32 %v1959, %v2049
      %s2059 = scalar_lea.vmem %s6, 224
      %v2060 = vld [vmem:[%s2059] sm:$0xff]
      %v2061 = vld [vmem:[%s2059 + $0x8] sm:$0xff]
      %v2062 = vld [vmem:[%s2059 + $0x10] sm:$0xff]
      %v2063 = vld [vmem:[%s2059 + $0x18] sm:$0xff]
      %2064 = vrot.lane.b32.xlu0 %v613, 112
      %v2065 = vpop.permute.xlu0 %2064
      %2066 = vrot.lane.b32.xlu0 %v614, 112
      %v2067 = vpop.permute.xlu0 %2066
      %v2068 = vsel %vm1972, %v2065, %v2067
      %v2071 = vsel %vm1972, %v2067, 0.0
      %v2073 = vsel %vm658, %v2060, 0
      %v2076 = vsel %vm658, %v2061, 0
      %v2079 = vsel %vm658, %v2062, 0
      %v2082 = vsel %vm658, %v2063, 0
      %2084 = vmatpush.msra.mxu0 0.0
      %2085 = vmatpush.msra.mxu0 0.0
      %2086 = vmatpush.msra.mxu0 0.0
      %2087 = vmatpush.msra.mxu0 0.0
      %2088 = vmatpush.msra.mxu0 0.0
      %2089 = vmatpush.msra.mxu0 0.0
      %2090 = vmatpush.msra.mxu0 0.0
      %2091 = vmatpush.msra.mxu0 0.0
      %2092 = vmatpush.msra.mxu0 0.0
      %2093 = vmatpush.msra.mxu0 0.0
      %2094 = vmatpush.msra.mxu0 0.0
      %2095 = vmatpush.msra.mxu0 0.0
      %2096 = vmatpush.msra.mxu0 0.0
      %2097 = vmatpush.msra.mxu0 0.0
      %2098 = vmatpush.msra.mxu0 0.0
      %2099 = vmatpush.msra.mxu0 %v2068
      %2100 = vmatmul.f32.gmra.mxu0 %v2073
      %v2101 = vpop.f32.mrf.mxu0
      %v2102 = vadd.f32 0.0, %v2101
      %2103 = vmatmul.f32.gmra.mxu0 %v2076
      %v2104 = vpop.f32.mrf.mxu0
      %v2105 = vadd.f32 0.0, %v2104
      %2106 = vmatmul.f32.gmra.mxu0 %v2079
      %v2107 = vpop.f32.mrf.mxu0
      %v2108 = vadd.f32 0.0, %v2107
      %2109 = vmatmul.f32.gmra.mxu0 %v2082
      %v2110 = vpop.f32.mrf.mxu0
      %v2111 = vadd.f32 0.0, %v2110
      %2112 = vdwg.mxu0
      %2113 = vmatpush.msra.mxu0 0.0
      %2114 = vmatpush.msra.mxu0 0.0
      %2115 = vmatpush.msra.mxu0 0.0
      %2116 = vmatpush.msra.mxu0 0.0
      %2117 = vmatpush.msra.mxu0 0.0
      %2118 = vmatpush.msra.mxu0 0.0
      %2119 = vmatpush.msra.mxu0 0.0
      %2120 = vmatpush.msra.mxu0 0.0
      %2121 = vmatpush.msra.mxu0 0.0
      %2122 = vmatpush.msra.mxu0 0.0
      %2123 = vmatpush.msra.mxu0 0.0
      %2124 = vmatpush.msra.mxu0 0.0
      %2125 = vmatpush.msra.mxu0 0.0
      %2126 = vmatpush.msra.mxu0 0.0
      %2127 = vmatpush.msra.mxu0 0.0
      %2128 = vmatpush.msra.mxu0 %v2071
      %2129 = vmatmul.f32.gmra.mxu0 %v2073
      %v2130 = vpop.f32.mrf.mxu0
      %v2131 = vadd.f32 0.0, %v2130
      %2132 = vmatmul.f32.gmra.mxu0 %v2076
      %v2133 = vpop.f32.mrf.mxu0
      %v2134 = vadd.f32 0.0, %v2133
      %2135 = vmatmul.f32.gmra.mxu0 %v2079
      %v2136 = vpop.f32.mrf.mxu0
      %v2137 = vadd.f32 0.0, %v2136
      %2138 = vmatmul.f32.gmra.mxu0 %v2082
      %v2139 = vpop.f32.mrf.mxu0
      %v2140 = vadd.f32 0.0, %v2139
      %2141 = vdwg.mxu0
      %v2142 = vadd.f32 %v2051, %v2102
      %v2143 = vadd.f32 %v2052, %v2131
      %v2144 = vadd.f32 %v2053, %v2105
      %v2145 = vadd.f32 %v2054, %v2134
      %v2146 = vadd.f32 %v2055, %v2108
      %v2147 = vadd.f32 %v2056, %v2137
      %v2148 = vadd.f32 %v2057, %v2111
      %v2149 = vadd.f32 %v2058, %v2140
      %s2150 = scalar_lea.vmem %s5, 256
      %v2151 = vld [vmem:[%s2150] sm:$0xff]
      %v2152 = vld [vmem:[%s2150 + $0x8] sm:$0xff]
      %v2153 = vld [vmem:[%s2150 + $0x10] sm:$0xff]
      %v2154 = vld [vmem:[%s2150 + $0x18] sm:$0xff]
      %2155 = vst [vmem:[#allocation1] ss:$2 sm:$0xff] %v612
      %v2156 = vld.sshfl [vmem:[#allocation1] sm:$0xff pattern:$0x75316420]
      %v2157 = vld.sshfl [vmem:[#allocation1 + $0x8] sm:$0xff pattern:$0x75316420]
      %2158 = vrot.lane.b32.xlu0 %v2156, 111
      %v2159 = vpop.permute.xlu0 %2158
      %2160 = vrot.lane.b32.xlu0 %v2157, 111
      %v2161 = vpop.permute.xlu0 %2160
      %vm2162 = vcmask 908288
      %v2163 = vsel %vm2162, %v2159, %v2161
      %v2166 = vsel %vm2162, %v2161, 0.0
      %v2167 = vsel %vm1018, %v2163, 0.0
      %v2168 = vsel %vm1019, %v2166, 0.0
      %v2170 = vsel %vm729, %v2151, 0
      %v2173 = vsel %vm729, %v2152, 0
      %v2176 = vsel %vm729, %v2153, 0
      %v2179 = vsel %vm729, %v2154, 0
      %v2182 = vsel %vm742, %v2167, 0
      %v2185 = vsel %vm742, %v2168, 0
      %2187 = vmatpush.msra.mxu0 0.0
      %2188 = vmatpush.msra.mxu0 0.0
      %2189 = vmatpush.msra.mxu0 0.0
      %2190 = vmatpush.msra.mxu0 0.0
      %2191 = vmatpush.msra.mxu0 0.0
      %2192 = vmatpush.msra.mxu0 0.0
      %2193 = vmatpush.msra.mxu0 0.0
      %2194 = vmatpush.msra.mxu0 0.0
      %2195 = vmatpush.msra.mxu0 0.0
      %2196 = vmatpush.msra.mxu0 0.0
      %2197 = vmatpush.msra.mxu0 0.0
      %2198 = vmatpush.msra.mxu0 0.0
      %2199 = vmatpush.msra.mxu0 0.0
      %2200 = vmatpush.msra.mxu0 0.0
      %2201 = vmatpush.msra.mxu0 0.0
      %2202 = vmatpush.msra.mxu0 %v2182
      %2203 = vmatmul.f32.gmra.mxu0 %v2170
      %v2204 = vpop.f32.mrf.mxu0
      %v2205 = vadd.f32 0.0, %v2204
      %2206 = vmatmul.f32.gmra.mxu0 %v2173
      %v2207 = vpop.f32.mrf.mxu0
      %v2208 = vadd.f32 0.0, %v2207
      %2209 = vmatmul.f32.gmra.mxu0 %v2176
      %v2210 = vpop.f32.mrf.mxu0
      %v2211 = vadd.f32 0.0, %v2210
      %2212 = vmatmul.f32.gmra.mxu0 %v2179
      %v2213 = vpop.f32.mrf.mxu0
      %v2214 = vadd.f32 0.0, %v2213
      %2215 = vdwg.mxu0
      %2216 = vmatpush.msra.mxu0 0.0
      %2217 = vmatpush.msra.mxu0 0.0
      %2218 = vmatpush.msra.mxu0 0.0
      %2219 = vmatpush.msra.mxu0 0.0
      %2220 = vmatpush.msra.mxu0 0.0
      %2221 = vmatpush.msra.mxu0 0.0
      %2222 = vmatpush.msra.mxu0 0.0
      %2223 = vmatpush.msra.mxu0 0.0
      %2224 = vmatpush.msra.mxu0 0.0
      %2225 = vmatpush.msra.mxu0 0.0
      %2226 = vmatpush.msra.mxu0 0.0
      %2227 = vmatpush.msra.mxu0 0.0
      %2228 = vmatpush.msra.mxu0 0.0
      %2229 = vmatpush.msra.mxu0 0.0
      %2230 = vmatpush.msra.mxu0 0.0
      %2231 = vmatpush.msra.mxu0 %v2185
      %2232 = vmatmul.f32.gmra.mxu0 %v2170
      %v2233 = vpop.f32.mrf.mxu0
      %v2234 = vadd.f32 0.0, %v2233
      %2235 = vmatmul.f32.gmra.mxu0 %v2173
      %v2236 = vpop.f32.mrf.mxu0
      %v2237 = vadd.f32 0.0, %v2236
      %2238 = vmatmul.f32.gmra.mxu0 %v2176
      %v2239 = vpop.f32.mrf.mxu0
      %v2240 = vadd.f32 0.0, %v2239
      %2241 = vmatmul.f32.gmra.mxu0 %v2179
      %v2242 = vpop.f32.mrf.mxu0
      %v2243 = vadd.f32 0.0, %v2242
      %2244 = vdwg.mxu0
      %v2245 = vadd.f32 %v2142, %v2205
      %v2246 = vadd.f32 %v2143, %v2234
      %v2247 = vadd.f32 %v2144, %v2208
      %v2248 = vadd.f32 %v2145, %v2237
      %v2249 = vadd.f32 %v2146, %v2211
      %v2250 = vadd.f32 %v2147, %v2240
      %v2251 = vadd.f32 %v2148, %v2214
      %v2252 = vadd.f32 %v2149, %v2243
      %s2253 = scalar_lea.vmem %s6, 256
      %v2254 = vld [vmem:[%s2253] sm:$0xff]
      %v2255 = vld [vmem:[%s2253 + $0x8] sm:$0xff]
      %v2256 = vld [vmem:[%s2253 + $0x10] sm:$0xff]
      %v2257 = vld [vmem:[%s2253 + $0x18] sm:$0xff]
      %2258 = vrot.lane.b32.xlu0 %v613, 111
      %v2259 = vpop.permute.xlu0 %2258
      %2260 = vrot.lane.b32.xlu0 %v614, 111
      %v2261 = vpop.permute.xlu0 %2260
      %v2262 = vsel %vm2162, %v2259, %v2261
      %v2265 = vsel %vm2162, %v2261, 0.0
      %v2266 = vsel %vm1018, %v2262, 0.0
      %v2267 = vsel %vm1019, %v2265, 0.0
      %v2269 = vsel %vm658, %v2254, 0
      %v2272 = vsel %vm658, %v2255, 0
      %v2275 = vsel %vm658, %v2256, 0
      %v2278 = vsel %vm658, %v2257, 0
      %2280 = vmatpush.msra.mxu0 0.0
      %2281 = vmatpush.msra.mxu0 0.0
      %2282 = vmatpush.msra.mxu0 0.0
      %2283 = vmatpush.msra.mxu0 0.0
      %2284 = vmatpush.msra.mxu0 0.0
      %2285 = vmatpush.msra.mxu0 0.0
      %2286 = vmatpush.msra.mxu0 0.0
      %2287 = vmatpush.msra.mxu0 0.0
      %2288 = vmatpush.msra.mxu0 0.0
      %2289 = vmatpush.msra.mxu0 0.0
      %2290 = vmatpush.msra.mxu0 0.0
      %2291 = vmatpush.msra.mxu0 0.0
      %2292 = vmatpush.msra.mxu0 0.0
      %2293 = vmatpush.msra.mxu0 0.0
      %2294 = vmatpush.msra.mxu0 0.0
      %2295 = vmatpush.msra.mxu0 %v2266
      %2296 = vmatmul.f32.gmra.mxu0 %v2269
      %v2297 = vpop.f32.mrf.mxu0
      %v2298 = vadd.f32 0.0, %v2297
      %2299 = vmatmul.f32.gmra.mxu0 %v2272
      %v2300 = vpop.f32.mrf.mxu0
      %v2301 = vadd.f32 0.0, %v2300
      %2302 = vmatmul.f32.gmra.mxu0 %v2275
      %v2303 = vpop.f32.mrf.mxu0
      %v2304 = vadd.f32 0.0, %v2303
      %2305 = vmatmul.f32.gmra.mxu0 %v2278
      %v2306 = vpop.f32.mrf.mxu0
      %v2307 = vadd.f32 0.0, %v2306
      %2308 = vdwg.mxu0
      %2309 = vmatpush.msra.mxu0 0.0
      %2310 = vmatpush.msra.mxu0 0.0
      %2311 = vmatpush.msra.mxu0 0.0
      %2312 = vmatpush.msra.mxu0 0.0
      %2313 = vmatpush.msra.mxu0 0.0
      %2314 = vmatpush.msra.mxu0 0.0
      %2315 = vmatpush.msra.mxu0 0.0
      %2316 = vmatpush.msra.mxu0 0.0
      %2317 = vmatpush.msra.mxu0 0.0
      %2318 = vmatpush.msra.mxu0 0.0
      %2319 = vmatpush.msra.mxu0 0.0
      %2320 = vmatpush.msra.mxu0 0.0
      %2321 = vmatpush.msra.mxu0 0.0
      %2322 = vmatpush.msra.mxu0 0.0
      %2323 = vmatpush.msra.mxu0 0.0
      %2324 = vmatpush.msra.mxu0 %v2267
      %2325 = vmatmul.f32.gmra.mxu0 %v2269
      %v2326 = vpop.f32.mrf.mxu0
      %v2327 = vadd.f32 0.0, %v2326
      %2328 = vmatmul.f32.gmra.mxu0 %v2272
      %v2329 = vpop.f32.mrf.mxu0
      %v2330 = vadd.f32 0.0, %v2329
      %2331 = vmatmul.f32.gmra.mxu0 %v2275
      %v2332 = vpop.f32.mrf.mxu0
      %v2333 = vadd.f32 0.0, %v2332
      %2334 = vmatmul.f32.gmra.mxu0 %v2278
      %v2335 = vpop.f32.mrf.mxu0
      %v2336 = vadd.f32 0.0, %v2335
      %2337 = vdwg.mxu0
      %v2338 = vadd.f32 %v2245, %v2298
      %v2339 = vadd.f32 %v2246, %v2327
      %v2340 = vadd.f32 %v2247, %v2301
      %v2341 = vadd.f32 %v2248, %v2330
      %v2342 = vadd.f32 %v2249, %v2304
      %v2343 = vadd.f32 %v2250, %v2333
      %v2344 = vadd.f32 %v2251, %v2307
      %v2345 = vadd.f32 %v2252, %v2336
      %v2346 = vld [vmem:[%s7] sm:$0xff]
      %v2347 = vld [vmem:[%s7 + $0x8] sm:$0xff]
      %v2348 = vld [vmem:[%s7 + $0x10] sm:$0xff]
      %v2349 = vld [vmem:[%s7 + $0x18] sm:$0xff]
      %2351 = vset.pattern.permute.xlu0 0
      %2352 = vperm.xlu0 %2351, %v2346
      %v2353 = vpop.permute.xlu0 %2352
      %2356 = vset.pattern.permute.xlu0 0
      %2357 = vperm.xlu0 %2356, %v2347
      %v2358 = vpop.permute.xlu0 %2357
      %2361 = vset.pattern.permute.xlu0 0
      %2362 = vperm.xlu0 %2361, %v2348
      %v2363 = vpop.permute.xlu0 %2362
      %2366 = vset.pattern.permute.xlu0 0
      %2367 = vperm.xlu0 %2366, %v2349
      %v2368 = vpop.permute.xlu0 %2367
      %v2370 = vadd.f32 %v2338, %v2353
      %v2371 = vadd.f32 %v2339, %v2353
      %v2372 = vadd.f32 %v2340, %v2358
      %v2373 = vadd.f32 %v2341, %v2358
      %v2374 = vadd.f32 %v2342, %v2363
      %v2375 = vadd.f32 %v2343, %v2363
      %v2376 = vadd.f32 %v2344, %v2368
      %v2377 = vadd.f32 %v2345, %v2368
      %v2378 = vxor.u32 %v2370, 2147483648
      %v2379 = vxor.u32 %v2371, 2147483648
      %v2380 = vmul.f32 %v2378, 1.442695
      %v2381 = vpow.pop %v2380
      %v2382 = vmul.f32 %v2379, 1.442695
      %v2383 = vpow.pop %v2382
      %v2384 = vadd.f32 %v2381, 1.0
      %v2385 = vadd.f32 %v2383, 1.0
      %v2386 = vrcp.pop %v2384
      %v2387 = vmul.f32 %v2384, %v2386
      %v2388 = vsub.f32 1.0, %v2387
      %v2389 = vmul.f32 %v2386, %v2388
      %v2390 = vadd.f32 %v2386, %v2389
      %vm2391 = vweird.f32 %v2384
      %vm2392 = vweird.f32 %v2386
      %vm2393 = vmor %vm2391, %vm2392
      %v2394 = vsel %vm2393, %v2386, %v2390
      %v2395 = vand.u32 2147483647, %v2384
      %vm2396 = vcmp.eq.f32.partialorder %v2395, 8.507059e+37
      %v2397 = vand.u32 %v2384, 2147483648
      %v2398 = vor.u32 1.1754944e-38, %v2397
      %v2399 = vsel %vm2396, %v2398, %v2394
      %v2400 = vmul.f32 1.0, %v2399
      %v2401 = vrcp.pop %v2385
      %v2402 = vmul.f32 %v2385, %v2401
      %v2403 = vsub.f32 1.0, %v2402
      %v2404 = vmul.f32 %v2401, %v2403
      %v2405 = vadd.f32 %v2401, %v2404
      %vm2406 = vweird.f32 %v2385
      %vm2407 = vweird.f32 %v2401
      %vm2408 = vmor %vm2406, %vm2407
      %v2409 = vsel %vm2408, %v2401, %v2405
      %v2410 = vand.u32 2147483647, %v2385
      %vm2411 = vcmp.eq.f32.partialorder %v2410, 8.507059e+37
      %v2412 = vand.u32 %v2385, 2147483648
      %v2413 = vor.u32 1.1754944e-38, %v2412
      %v2414 = vsel %vm2411, %v2413, %v2409
      %v2415 = vmul.f32 1.0, %v2414
      %v2416 = vxor.u32 %v2372, 2147483648
      %v2417 = vxor.u32 %v2373, 2147483648
      %v2418 = vmul.f32 %v2416, 1.442695
      %v2419 = vpow.pop %v2418
      %v2420 = vmul.f32 %v2417, 1.442695
      %v2421 = vpow.pop %v2420
      %v2422 = vadd.f32 %v2419, 1.0
      %v2423 = vadd.f32 %v2421, 1.0
      %v2424 = vrcp.pop %v2422
      %v2425 = vmul.f32 %v2422, %v2424
      %v2426 = vsub.f32 1.0, %v2425
      %v2427 = vmul.f32 %v2424, %v2426
      %v2428 = vadd.f32 %v2424, %v2427
      %vm2429 = vweird.f32 %v2422
      %vm2430 = vweird.f32 %v2424
      %vm2431 = vmor %vm2429, %vm2430
      %v2432 = vsel %vm2431, %v2424, %v2428
      %v2433 = vand.u32 2147483647, %v2422
      %vm2434 = vcmp.eq.f32.partialorder %v2433, 8.507059e+37
      %v2435 = vand.u32 %v2422, 2147483648
      %v2436 = vor.u32 1.1754944e-38, %v2435
      %v2437 = vsel %vm2434, %v2436, %v2432
      %v2438 = vmul.f32 1.0, %v2437
      %v2439 = vrcp.pop %v2423
      %v2440 = vmul.f32 %v2423, %v2439
      %v2441 = vsub.f32 1.0, %v2440
      %v2442 = vmul.f32 %v2439, %v2441
      %v2443 = vadd.f32 %v2439, %v2442
      %vm2444 = vweird.f32 %v2423
      %vm2445 = vweird.f32 %v2439
      %vm2446 = vmor %vm2444, %vm2445
      %v2447 = vsel %vm2446, %v2439, %v2443
      %v2448 = vand.u32 2147483647, %v2423
      %vm2449 = vcmp.eq.f32.partialorder %v2448, 8.507059e+37
      %v2450 = vand.u32 %v2423, 2147483648
      %v2451 = vor.u32 1.1754944e-38, %v2450
      %v2452 = vsel %vm2449, %v2451, %v2447
      %v2453 = vmul.f32 1.0, %v2452
      %v2454 = vxor.u32 %v2374, 2147483648
      %v2455 = vxor.u32 %v2375, 2147483648
      %v2456 = vmul.f32 %v2454, 1.442695
      %v2457 = vpow.pop %v2456
      %v2458 = vmul.f32 %v2455, 1.442695
      %v2459 = vpow.pop %v2458
      %v2460 = vadd.f32 %v2457, 1.0
      %v2461 = vadd.f32 %v2459, 1.0
      %v2462 = vrcp.pop %v2460
      %v2463 = vmul.f32 %v2460, %v2462
      %v2464 = vsub.f32 1.0, %v2463
      %v2465 = vmul.f32 %v2462, %v2464
      %v2466 = vadd.f32 %v2462, %v2465
      %vm2467 = vweird.f32 %v2460
      %vm2468 = vweird.f32 %v2462
      %vm2469 = vmor %vm2467, %vm2468
      %v2470 = vsel %vm2469, %v2462, %v2466
      %v2471 = vand.u32 2147483647, %v2460
      %vm2472 = vcmp.eq.f32.partialorder %v2471, 8.507059e+37
      %v2473 = vand.u32 %v2460, 2147483648
      %v2474 = vor.u32 1.1754944e-38, %v2473
      %v2475 = vsel %vm2472, %v2474, %v2470
      %v2476 = vmul.f32 1.0, %v2475
      %v2477 = vrcp.pop %v2461
      %v2478 = vmul.f32 %v2461, %v2477
      %v2479 = vsub.f32 1.0, %v2478
      %v2480 = vmul.f32 %v2477, %v2479
      %v2481 = vadd.f32 %v2477, %v2480
      %vm2482 = vweird.f32 %v2461
      %vm2483 = vweird.f32 %v2477
      %vm2484 = vmor %vm2482, %vm2483
      %v2485 = vsel %vm2484, %v2477, %v2481
      %v2486 = vand.u32 2147483647, %v2461
      %vm2487 = vcmp.eq.f32.partialorder %v2486, 8.507059e+37
      %v2488 = vand.u32 %v2461, 2147483648
      %v2489 = vor.u32 1.1754944e-38, %v2488
      %v2490 = vsel %vm2487, %v2489, %v2485
      %v2491 = vmul.f32 1.0, %v2490
      %v2492 = vtanh.pop %v2376
      %v2493 = vtanh.pop %v2377
      %v2494 = vmul.f32 %v2438, %v615
      %v2495 = vmul.f32 %v2453, %v616
      %v2496 = vmul.f32 %v2400, %v2492
      %v2497 = vmul.f32 %v2415, %v2493
      %v2498 = vadd.f32 %v2494, %v2496
      %v2499 = vadd.f32 %v2495, %v2497
      %v2500 = vtanh.pop %v2498
      %v2501 = vtanh.pop %v2499
      %v2502 = vmul.f32 %v2476, %v2500
      %v2503 = vmul.f32 %v2491, %v2501
      %2504 = vst [vmem:[%s569] sm:$0xff] %v2502
      %2505 = vst [vmem:[%s569 + $0x8] sm:$0xff] %v2503
      %2506 = vst [vmem:[%s574] sm:$0xff] %v2498
      %2507 = vst [vmem:[%s574 + $0x8] sm:$0xff] %v2499
      %v2508 = vld [vmem:[%s559] sm:$0xff]
      %v2509 = vld [vmem:[%s559 + $0x8] sm:$0xff]
      %v2510 = vld [vmem:[%s564] sm:$0xff]
      %v2511 = vld [vmem:[%s564 + $0x8] sm:$0xff]
      %v2512 = vld [vmem:[%s8] sm:$0xff]
      %v2513 = vld [vmem:[%s8 + $0x8] sm:$0xff]
      %v2514 = vld [vmem:[%s8 + $0x10] sm:$0xff]
      %v2515 = vld [vmem:[%s8 + $0x18] sm:$0xff]
      %2518 = vrot.lane.b32.xlu0 %v2502, 17
      %v2519 = vpop.permute.xlu0 %2518
      %2520 = vrot.lane.b32.xlu0 %v2503, 17
      %v2521 = vpop.permute.xlu0 %2520
      %v2522 = vsel %vm629, %v2519, %v2521
      %v2525 = vsel %vm629, 0.0, %v2519
      %v2526 = vsel %vm638, %v2525, 0.0
      %v2527 = vsel %vm639, %v2522, 0.0
      %v2528 = vld [vmem:[%s9] sm:$0xff]
      %v2529 = vld [vmem:[%s9 + $0x8] sm:$0xff]
      %v2530 = vld [vmem:[%s9 + $0x10] sm:$0xff]
      %v2531 = vld [vmem:[%s9 + $0x18] sm:$0xff]
      %2534 = vrot.lane.b32.xlu0 %v2508, 17
      %v2535 = vpop.permute.xlu0 %2534
      %2536 = vrot.lane.b32.xlu0 %v2509, 17
      %v2537 = vpop.permute.xlu0 %2536
      %v2538 = vsel %vm629, %v2535, %v2537
      %v2541 = vsel %vm629, 0.0, %v2535
      %v2542 = vsel %vm638, %v2541, 0.0
      %v2543 = vsel %vm639, %v2538, 0.0
      %v2545 = vsel %vm658, %v2528, 0
      %v2548 = vsel %vm658, %v2529, 0
      %v2551 = vsel %vm658, %v2530, 0
      %v2554 = vsel %vm658, %v2531, 0
      %2556 = vmatpush.msra.mxu0 0.0
      %2557 = vmatpush.msra.mxu0 0.0
      %2558 = vmatpush.msra.mxu0 0.0
      %2559 = vmatpush.msra.mxu0 0.0
      %2560 = vmatpush.msra.mxu0 0.0
      %2561 = vmatpush.msra.mxu0 0.0
      %2562 = vmatpush.msra.mxu0 0.0
      %2563 = vmatpush.msra.mxu0 0.0
      %2564 = vmatpush.msra.mxu0 0.0
      %2565 = vmatpush.msra.mxu0 0.0
      %2566 = vmatpush.msra.mxu0 0.0
      %2567 = vmatpush.msra.mxu0 0.0
      %2568 = vmatpush.msra.mxu0 0.0
      %2569 = vmatpush.msra.mxu0 0.0
      %2570 = vmatpush.msra.mxu0 0.0
      %2571 = vmatpush.msra.mxu0 %v2542
      %2572 = vmatmul.f32.gmra.mxu0 %v2545
      %v2573 = vpop.f32.mrf.mxu0
      %v2574 = vadd.f32 0.0, %v2573
      %2575 = vmatmul.f32.gmra.mxu0 %v2548
      %v2576 = vpop.f32.mrf.mxu0
      %v2577 = vadd.f32 0.0, %v2576
      %2578 = vmatmul.f32.gmra.mxu0 %v2551
      %v2579 = vpop.f32.mrf.mxu0
      %v2580 = vadd.f32 0.0, %v2579
      %2581 = vmatmul.f32.gmra.mxu0 %v2554
      %v2582 = vpop.f32.mrf.mxu0
      %v2583 = vadd.f32 0.0, %v2582
      %2584 = vdwg.mxu0
      %2585 = vmatpush.msra.mxu0 0.0
      %2586 = vmatpush.msra.mxu0 0.0
      %2587 = vmatpush.msra.mxu0 0.0
      %2588 = vmatpush.msra.mxu0 0.0
      %2589 = vmatpush.msra.mxu0 0.0
      %2590 = vmatpush.msra.mxu0 0.0
      %2591 = vmatpush.msra.mxu0 0.0
      %2592 = vmatpush.msra.mxu0 0.0
      %2593 = vmatpush.msra.mxu0 0.0
      %2594 = vmatpush.msra.mxu0 0.0
      %2595 = vmatpush.msra.mxu0 0.0
      %2596 = vmatpush.msra.mxu0 0.0
      %2597 = vmatpush.msra.mxu0 0.0
      %2598 = vmatpush.msra.mxu0 0.0
      %2599 = vmatpush.msra.mxu0 0.0
      %2600 = vmatpush.msra.mxu0 %v2543
      %2601 = vmatmul.f32.gmra.mxu0 %v2545
      %v2602 = vpop.f32.mrf.mxu0
      %v2603 = vadd.f32 0.0, %v2602
      %2604 = vmatmul.f32.gmra.mxu0 %v2548
      %v2605 = vpop.f32.mrf.mxu0
      %v2606 = vadd.f32 0.0, %v2605
      %2607 = vmatmul.f32.gmra.mxu0 %v2551
      %v2608 = vpop.f32.mrf.mxu0
      %v2609 = vadd.f32 0.0, %v2608
      %2610 = vmatmul.f32.gmra.mxu0 %v2554
      %v2611 = vpop.f32.mrf.mxu0
      %v2612 = vadd.f32 0.0, %v2611
      %2613 = vdwg.mxu0
      %v2615 = vsel %vm658, %v2512, 0
      %v2618 = vsel %vm658, %v2513, 0
      %v2621 = vsel %vm658, %v2514, 0
      %v2624 = vsel %vm658, %v2515, 0
      %2626 = vmatpush.msra.mxu0 0.0
      %2627 = vmatpush.msra.mxu0 0.0
      %2628 = vmatpush.msra.mxu0 0.0
      %2629 = vmatpush.msra.mxu0 0.0
      %2630 = vmatpush.msra.mxu0 0.0
      %2631 = vmatpush.msra.mxu0 0.0
      %2632 = vmatpush.msra.mxu0 0.0
      %2633 = vmatpush.msra.mxu0 0.0
      %2634 = vmatpush.msra.mxu0 0.0
      %2635 = vmatpush.msra.mxu0 0.0
      %2636 = vmatpush.msra.mxu0 0.0
      %2637 = vmatpush.msra.mxu0 0.0
      %2638 = vmatpush.msra.mxu0 0.0
      %2639 = vmatpush.msra.mxu0 0.0
      %2640 = vmatpush.msra.mxu0 0.0
      %2641 = vmatpush.msra.mxu0 %v2526
      %2642 = vmatmul.f32.gmra.mxu0 %v2615
      %v2643 = vpop.f32.mrf.mxu0
      %v2644 = vadd.f32 %v2574, %v2643
      %2645 = vmatmul.f32.gmra.mxu0 %v2618
      %v2646 = vpop.f32.mrf.mxu0
      %v2647 = vadd.f32 %v2577, %v2646
      %2648 = vmatmul.f32.gmra.mxu0 %v2621
      %v2649 = vpop.f32.mrf.mxu0
      %v2650 = vadd.f32 %v2580, %v2649
      %2651 = vmatmul.f32.gmra.mxu0 %v2624
      %v2652 = vpop.f32.mrf.mxu0
      %v2653 = vadd.f32 %v2583, %v2652
      %2654 = vdwg.mxu0
      %2655 = vmatpush.msra.mxu0 0.0
      %2656 = vmatpush.msra.mxu0 0.0
      %2657 = vmatpush.msra.mxu0 0.0
      %2658 = vmatpush.msra.mxu0 0.0
      %2659 = vmatpush.msra.mxu0 0.0
      %2660 = vmatpush.msra.mxu0 0.0
      %2661 = vmatpush.msra.mxu0 0.0
      %2662 = vmatpush.msra.mxu0 0.0
      %2663 = vmatpush.msra.mxu0 0.0
      %2664 = vmatpush.msra.mxu0 0.0
      %2665 = vmatpush.msra.mxu0 0.0
      %2666 = vmatpush.msra.mxu0 0.0
      %2667 = vmatpush.msra.mxu0 0.0
      %2668 = vmatpush.msra.mxu0 0.0
      %2669 = vmatpush.msra.mxu0 0.0
      %2670 = vmatpush.msra.mxu0 %v2527
      %2671 = vmatmul.f32.gmra.mxu0 %v2615
      %v2672 = vpop.f32.mrf.mxu0
      %v2673 = vadd.f32 %v2603, %v2672
      %2674 = vmatmul.f32.gmra.mxu0 %v2618
      %v2675 = vpop.f32.mrf.mxu0
      %v2676 = vadd.f32 %v2606, %v2675
      %2677 = vmatmul.f32.gmra.mxu0 %v2621
      %v2678 = vpop.f32.mrf.mxu0
      %v2679 = vadd.f32 %v2609, %v2678
      %2680 = vmatmul.f32.gmra.mxu0 %v2624
      %v2681 = vpop.f32.mrf.mxu0
      %v2682 = vadd.f32 %v2612, %v2681
      %2683 = vdwg.mxu0
      %s2684 = scalar_lea.vmem %s8, 32
      %v2685 = vld [vmem:[%s2684] sm:$0xff]
      %v2686 = vld [vmem:[%s2684 + $0x8] sm:$0xff]
      %v2687 = vld [vmem:[%s2684 + $0x10] sm:$0xff]
      %v2688 = vld [vmem:[%s2684 + $0x18] sm:$0xff]
      %2689 = vrot.lane.b32.xlu0 %v2502, 16
      %v2690 = vpop.permute.xlu0 %2689
      %2691 = vrot.lane.b32.xlu0 %v2503, 16
      %v2692 = vpop.permute.xlu0 %2691
      %v2693 = vsel %vm819, %v2690, %v2692
      %v2696 = vsel %vm819, 0.0, %v2690
      %v2698 = vsel %vm658, %v2685, 0
      %v2701 = vsel %vm658, %v2686, 0
      %v2704 = vsel %vm658, %v2687, 0
      %v2707 = vsel %vm658, %v2688, 0
      %2709 = vmatpush.msra.mxu0 0.0
      %2710 = vmatpush.msra.mxu0 0.0
      %2711 = vmatpush.msra.mxu0 0.0
      %2712 = vmatpush.msra.mxu0 0.0
      %2713 = vmatpush.msra.mxu0 0.0
      %2714 = vmatpush.msra.mxu0 0.0
      %2715 = vmatpush.msra.mxu0 0.0
      %2716 = vmatpush.msra.mxu0 0.0
      %2717 = vmatpush.msra.mxu0 0.0
      %2718 = vmatpush.msra.mxu0 0.0
      %2719 = vmatpush.msra.mxu0 0.0
      %2720 = vmatpush.msra.mxu0 0.0
      %2721 = vmatpush.msra.mxu0 0.0
      %2722 = vmatpush.msra.mxu0 0.0
      %2723 = vmatpush.msra.mxu0 0.0
      %2724 = vmatpush.msra.mxu0 %v2696
      %2725 = vmatmul.f32.gmra.mxu0 %v2698
      %v2726 = vpop.f32.mrf.mxu0
      %v2727 = vadd.f32 0.0, %v2726
      %2728 = vmatmul.f32.gmra.mxu0 %v2701
      %v2729 = vpop.f32.mrf.mxu0
      %v2730 = vadd.f32 0.0, %v2729
      %2731 = vmatmul.f32.gmra.mxu0 %v2704
      %v2732 = vpop.f32.mrf.mxu0
      %v2733 = vadd.f32 0.0, %v2732
      %2734 = vmatmul.f32.gmra.mxu0 %v2707
      %v2735 = vpop.f32.mrf.mxu0
      %v2736 = vadd.f32 0.0, %v2735
      %2737 = vdwg.mxu0
      %2738 = vmatpush.msra.mxu0 0.0
      %2739 = vmatpush.msra.mxu0 0.0
      %2740 = vmatpush.msra.mxu0 0.0
      %2741 = vmatpush.msra.mxu0 0.0
      %2742 = vmatpush.msra.mxu0 0.0
      %2743 = vmatpush.msra.mxu0 0.0
      %2744 = vmatpush.msra.mxu0 0.0
      %2745 = vmatpush.msra.mxu0 0.0
      %2746 = vmatpush.msra.mxu0 0.0
      %2747 = vmatpush.msra.mxu0 0.0
      %2748 = vmatpush.msra.mxu0 0.0
      %2749 = vmatpush.msra.mxu0 0.0
      %2750 = vmatpush.msra.mxu0 0.0
      %2751 = vmatpush.msra.mxu0 0.0
      %2752 = vmatpush.msra.mxu0 0.0
      %2753 = vmatpush.msra.mxu0 %v2693
      %2754 = vmatmul.f32.gmra.mxu0 %v2698
      %v2755 = vpop.f32.mrf.mxu0
      %v2756 = vadd.f32 0.0, %v2755
      %2757 = vmatmul.f32.gmra.mxu0 %v2701
      %v2758 = vpop.f32.mrf.mxu0
      %v2759 = vadd.f32 0.0, %v2758
      %2760 = vmatmul.f32.gmra.mxu0 %v2704
      %v2761 = vpop.f32.mrf.mxu0
      %v2762 = vadd.f32 0.0, %v2761
      %2763 = vmatmul.f32.gmra.mxu0 %v2707
      %v2764 = vpop.f32.mrf.mxu0
      %v2765 = vadd.f32 0.0, %v2764
      %2766 = vdwg.mxu0
      %v2767 = vadd.f32 %v2644, %v2727
      %v2768 = vadd.f32 %v2673, %v2756
      %v2769 = vadd.f32 %v2647, %v2730
      %v2770 = vadd.f32 %v2676, %v2759
      %v2771 = vadd.f32 %v2650, %v2733
      %v2772 = vadd.f32 %v2679, %v2762
      %v2773 = vadd.f32 %v2653, %v2736
      %v2774 = vadd.f32 %v2682, %v2765
      %s2775 = scalar_lea.vmem %s9, 32
      %v2776 = vld [vmem:[%s2775] sm:$0xff]
      %v2777 = vld [vmem:[%s2775 + $0x8] sm:$0xff]
      %v2778 = vld [vmem:[%s2775 + $0x10] sm:$0xff]
      %v2779 = vld [vmem:[%s2775 + $0x18] sm:$0xff]
      %2780 = vrot.lane.b32.xlu0 %v2508, 16
      %v2781 = vpop.permute.xlu0 %2780
      %2782 = vrot.lane.b32.xlu0 %v2509, 16
      %v2783 = vpop.permute.xlu0 %2782
      %v2784 = vsel %vm819, %v2781, %v2783
      %v2787 = vsel %vm819, 0.0, %v2781
      %v2789 = vsel %vm658, %v2776, 0
      %v2792 = vsel %vm658, %v2777, 0
      %v2795 = vsel %vm658, %v2778, 0
      %v2798 = vsel %vm658, %v2779, 0
      %2800 = vmatpush.msra.mxu0 0.0
      %2801 = vmatpush.msra.mxu0 0.0
      %2802 = vmatpush.msra.mxu0 0.0
      %2803 = vmatpush.msra.mxu0 0.0
      %2804 = vmatpush.msra.mxu0 0.0
      %2805 = vmatpush.msra.mxu0 0.0
      %2806 = vmatpush.msra.mxu0 0.0
      %2807 = vmatpush.msra.mxu0 0.0
      %2808 = vmatpush.msra.mxu0 0.0
      %2809 = vmatpush.msra.mxu0 0.0
      %2810 = vmatpush.msra.mxu0 0.0
      %2811 = vmatpush.msra.mxu0 0.0
      %2812 = vmatpush.msra.mxu0 0.0
      %2813 = vmatpush.msra.mxu0 0.0
      %2814 = vmatpush.msra.mxu0 0.0
      %2815 = vmatpush.msra.mxu0 %v2787
      %2816 = vmatmul.f32.gmra.mxu0 %v2789
      %v2817 = vpop.f32.mrf.mxu0
      %v2818 = vadd.f32 0.0, %v2817
      %2819 = vmatmul.f32.gmra.mxu0 %v2792
      %v2820 = vpop.f32.mrf.mxu0
      %v2821 = vadd.f32 0.0, %v2820
      %2822 = vmatmul.f32.gmra.mxu0 %v2795
      %v2823 = vpop.f32.mrf.mxu0
      %v2824 = vadd.f32 0.0, %v2823
      %2825 = vmatmul.f32.gmra.mxu0 %v2798
      %v2826 = vpop.f32.mrf.mxu0
      %v2827 = vadd.f32 0.0, %v2826
      %2828 = vdwg.mxu0
      %2829 = vmatpush.msra.mxu0 0.0
      %2830 = vmatpush.msra.mxu0 0.0
      %2831 = vmatpush.msra.mxu0 0.0
      %2832 = vmatpush.msra.mxu0 0.0
      %2833 = vmatpush.msra.mxu0 0.0
      %2834 = vmatpush.msra.mxu0 0.0
      %2835 = vmatpush.msra.mxu0 0.0
      %2836 = vmatpush.msra.mxu0 0.0
      %2837 = vmatpush.msra.mxu0 0.0
      %2838 = vmatpush.msra.mxu0 0.0
      %2839 = vmatpush.msra.mxu0 0.0
      %2840 = vmatpush.msra.mxu0 0.0
      %2841 = vmatpush.msra.mxu0 0.0
      %2842 = vmatpush.msra.mxu0 0.0
      %2843 = vmatpush.msra.mxu0 0.0
      %2844 = vmatpush.msra.mxu0 %v2784
      %2845 = vmatmul.f32.gmra.mxu0 %v2789
      %v2846 = vpop.f32.mrf.mxu0
      %v2847 = vadd.f32 0.0, %v2846
      %2848 = vmatmul.f32.gmra.mxu0 %v2792
      %v2849 = vpop.f32.mrf.mxu0
      %v2850 = vadd.f32 0.0, %v2849
      %2851 = vmatmul.f32.gmra.mxu0 %v2795
      %v2852 = vpop.f32.mrf.mxu0
      %v2853 = vadd.f32 0.0, %v2852
      %2854 = vmatmul.f32.gmra.mxu0 %v2798
      %v2855 = vpop.f32.mrf.mxu0
      %v2856 = vadd.f32 0.0, %v2855
      %2857 = vdwg.mxu0
      %v2858 = vadd.f32 %v2767, %v2818
      %v2859 = vadd.f32 %v2768, %v2847
      %v2860 = vadd.f32 %v2769, %v2821
      %v2861 = vadd.f32 %v2770, %v2850
      %v2862 = vadd.f32 %v2771, %v2824
      %v2863 = vadd.f32 %v2772, %v2853
      %v2864 = vadd.f32 %v2773, %v2827
      %v2865 = vadd.f32 %v2774, %v2856
      %s2866 = scalar_lea.vmem %s8, 64
      %v2867 = vld [vmem:[%s2866] sm:$0xff]
      %v2868 = vld [vmem:[%s2866 + $0x8] sm:$0xff]
      %v2869 = vld [vmem:[%s2866 + $0x10] sm:$0xff]
      %v2870 = vld [vmem:[%s2866 + $0x18] sm:$0xff]
      %2871 = vrot.lane.b32.xlu0 %v2502, 15
      %v2872 = vpop.permute.xlu0 %2871
      %2873 = vrot.lane.b32.xlu0 %v2503, 15
      %v2874 = vpop.permute.xlu0 %2873
      %v2875 = vsel %vm1009, %v2872, %v2874
      %v2878 = vsel %vm1009, 0.0, %v2872
      %v2879 = vsel %vm1018, %v2878, 0.0
      %v2880 = vsel %vm1019, %v2875, 0.0
      %v2882 = vsel %vm658, %v2867, 0
      %v2885 = vsel %vm658, %v2868, 0
      %v2888 = vsel %vm658, %v2869, 0
      %v2891 = vsel %vm658, %v2870, 0
      %2893 = vmatpush.msra.mxu0 0.0
      %2894 = vmatpush.msra.mxu0 0.0
      %2895 = vmatpush.msra.mxu0 0.0
      %2896 = vmatpush.msra.mxu0 0.0
      %2897 = vmatpush.msra.mxu0 0.0
      %2898 = vmatpush.msra.mxu0 0.0
      %2899 = vmatpush.msra.mxu0 0.0
      %2900 = vmatpush.msra.mxu0 0.0
      %2901 = vmatpush.msra.mxu0 0.0
      %2902 = vmatpush.msra.mxu0 0.0
      %2903 = vmatpush.msra.mxu0 0.0
      %2904 = vmatpush.msra.mxu0 0.0
      %2905 = vmatpush.msra.mxu0 0.0
      %2906 = vmatpush.msra.mxu0 0.0
      %2907 = vmatpush.msra.mxu0 0.0
      %2908 = vmatpush.msra.mxu0 %v2879
      %2909 = vmatmul.f32.gmra.mxu0 %v2882
      %v2910 = vpop.f32.mrf.mxu0
      %v2911 = vadd.f32 0.0, %v2910
      %2912 = vmatmul.f32.gmra.mxu0 %v2885
      %v2913 = vpop.f32.mrf.mxu0
      %v2914 = vadd.f32 0.0, %v2913
      %2915 = vmatmul.f32.gmra.mxu0 %v2888
      %v2916 = vpop.f32.mrf.mxu0
      %v2917 = vadd.f32 0.0, %v2916
      %2918 = vmatmul.f32.gmra.mxu0 %v2891
      %v2919 = vpop.f32.mrf.mxu0
      %v2920 = vadd.f32 0.0, %v2919
      %2921 = vdwg.mxu0
      %2922 = vmatpush.msra.mxu0 0.0
      %2923 = vmatpush.msra.mxu0 0.0
      %2924 = vmatpush.msra.mxu0 0.0
      %2925 = vmatpush.msra.mxu0 0.0
      %2926 = vmatpush.msra.mxu0 0.0
      %2927 = vmatpush.msra.mxu0 0.0
      %2928 = vmatpush.msra.mxu0 0.0
      %2929 = vmatpush.msra.mxu0 0.0
      %2930 = vmatpush.msra.mxu0 0.0
      %2931 = vmatpush.msra.mxu0 0.0
      %2932 = vmatpush.msra.mxu0 0.0
      %2933 = vmatpush.msra.mxu0 0.0
      %2934 = vmatpush.msra.mxu0 0.0
      %2935 = vmatpush.msra.mxu0 0.0
      %2936 = vmatpush.msra.mxu0 0.0
      %2937 = vmatpush.msra.mxu0 %v2880
      %2938 = vmatmul.f32.gmra.mxu0 %v2882
      %v2939 = vpop.f32.mrf.mxu0
      %v2940 = vadd.f32 0.0, %v2939
      %2941 = vmatmul.f32.gmra.mxu0 %v2885
      %v2942 = vpop.f32.mrf.mxu0
      %v2943 = vadd.f32 0.0, %v2942
      %2944 = vmatmul.f32.gmra.mxu0 %v2888
      %v2945 = vpop.f32.mrf.mxu0
      %v2946 = vadd.f32 0.0, %v2945
      %2947 = vmatmul.f32.gmra.mxu0 %v2891
      %v2948 = vpop.f32.mrf.mxu0
      %v2949 = vadd.f32 0.0, %v2948
      %2950 = vdwg.mxu0
      %v2951 = vadd.f32 %v2858, %v2911
      %v2952 = vadd.f32 %v2859, %v2940
      %v2953 = vadd.f32 %v2860, %v2914
      %v2954 = vadd.f32 %v2861, %v2943
      %v2955 = vadd.f32 %v2862, %v2917
      %v2956 = vadd.f32 %v2863, %v2946
      %v2957 = vadd.f32 %v2864, %v2920
      %v2958 = vadd.f32 %v2865, %v2949
      %s2959 = scalar_lea.vmem %s9, 64
      %v2960 = vld [vmem:[%s2959] sm:$0xff]
      %v2961 = vld [vmem:[%s2959 + $0x8] sm:$0xff]
      %v2962 = vld [vmem:[%s2959 + $0x10] sm:$0xff]
      %v2963 = vld [vmem:[%s2959 + $0x18] sm:$0xff]
      %2964 = vrot.lane.b32.xlu0 %v2508, 15
      %v2965 = vpop.permute.xlu0 %2964
      %2966 = vrot.lane.b32.xlu0 %v2509, 15
      %v2967 = vpop.permute.xlu0 %2966
      %v2968 = vsel %vm1009, %v2965, %v2967
      %v2971 = vsel %vm1009, 0.0, %v2965
      %v2972 = vsel %vm1018, %v2971, 0.0
      %v2973 = vsel %vm1019, %v2968, 0.0
      %v2975 = vsel %vm658, %v2960, 0
      %v2978 = vsel %vm658, %v2961, 0
      %v2981 = vsel %vm658, %v2962, 0
      %v2984 = vsel %vm658, %v2963, 0
      %2986 = vmatpush.msra.mxu0 0.0
      %2987 = vmatpush.msra.mxu0 0.0
      %2988 = vmatpush.msra.mxu0 0.0
      %2989 = vmatpush.msra.mxu0 0.0
      %2990 = vmatpush.msra.mxu0 0.0
      %2991 = vmatpush.msra.mxu0 0.0
      %2992 = vmatpush.msra.mxu0 0.0
      %2993 = vmatpush.msra.mxu0 0.0
      %2994 = vmatpush.msra.mxu0 0.0
      %2995 = vmatpush.msra.mxu0 0.0
      %2996 = vmatpush.msra.mxu0 0.0
      %2997 = vmatpush.msra.mxu0 0.0
      %2998 = vmatpush.msra.mxu0 0.0
      %2999 = vmatpush.msra.mxu0 0.0
      %3000 = vmatpush.msra.mxu0 0.0
      %3001 = vmatpush.msra.mxu0 %v2972
      %3002 = vmatmul.f32.gmra.mxu0 %v2975
      %v3003 = vpop.f32.mrf.mxu0
      %v3004 = vadd.f32 0.0, %v3003
      %3005 = vmatmul.f32.gmra.mxu0 %v2978
      %v3006 = vpop.f32.mrf.mxu0
      %v3007 = vadd.f32 0.0, %v3006
      %3008 = vmatmul.f32.gmra.mxu0 %v2981
      %v3009 = vpop.f32.mrf.mxu0
      %v3010 = vadd.f32 0.0, %v3009
      %3011 = vmatmul.f32.gmra.mxu0 %v2984
      %v3012 = vpop.f32.mrf.mxu0
      %v3013 = vadd.f32 0.0, %v3012
      %3014 = vdwg.mxu0
      %3015 = vmatpush.msra.mxu0 0.0
      %3016 = vmatpush.msra.mxu0 0.0
      %3017 = vmatpush.msra.mxu0 0.0
      %3018 = vmatpush.msra.mxu0 0.0
      %3019 = vmatpush.msra.mxu0 0.0
      %3020 = vmatpush.msra.mxu0 0.0
      %3021 = vmatpush.msra.mxu0 0.0
      %3022 = vmatpush.msra.mxu0 0.0
      %3023 = vmatpush.msra.mxu0 0.0
      %3024 = vmatpush.msra.mxu0 0.0
      %3025 = vmatpush.msra.mxu0 0.0
      %3026 = vmatpush.msra.mxu0 0.0
      %3027 = vmatpush.msra.mxu0 0.0
      %3028 = vmatpush.msra.mxu0 0.0
      %3029 = vmatpush.msra.mxu0 0.0
      %3030 = vmatpush.msra.mxu0 %v2973
      %3031 = vmatmul.f32.gmra.mxu0 %v2975
      %v3032 = vpop.f32.mrf.mxu0
      %v3033 = vadd.f32 0.0, %v3032
      %3034 = vmatmul.f32.gmra.mxu0 %v2978
      %v3035 = vpop.f32.mrf.mxu0
      %v3036 = vadd.f32 0.0, %v3035
      %3037 = vmatmul.f32.gmra.mxu0 %v2981
      %v3038 = vpop.f32.mrf.mxu0
      %v3039 = vadd.f32 0.0, %v3038
      %3040 = vmatmul.f32.gmra.mxu0 %v2984
      %v3041 = vpop.f32.mrf.mxu0
      %v3042 = vadd.f32 0.0, %v3041
      %3043 = vdwg.mxu0
      %v3044 = vadd.f32 %v2951, %v3004
      %v3045 = vadd.f32 %v2952, %v3033
      %v3046 = vadd.f32 %v2953, %v3007
      %v3047 = vadd.f32 %v2954, %v3036
      %v3048 = vadd.f32 %v2955, %v3010
      %v3049 = vadd.f32 %v2956, %v3039
      %v3050 = vadd.f32 %v2957, %v3013
      %v3051 = vadd.f32 %v2958, %v3042
      %s3052 = scalar_lea.vmem %s8, 96
      %v3053 = vld [vmem:[%s3052] sm:$0xff]
      %v3054 = vld [vmem:[%s3052 + $0x8] sm:$0xff]
      %v3055 = vld [vmem:[%s3052 + $0x10] sm:$0xff]
      %v3056 = vld [vmem:[%s3052 + $0x18] sm:$0xff]
      %3057 = vrot.lane.b32.xlu0 %v2502, 1
      %v3058 = vpop.permute.xlu0 %3057
      %3059 = vrot.lane.b32.xlu0 %v2503, 1
      %v3060 = vpop.permute.xlu0 %3059
      %v3061 = vsel %vm1211, %v3058, %v3060
      %v3064 = vsel %vm1211, 0.0, %v3058
      %v3065 = vsel %vm638, %v3064, 0.0
      %v3066 = vsel %vm639, %v3061, 0.0
      %v3068 = vsel %vm658, %v3053, 0
      %v3071 = vsel %vm658, %v3054, 0
      %v3074 = vsel %vm658, %v3055, 0
      %v3077 = vsel %vm658, %v3056, 0
      %3079 = vmatpush.msra.mxu0 0.0
      %3080 = vmatpush.msra.mxu0 0.0
      %3081 = vmatpush.msra.mxu0 0.0
      %3082 = vmatpush.msra.mxu0 0.0
      %3083 = vmatpush.msra.mxu0 0.0
      %3084 = vmatpush.msra.mxu0 0.0
      %3085 = vmatpush.msra.mxu0 0.0
      %3086 = vmatpush.msra.mxu0 0.0
      %3087 = vmatpush.msra.mxu0 0.0
      %3088 = vmatpush.msra.mxu0 0.0
      %3089 = vmatpush.msra.mxu0 0.0
      %3090 = vmatpush.msra.mxu0 0.0
      %3091 = vmatpush.msra.mxu0 0.0
      %3092 = vmatpush.msra.mxu0 0.0
      %3093 = vmatpush.msra.mxu0 0.0
      %3094 = vmatpush.msra.mxu0 %v3065
      %3095 = vmatmul.f32.gmra.mxu0 %v3068
      %v3096 = vpop.f32.mrf.mxu0
      %v3097 = vadd.f32 0.0, %v3096
      %3098 = vmatmul.f32.gmra.mxu0 %v3071
      %v3099 = vpop.f32.mrf.mxu0
      %v3100 = vadd.f32 0.0, %v3099
      %3101 = vmatmul.f32.gmra.mxu0 %v3074
      %v3102 = vpop.f32.mrf.mxu0
      %v3103 = vadd.f32 0.0, %v3102
      %3104 = vmatmul.f32.gmra.mxu0 %v3077
      %v3105 = vpop.f32.mrf.mxu0
      %v3106 = vadd.f32 0.0, %v3105
      %3107 = vdwg.mxu0
      %3108 = vmatpush.msra.mxu0 0.0
      %3109 = vmatpush.msra.mxu0 0.0
      %3110 = vmatpush.msra.mxu0 0.0
      %3111 = vmatpush.msra.mxu0 0.0
      %3112 = vmatpush.msra.mxu0 0.0
      %3113 = vmatpush.msra.mxu0 0.0
      %3114 = vmatpush.msra.mxu0 0.0
      %3115 = vmatpush.msra.mxu0 0.0
      %3116 = vmatpush.msra.mxu0 0.0
      %3117 = vmatpush.msra.mxu0 0.0
      %3118 = vmatpush.msra.mxu0 0.0
      %3119 = vmatpush.msra.mxu0 0.0
      %3120 = vmatpush.msra.mxu0 0.0
      %3121 = vmatpush.msra.mxu0 0.0
      %3122 = vmatpush.msra.mxu0 0.0
      %3123 = vmatpush.msra.mxu0 %v3066
      %3124 = vmatmul.f32.gmra.mxu0 %v3068
      %v3125 = vpop.f32.mrf.mxu0
      %v3126 = vadd.f32 0.0, %v3125
      %3127 = vmatmul.f32.gmra.mxu0 %v3071
      %v3128 = vpop.f32.mrf.mxu0
      %v3129 = vadd.f32 0.0, %v3128
      %3130 = vmatmul.f32.gmra.mxu0 %v3074
      %v3131 = vpop.f32.mrf.mxu0
      %v3132 = vadd.f32 0.0, %v3131
      %3133 = vmatmul.f32.gmra.mxu0 %v3077
      %v3134 = vpop.f32.mrf.mxu0
      %v3135 = vadd.f32 0.0, %v3134
      %3136 = vdwg.mxu0
      %v3137 = vadd.f32 %v3044, %v3097
      %v3138 = vadd.f32 %v3045, %v3126
      %v3139 = vadd.f32 %v3046, %v3100
      %v3140 = vadd.f32 %v3047, %v3129
      %v3141 = vadd.f32 %v3048, %v3103
      %v3142 = vadd.f32 %v3049, %v3132
      %v3143 = vadd.f32 %v3050, %v3106
      %v3144 = vadd.f32 %v3051, %v3135
      %s3145 = scalar_lea.vmem %s9, 96
      %v3146 = vld [vmem:[%s3145] sm:$0xff]
      %v3147 = vld [vmem:[%s3145 + $0x8] sm:$0xff]
      %v3148 = vld [vmem:[%s3145 + $0x10] sm:$0xff]
      %v3149 = vld [vmem:[%s3145 + $0x18] sm:$0xff]
      %3150 = vrot.lane.b32.xlu0 %v2508, 1
      %v3151 = vpop.permute.xlu0 %3150
      %3152 = vrot.lane.b32.xlu0 %v2509, 1
      %v3153 = vpop.permute.xlu0 %3152
      %v3154 = vsel %vm1211, %v3151, %v3153
      %v3157 = vsel %vm1211, 0.0, %v3151
      %v3158 = vsel %vm638, %v3157, 0.0
      %v3159 = vsel %vm639, %v3154, 0.0
      %v3161 = vsel %vm658, %v3146, 0
      %v3164 = vsel %vm658, %v3147, 0
      %v3167 = vsel %vm658, %v3148, 0
      %v3170 = vsel %vm658, %v3149, 0
      %3172 = vmatpush.msra.mxu0 0.0
      %3173 = vmatpush.msra.mxu0 0.0
      %3174 = vmatpush.msra.mxu0 0.0
      %3175 = vmatpush.msra.mxu0 0.0
      %3176 = vmatpush.msra.mxu0 0.0
      %3177 = vmatpush.msra.mxu0 0.0
      %3178 = vmatpush.msra.mxu0 0.0
      %3179 = vmatpush.msra.mxu0 0.0
      %3180 = vmatpush.msra.mxu0 0.0
      %3181 = vmatpush.msra.mxu0 0.0
      %3182 = vmatpush.msra.mxu0 0.0
      %3183 = vmatpush.msra.mxu0 0.0
      %3184 = vmatpush.msra.mxu0 0.0
      %3185 = vmatpush.msra.mxu0 0.0
      %3186 = vmatpush.msra.mxu0 0.0
      %3187 = vmatpush.msra.mxu0 %v3158
      %3188 = vmatmul.f32.gmra.mxu0 %v3161
      %v3189 = vpop.f32.mrf.mxu0
      %v3190 = vadd.f32 0.0, %v3189
      %3191 = vmatmul.f32.gmra.mxu0 %v3164
      %v3192 = vpop.f32.mrf.mxu0
      %v3193 = vadd.f32 0.0, %v3192
      %3194 = vmatmul.f32.gmra.mxu0 %v3167
      %v3195 = vpop.f32.mrf.mxu0
      %v3196 = vadd.f32 0.0, %v3195
      %3197 = vmatmul.f32.gmra.mxu0 %v3170
      %v3198 = vpop.f32.mrf.mxu0
      %v3199 = vadd.f32 0.0, %v3198
      %3200 = vdwg.mxu0
      %3201 = vmatpush.msra.mxu0 0.0
      %3202 = vmatpush.msra.mxu0 0.0
      %3203 = vmatpush.msra.mxu0 0.0
      %3204 = vmatpush.msra.mxu0 0.0
      %3205 = vmatpush.msra.mxu0 0.0
      %3206 = vmatpush.msra.mxu0 0.0
      %3207 = vmatpush.msra.mxu0 0.0
      %3208 = vmatpush.msra.mxu0 0.0
      %3209 = vmatpush.msra.mxu0 0.0
      %3210 = vmatpush.msra.mxu0 0.0
      %3211 = vmatpush.msra.mxu0 0.0
      %3212 = vmatpush.msra.mxu0 0.0
      %3213 = vmatpush.msra.mxu0 0.0
      %3214 = vmatpush.msra.mxu0 0.0
      %3215 = vmatpush.msra.mxu0 0.0
      %3216 = vmatpush.msra.mxu0 %v3159
      %3217 = vmatmul.f32.gmra.mxu0 %v3161
      %v3218 = vpop.f32.mrf.mxu0
      %v3219 = vadd.f32 0.0, %v3218
      %3220 = vmatmul.f32.gmra.mxu0 %v3164
      %v3221 = vpop.f32.mrf.mxu0
      %v3222 = vadd.f32 0.0, %v3221
      %3223 = vmatmul.f32.gmra.mxu0 %v3167
      %v3224 = vpop.f32.mrf.mxu0
      %v3225 = vadd.f32 0.0, %v3224
      %3226 = vmatmul.f32.gmra.mxu0 %v3170
      %v3227 = vpop.f32.mrf.mxu0
      %v3228 = vadd.f32 0.0, %v3227
      %3229 = vdwg.mxu0
      %v3230 = vadd.f32 %v3137, %v3190
      %v3231 = vadd.f32 %v3138, %v3219
      %v3232 = vadd.f32 %v3139, %v3193
      %v3233 = vadd.f32 %v3140, %v3222
      %v3234 = vadd.f32 %v3141, %v3196
      %v3235 = vadd.f32 %v3142, %v3225
      %v3236 = vadd.f32 %v3143, %v3199
      %v3237 = vadd.f32 %v3144, %v3228
      %s3238 = scalar_lea.vmem %s8, 128
      %v3239 = vld [vmem:[%s3238] sm:$0xff]
      %v3240 = vld [vmem:[%s3238 + $0x8] sm:$0xff]
      %v3241 = vld [vmem:[%s3238 + $0x10] sm:$0xff]
      %v3242 = vld [vmem:[%s3238 + $0x18] sm:$0xff]
      %v3244 = vsel %vm658, %v3239, 0
      %v3247 = vsel %vm658, %v3240, 0
      %v3250 = vsel %vm658, %v3241, 0
      %v3253 = vsel %vm658, %v3242, 0
      %3255 = vmatpush.msra.mxu0 0.0
      %3256 = vmatpush.msra.mxu0 0.0
      %3257 = vmatpush.msra.mxu0 0.0
      %3258 = vmatpush.msra.mxu0 0.0
      %3259 = vmatpush.msra.mxu0 0.0
      %3260 = vmatpush.msra.mxu0 0.0
      %3261 = vmatpush.msra.mxu0 0.0
      %3262 = vmatpush.msra.mxu0 0.0
      %3263 = vmatpush.msra.mxu0 0.0
      %3264 = vmatpush.msra.mxu0 0.0
      %3265 = vmatpush.msra.mxu0 0.0
      %3266 = vmatpush.msra.mxu0 0.0
      %3267 = vmatpush.msra.mxu0 0.0
      %3268 = vmatpush.msra.mxu0 0.0
      %3269 = vmatpush.msra.mxu0 0.0
      %3270 = vmatpush.msra.mxu0 %v2502
      %3271 = vmatmul.f32.gmra.mxu0 %v3244
      %v3272 = vpop.f32.mrf.mxu0
      %v3273 = vadd.f32 0.0, %v3272
      %3274 = vmatmul.f32.gmra.mxu0 %v3247
      %v3275 = vpop.f32.mrf.mxu0
      %v3276 = vadd.f32 0.0, %v3275
      %3277 = vmatmul.f32.gmra.mxu0 %v3250
      %v3278 = vpop.f32.mrf.mxu0
      %v3279 = vadd.f32 0.0, %v3278
      %3280 = vmatmul.f32.gmra.mxu0 %v3253
      %v3281 = vpop.f32.mrf.mxu0
      %v3282 = vadd.f32 0.0, %v3281
      %3283 = vdwg.mxu0
      %3284 = vmatpush.msra.mxu0 0.0
      %3285 = vmatpush.msra.mxu0 0.0
      %3286 = vmatpush.msra.mxu0 0.0
      %3287 = vmatpush.msra.mxu0 0.0
      %3288 = vmatpush.msra.mxu0 0.0
      %3289 = vmatpush.msra.mxu0 0.0
      %3290 = vmatpush.msra.mxu0 0.0
      %3291 = vmatpush.msra.mxu0 0.0
      %3292 = vmatpush.msra.mxu0 0.0
      %3293 = vmatpush.msra.mxu0 0.0
      %3294 = vmatpush.msra.mxu0 0.0
      %3295 = vmatpush.msra.mxu0 0.0
      %3296 = vmatpush.msra.mxu0 0.0
      %3297 = vmatpush.msra.mxu0 0.0
      %3298 = vmatpush.msra.mxu0 0.0
      %3299 = vmatpush.msra.mxu0 %v2503
      %3300 = vmatmul.f32.gmra.mxu0 %v3244
      %v3301 = vpop.f32.mrf.mxu0
      %v3302 = vadd.f32 0.0, %v3301
      %3303 = vmatmul.f32.gmra.mxu0 %v3247
      %v3304 = vpop.f32.mrf.mxu0
      %v3305 = vadd.f32 0.0, %v3304
      %3306 = vmatmul.f32.gmra.mxu0 %v3250
      %v3307 = vpop.f32.mrf.mxu0
      %v3308 = vadd.f32 0.0, %v3307
      %3309 = vmatmul.f32.gmra.mxu0 %v3253
      %v3310 = vpop.f32.mrf.mxu0
      %v3311 = vadd.f32 0.0, %v3310
      %3312 = vdwg.mxu0
      %v3313 = vadd.f32 %v3230, %v3273
      %v3314 = vadd.f32 %v3231, %v3302
      %v3315 = vadd.f32 %v3232, %v3276
      %v3316 = vadd.f32 %v3233, %v3305
      %v3317 = vadd.f32 %v3234, %v3279
      %v3318 = vadd.f32 %v3235, %v3308
      %v3319 = vadd.f32 %v3236, %v3282
      %v3320 = vadd.f32 %v3237, %v3311
      %s3321 = scalar_lea.vmem %s9, 128
      %v3322 = vld [vmem:[%s3321] sm:$0xff]
      %v3323 = vld [vmem:[%s3321 + $0x8] sm:$0xff]
      %v3324 = vld [vmem:[%s3321 + $0x10] sm:$0xff]
      %v3325 = vld [vmem:[%s3321 + $0x18] sm:$0xff]
      %v3327 = vsel %vm658, %v3322, 0
      %v3330 = vsel %vm658, %v3323, 0
      %v3333 = vsel %vm658, %v3324, 0
      %v3336 = vsel %vm658, %v3325, 0
      %3338 = vmatpush.msra.mxu0 0.0
      %3339 = vmatpush.msra.mxu0 0.0
      %3340 = vmatpush.msra.mxu0 0.0
      %3341 = vmatpush.msra.mxu0 0.0
      %3342 = vmatpush.msra.mxu0 0.0
      %3343 = vmatpush.msra.mxu0 0.0
      %3344 = vmatpush.msra.mxu0 0.0
      %3345 = vmatpush.msra.mxu0 0.0
      %3346 = vmatpush.msra.mxu0 0.0
      %3347 = vmatpush.msra.mxu0 0.0
      %3348 = vmatpush.msra.mxu0 0.0
      %3349 = vmatpush.msra.mxu0 0.0
      %3350 = vmatpush.msra.mxu0 0.0
      %3351 = vmatpush.msra.mxu0 0.0
      %3352 = vmatpush.msra.mxu0 0.0
      %3353 = vmatpush.msra.mxu0 %v2508
      %3354 = vmatmul.f32.gmra.mxu0 %v3327
      %v3355 = vpop.f32.mrf.mxu0
      %v3356 = vadd.f32 0.0, %v3355
      %3357 = vmatmul.f32.gmra.mxu0 %v3330
      %v3358 = vpop.f32.mrf.mxu0
      %v3359 = vadd.f32 0.0, %v3358
      %3360 = vmatmul.f32.gmra.mxu0 %v3333
      %v3361 = vpop.f32.mrf.mxu0
      %v3362 = vadd.f32 0.0, %v3361
      %3363 = vmatmul.f32.gmra.mxu0 %v3336
      %v3364 = vpop.f32.mrf.mxu0
      %v3365 = vadd.f32 0.0, %v3364
      %3366 = vdwg.mxu0
      %3367 = vmatpush.msra.mxu0 0.0
      %3368 = vmatpush.msra.mxu0 0.0
      %3369 = vmatpush.msra.mxu0 0.0
      %3370 = vmatpush.msra.mxu0 0.0
      %3371 = vmatpush.msra.mxu0 0.0
      %3372 = vmatpush.msra.mxu0 0.0
      %3373 = vmatpush.msra.mxu0 0.0
      %3374 = vmatpush.msra.mxu0 0.0
      %3375 = vmatpush.msra.mxu0 0.0
      %3376 = vmatpush.msra.mxu0 0.0
      %3377 = vmatpush.msra.mxu0 0.0
      %3378 = vmatpush.msra.mxu0 0.0
      %3379 = vmatpush.msra.mxu0 0.0
      %3380 = vmatpush.msra.mxu0 0.0
      %3381 = vmatpush.msra.mxu0 0.0
      %3382 = vmatpush.msra.mxu0 %v2509
      %3383 = vmatmul.f32.gmra.mxu0 %v3327
      %v3384 = vpop.f32.mrf.mxu0
      %v3385 = vadd.f32 0.0, %v3384
      %3386 = vmatmul.f32.gmra.mxu0 %v3330
      %v3387 = vpop.f32.mrf.mxu0
      %v3388 = vadd.f32 0.0, %v3387
      %3389 = vmatmul.f32.gmra.mxu0 %v3333
      %v3390 = vpop.f32.mrf.mxu0
      %v3391 = vadd.f32 0.0, %v3390
      %3392 = vmatmul.f32.gmra.mxu0 %v3336
      %v3393 = vpop.f32.mrf.mxu0
      %v3394 = vadd.f32 0.0, %v3393
      %3395 = vdwg.mxu0
      %v3396 = vadd.f32 %v3313, %v3356
      %v3397 = vadd.f32 %v3314, %v3385
      %v3398 = vadd.f32 %v3315, %v3359
      %v3399 = vadd.f32 %v3316, %v3388
      %v3400 = vadd.f32 %v3317, %v3362
      %v3401 = vadd.f32 %v3318, %v3391
      %v3402 = vadd.f32 %v3319, %v3365
      %v3403 = vadd.f32 %v3320, %v3394
      %s3404 = scalar_lea.vmem %s8, 160
      %v3405 = vld [vmem:[%s3404] sm:$0xff]
      %v3406 = vld [vmem:[%s3404 + $0x8] sm:$0xff]
      %v3407 = vld [vmem:[%s3404 + $0x10] sm:$0xff]
      %v3408 = vld [vmem:[%s3404 + $0x18] sm:$0xff]
      %3409 = vrot.lane.b32.xlu0 %v2502, 127
      %v3410 = vpop.permute.xlu0 %3409
      %3411 = vrot.lane.b32.xlu0 %v2503, 127
      %v3412 = vpop.permute.xlu0 %3411
      %v3413 = vsel %vm1580, %v3410, %v3412
      %v3416 = vsel %vm1580, %v3412, 0.0
      %v3417 = vsel %vm1018, %v3413, 0.0
      %v3418 = vsel %vm1019, %v3416, 0.0
      %v3420 = vsel %vm658, %v3405, 0
      %v3423 = vsel %vm658, %v3406, 0
      %v3426 = vsel %vm658, %v3407, 0
      %v3429 = vsel %vm658, %v3408, 0
      %3431 = vmatpush.msra.mxu0 0.0
      %3432 = vmatpush.msra.mxu0 0.0
      %3433 = vmatpush.msra.mxu0 0.0
      %3434 = vmatpush.msra.mxu0 0.0
      %3435 = vmatpush.msra.mxu0 0.0
      %3436 = vmatpush.msra.mxu0 0.0
      %3437 = vmatpush.msra.mxu0 0.0
      %3438 = vmatpush.msra.mxu0 0.0
      %3439 = vmatpush.msra.mxu0 0.0
      %3440 = vmatpush.msra.mxu0 0.0
      %3441 = vmatpush.msra.mxu0 0.0
      %3442 = vmatpush.msra.mxu0 0.0
      %3443 = vmatpush.msra.mxu0 0.0
      %3444 = vmatpush.msra.mxu0 0.0
      %3445 = vmatpush.msra.mxu0 0.0
      %3446 = vmatpush.msra.mxu0 %v3417
      %3447 = vmatmul.f32.gmra.mxu0 %v3420
      %v3448 = vpop.f32.mrf.mxu0
      %v3449 = vadd.f32 0.0, %v3448
      %3450 = vmatmul.f32.gmra.mxu0 %v3423
      %v3451 = vpop.f32.mrf.mxu0
      %v3452 = vadd.f32 0.0, %v3451
      %3453 = vmatmul.f32.gmra.mxu0 %v3426
      %v3454 = vpop.f32.mrf.mxu0
      %v3455 = vadd.f32 0.0, %v3454
      %3456 = vmatmul.f32.gmra.mxu0 %v3429
      %v3457 = vpop.f32.mrf.mxu0
      %v3458 = vadd.f32 0.0, %v3457
      %3459 = vdwg.mxu0
      %3460 = vmatpush.msra.mxu0 0.0
      %3461 = vmatpush.msra.mxu0 0.0
      %3462 = vmatpush.msra.mxu0 0.0
      %3463 = vmatpush.msra.mxu0 0.0
      %3464 = vmatpush.msra.mxu0 0.0
      %3465 = vmatpush.msra.mxu0 0.0
      %3466 = vmatpush.msra.mxu0 0.0
      %3467 = vmatpush.msra.mxu0 0.0
      %3468 = vmatpush.msra.mxu0 0.0
      %3469 = vmatpush.msra.mxu0 0.0
      %3470 = vmatpush.msra.mxu0 0.0
      %3471 = vmatpush.msra.mxu0 0.0
      %3472 = vmatpush.msra.mxu0 0.0
      %3473 = vmatpush.msra.mxu0 0.0
      %3474 = vmatpush.msra.mxu0 0.0
      %3475 = vmatpush.msra.mxu0 %v3418
      %3476 = vmatmul.f32.gmra.mxu0 %v3420
      %v3477 = vpop.f32.mrf.mxu0
      %v3478 = vadd.f32 0.0, %v3477
      %3479 = vmatmul.f32.gmra.mxu0 %v3423
      %v3480 = vpop.f32.mrf.mxu0
      %v3481 = vadd.f32 0.0, %v3480
      %3482 = vmatmul.f32.gmra.mxu0 %v3426
      %v3483 = vpop.f32.mrf.mxu0
      %v3484 = vadd.f32 0.0, %v3483
      %3485 = vmatmul.f32.gmra.mxu0 %v3429
      %v3486 = vpop.f32.mrf.mxu0
      %v3487 = vadd.f32 0.0, %v3486
      %3488 = vdwg.mxu0
      %v3489 = vadd.f32 %v3396, %v3449
      %v3490 = vadd.f32 %v3397, %v3478
      %v3491 = vadd.f32 %v3398, %v3452
      %v3492 = vadd.f32 %v3399, %v3481
      %v3493 = vadd.f32 %v3400, %v3455
      %v3494 = vadd.f32 %v3401, %v3484
      %v3495 = vadd.f32 %v3402, %v3458
      %v3496 = vadd.f32 %v3403, %v3487
      %s3497 = scalar_lea.vmem %s9, 160
      %v3498 = vld [vmem:[%s3497] sm:$0xff]
      %v3499 = vld [vmem:[%s3497 + $0x8] sm:$0xff]
      %v3500 = vld [vmem:[%s3497 + $0x10] sm:$0xff]
      %v3501 = vld [vmem:[%s3497 + $0x18] sm:$0xff]
      %3502 = vrot.lane.b32.xlu0 %v2508, 127
      %v3503 = vpop.permute.xlu0 %3502
      %3504 = vrot.lane.b32.xlu0 %v2509, 127
      %v3505 = vpop.permute.xlu0 %3504
      %v3506 = vsel %vm1580, %v3503, %v3505
      %v3509 = vsel %vm1580, %v3505, 0.0
      %v3510 = vsel %vm1018, %v3506, 0.0
      %v3511 = vsel %vm1019, %v3509, 0.0
      %v3513 = vsel %vm658, %v3498, 0
      %v3516 = vsel %vm658, %v3499, 0
      %v3519 = vsel %vm658, %v3500, 0
      %v3522 = vsel %vm658, %v3501, 0
      %3524 = vmatpush.msra.mxu0 0.0
      %3525 = vmatpush.msra.mxu0 0.0
      %3526 = vmatpush.msra.mxu0 0.0
      %3527 = vmatpush.msra.mxu0 0.0
      %3528 = vmatpush.msra.mxu0 0.0
      %3529 = vmatpush.msra.mxu0 0.0
      %3530 = vmatpush.msra.mxu0 0.0
      %3531 = vmatpush.msra.mxu0 0.0
      %3532 = vmatpush.msra.mxu0 0.0
      %3533 = vmatpush.msra.mxu0 0.0
      %3534 = vmatpush.msra.mxu0 0.0
      %3535 = vmatpush.msra.mxu0 0.0
      %3536 = vmatpush.msra.mxu0 0.0
      %3537 = vmatpush.msra.mxu0 0.0
      %3538 = vmatpush.msra.mxu0 0.0
      %3539 = vmatpush.msra.mxu0 %v3510
      %3540 = vmatmul.f32.gmra.mxu0 %v3513
      %v3541 = vpop.f32.mrf.mxu0
      %v3542 = vadd.f32 0.0, %v3541
      %3543 = vmatmul.f32.gmra.mxu0 %v3516
      %v3544 = vpop.f32.mrf.mxu0
      %v3545 = vadd.f32 0.0, %v3544
      %3546 = vmatmul.f32.gmra.mxu0 %v3519
      %v3547 = vpop.f32.mrf.mxu0
      %v3548 = vadd.f32 0.0, %v3547
      %3549 = vmatmul.f32.gmra.mxu0 %v3522
      %v3550 = vpop.f32.mrf.mxu0
      %v3551 = vadd.f32 0.0, %v3550
      %3552 = vdwg.mxu0
      %3553 = vmatpush.msra.mxu0 0.0
      %3554 = vmatpush.msra.mxu0 0.0
      %3555 = vmatpush.msra.mxu0 0.0
      %3556 = vmatpush.msra.mxu0 0.0
      %3557 = vmatpush.msra.mxu0 0.0
      %3558 = vmatpush.msra.mxu0 0.0
      %3559 = vmatpush.msra.mxu0 0.0
      %3560 = vmatpush.msra.mxu0 0.0
      %3561 = vmatpush.msra.mxu0 0.0
      %3562 = vmatpush.msra.mxu0 0.0
      %3563 = vmatpush.msra.mxu0 0.0
      %3564 = vmatpush.msra.mxu0 0.0
      %3565 = vmatpush.msra.mxu0 0.0
      %3566 = vmatpush.msra.mxu0 0.0
      %3567 = vmatpush.msra.mxu0 0.0
      %3568 = vmatpush.msra.mxu0 %v3511
      %3569 = vmatmul.f32.gmra.mxu0 %v3513
      %v3570 = vpop.f32.mrf.mxu0
      %v3571 = vadd.f32 0.0, %v3570
      %3572 = vmatmul.f32.gmra.mxu0 %v3516
      %v3573 = vpop.f32.mrf.mxu0
      %v3574 = vadd.f32 0.0, %v3573
      %3575 = vmatmul.f32.gmra.mxu0 %v3519
      %v3576 = vpop.f32.mrf.mxu0
      %v3577 = vadd.f32 0.0, %v3576
      %3578 = vmatmul.f32.gmra.mxu0 %v3522
      %v3579 = vpop.f32.mrf.mxu0
      %v3580 = vadd.f32 0.0, %v3579
      %3581 = vdwg.mxu0
      %v3582 = vadd.f32 %v3489, %v3542
      %v3583 = vadd.f32 %v3490, %v3571
      %v3584 = vadd.f32 %v3491, %v3545
      %v3585 = vadd.f32 %v3492, %v3574
      %v3586 = vadd.f32 %v3493, %v3548
      %v3587 = vadd.f32 %v3494, %v3577
      %v3588 = vadd.f32 %v3495, %v3551
      %v3589 = vadd.f32 %v3496, %v3580
      %s3590 = scalar_lea.vmem %s8, 192
      %v3591 = vld [vmem:[%s3590] sm:$0xff]
      %v3592 = vld [vmem:[%s3590 + $0x8] sm:$0xff]
      %v3593 = vld [vmem:[%s3590 + $0x10] sm:$0xff]
      %v3594 = vld [vmem:[%s3590 + $0x18] sm:$0xff]
      %3595 = vrot.lane.b32.xlu0 %v2502, 113
      %v3596 = vpop.permute.xlu0 %3595
      %3597 = vrot.lane.b32.xlu0 %v2503, 113
      %v3598 = vpop.permute.xlu0 %3597
      %v3599 = vsel %vm1776, %v3596, %v3598
      %v3602 = vsel %vm1776, %v3598, 0.0
      %v3603 = vsel %vm638, %v3599, 0.0
      %v3604 = vsel %vm639, %v3602, 0.0
      %v3606 = vsel %vm658, %v3591, 0
      %v3609 = vsel %vm658, %v3592, 0
      %v3612 = vsel %vm658, %v3593, 0
      %v3615 = vsel %vm658, %v3594, 0
      %3617 = vmatpush.msra.mxu0 0.0
      %3618 = vmatpush.msra.mxu0 0.0
      %3619 = vmatpush.msra.mxu0 0.0
      %3620 = vmatpush.msra.mxu0 0.0
      %3621 = vmatpush.msra.mxu0 0.0
      %3622 = vmatpush.msra.mxu0 0.0
      %3623 = vmatpush.msra.mxu0 0.0
      %3624 = vmatpush.msra.mxu0 0.0
      %3625 = vmatpush.msra.mxu0 0.0
      %3626 = vmatpush.msra.mxu0 0.0
      %3627 = vmatpush.msra.mxu0 0.0
      %3628 = vmatpush.msra.mxu0 0.0
      %3629 = vmatpush.msra.mxu0 0.0
      %3630 = vmatpush.msra.mxu0 0.0
      %3631 = vmatpush.msra.mxu0 0.0
      %3632 = vmatpush.msra.mxu0 %v3603
      %3633 = vmatmul.f32.gmra.mxu0 %v3606
      %v3634 = vpop.f32.mrf.mxu0
      %v3635 = vadd.f32 0.0, %v3634
      %3636 = vmatmul.f32.gmra.mxu0 %v3609
      %v3637 = vpop.f32.mrf.mxu0
      %v3638 = vadd.f32 0.0, %v3637
      %3639 = vmatmul.f32.gmra.mxu0 %v3612
      %v3640 = vpop.f32.mrf.mxu0
      %v3641 = vadd.f32 0.0, %v3640
      %3642 = vmatmul.f32.gmra.mxu0 %v3615
      %v3643 = vpop.f32.mrf.mxu0
      %v3644 = vadd.f32 0.0, %v3643
      %3645 = vdwg.mxu0
      %3646 = vmatpush.msra.mxu0 0.0
      %3647 = vmatpush.msra.mxu0 0.0
      %3648 = vmatpush.msra.mxu0 0.0
      %3649 = vmatpush.msra.mxu0 0.0
      %3650 = vmatpush.msra.mxu0 0.0
      %3651 = vmatpush.msra.mxu0 0.0
      %3652 = vmatpush.msra.mxu0 0.0
      %3653 = vmatpush.msra.mxu0 0.0
      %3654 = vmatpush.msra.mxu0 0.0
      %3655 = vmatpush.msra.mxu0 0.0
      %3656 = vmatpush.msra.mxu0 0.0
      %3657 = vmatpush.msra.mxu0 0.0
      %3658 = vmatpush.msra.mxu0 0.0
      %3659 = vmatpush.msra.mxu0 0.0
      %3660 = vmatpush.msra.mxu0 0.0
      %3661 = vmatpush.msra.mxu0 %v3604
      %3662 = vmatmul.f32.gmra.mxu0 %v3606
      %v3663 = vpop.f32.mrf.mxu0
      %v3664 = vadd.f32 0.0, %v3663
      %3665 = vmatmul.f32.gmra.mxu0 %v3609
      %v3666 = vpop.f32.mrf.mxu0
      %v3667 = vadd.f32 0.0, %v3666
      %3668 = vmatmul.f32.gmra.mxu0 %v3612
      %v3669 = vpop.f32.mrf.mxu0
      %v3670 = vadd.f32 0.0, %v3669
      %3671 = vmatmul.f32.gmra.mxu0 %v3615
      %v3672 = vpop.f32.mrf.mxu0
      %v3673 = vadd.f32 0.0, %v3672
      %3674 = vdwg.mxu0
      %v3675 = vadd.f32 %v3582, %v3635
      %v3676 = vadd.f32 %v3583, %v3664
      %v3677 = vadd.f32 %v3584, %v3638
      %v3678 = vadd.f32 %v3585, %v3667
      %v3679 = vadd.f32 %v3586, %v3641
      %v3680 = vadd.f32 %v3587, %v3670
      %v3681 = vadd.f32 %v3588, %v3644
      %v3682 = vadd.f32 %v3589, %v3673
      %s3683 = scalar_lea.vmem %s9, 192
      %v3684 = vld [vmem:[%s3683] sm:$0xff]
      %v3685 = vld [vmem:[%s3683 + $0x8] sm:$0xff]
      %v3686 = vld [vmem:[%s3683 + $0x10] sm:$0xff]
      %v3687 = vld [vmem:[%s3683 + $0x18] sm:$0xff]
      %3688 = vrot.lane.b32.xlu0 %v2508, 113
      %v3689 = vpop.permute.xlu0 %3688
      %3690 = vrot.lane.b32.xlu0 %v2509, 113
      %v3691 = vpop.permute.xlu0 %3690
      %v3692 = vsel %vm1776, %v3689, %v3691
      %v3695 = vsel %vm1776, %v3691, 0.0
      %v3696 = vsel %vm638, %v3692, 0.0
      %v3697 = vsel %vm639, %v3695, 0.0
      %v3699 = vsel %vm658, %v3684, 0
      %v3702 = vsel %vm658, %v3685, 0
      %v3705 = vsel %vm658, %v3686, 0
      %v3708 = vsel %vm658, %v3687, 0
      %3710 = vmatpush.msra.mxu0 0.0
      %3711 = vmatpush.msra.mxu0 0.0
      %3712 = vmatpush.msra.mxu0 0.0
      %3713 = vmatpush.msra.mxu0 0.0
      %3714 = vmatpush.msra.mxu0 0.0
      %3715 = vmatpush.msra.mxu0 0.0
      %3716 = vmatpush.msra.mxu0 0.0
      %3717 = vmatpush.msra.mxu0 0.0
      %3718 = vmatpush.msra.mxu0 0.0
      %3719 = vmatpush.msra.mxu0 0.0
      %3720 = vmatpush.msra.mxu0 0.0
      %3721 = vmatpush.msra.mxu0 0.0
      %3722 = vmatpush.msra.mxu0 0.0
      %3723 = vmatpush.msra.mxu0 0.0
      %3724 = vmatpush.msra.mxu0 0.0
      %3725 = vmatpush.msra.mxu0 %v3696
      %3726 = vmatmul.f32.gmra.mxu0 %v3699
      %v3727 = vpop.f32.mrf.mxu0
      %v3728 = vadd.f32 0.0, %v3727
      %3729 = vmatmul.f32.gmra.mxu0 %v3702
      %v3730 = vpop.f32.mrf.mxu0
      %v3731 = vadd.f32 0.0, %v3730
      %3732 = vmatmul.f32.gmra.mxu0 %v3705
      %v3733 = vpop.f32.mrf.mxu0
      %v3734 = vadd.f32 0.0, %v3733
      %3735 = vmatmul.f32.gmra.mxu0 %v3708
      %v3736 = vpop.f32.mrf.mxu0
      %v3737 = vadd.f32 0.0, %v3736
      %3738 = vdwg.mxu0
      %3739 = vmatpush.msra.mxu0 0.0
      %3740 = vmatpush.msra.mxu0 0.0
      %3741 = vmatpush.msra.mxu0 0.0
      %3742 = vmatpush.msra.mxu0 0.0
      %3743 = vmatpush.msra.mxu0 0.0
      %3744 = vmatpush.msra.mxu0 0.0
      %3745 = vmatpush.msra.mxu0 0.0
      %3746 = vmatpush.msra.mxu0 0.0
      %3747 = vmatpush.msra.mxu0 0.0
      %3748 = vmatpush.msra.mxu0 0.0
      %3749 = vmatpush.msra.mxu0 0.0
      %3750 = vmatpush.msra.mxu0 0.0
      %3751 = vmatpush.msra.mxu0 0.0
      %3752 = vmatpush.msra.mxu0 0.0
      %3753 = vmatpush.msra.mxu0 0.0
      %3754 = vmatpush.msra.mxu0 %v3697
      %3755 = vmatmul.f32.gmra.mxu0 %v3699
      %v3756 = vpop.f32.mrf.mxu0
      %v3757 = vadd.f32 0.0, %v3756
      %3758 = vmatmul.f32.gmra.mxu0 %v3702
      %v3759 = vpop.f32.mrf.mxu0
      %v3760 = vadd.f32 0.0, %v3759
      %3761 = vmatmul.f32.gmra.mxu0 %v3705
      %v3762 = vpop.f32.mrf.mxu0
      %v3763 = vadd.f32 0.0, %v3762
      %3764 = vmatmul.f32.gmra.mxu0 %v3708
      %v3765 = vpop.f32.mrf.mxu0
      %v3766 = vadd.f32 0.0, %v3765
      %3767 = vdwg.mxu0
      %v3768 = vadd.f32 %v3675, %v3728
      %v3769 = vadd.f32 %v3676, %v3757
      %v3770 = vadd.f32 %v3677, %v3731
      %v3771 = vadd.f32 %v3678, %v3760
      %v3772 = vadd.f32 %v3679, %v3734
      %v3773 = vadd.f32 %v3680, %v3763
      %v3774 = vadd.f32 %v3681, %v3737
      %v3775 = vadd.f32 %v3682, %v3766
      %s3776 = scalar_lea.vmem %s8, 224
      %v3777 = vld [vmem:[%s3776] sm:$0xff]
      %v3778 = vld [vmem:[%s3776 + $0x8] sm:$0xff]
      %v3779 = vld [vmem:[%s3776 + $0x10] sm:$0xff]
      %v3780 = vld [vmem:[%s3776 + $0x18] sm:$0xff]
      %3781 = vrot.lane.b32.xlu0 %v2502, 112
      %v3782 = vpop.permute.xlu0 %3781
      %3783 = vrot.lane.b32.xlu0 %v2503, 112
      %v3784 = vpop.permute.xlu0 %3783
      %v3785 = vsel %vm1972, %v3782, %v3784
      %v3788 = vsel %vm1972, %v3784, 0.0
      %v3790 = vsel %vm658, %v3777, 0
      %v3793 = vsel %vm658, %v3778, 0
      %v3796 = vsel %vm658, %v3779, 0
      %v3799 = vsel %vm658, %v3780, 0
      %3801 = vmatpush.msra.mxu0 0.0
      %3802 = vmatpush.msra.mxu0 0.0
      %3803 = vmatpush.msra.mxu0 0.0
      %3804 = vmatpush.msra.mxu0 0.0
      %3805 = vmatpush.msra.mxu0 0.0
      %3806 = vmatpush.msra.mxu0 0.0
      %3807 = vmatpush.msra.mxu0 0.0
      %3808 = vmatpush.msra.mxu0 0.0
      %3809 = vmatpush.msra.mxu0 0.0
      %3810 = vmatpush.msra.mxu0 0.0
      %3811 = vmatpush.msra.mxu0 0.0
      %3812 = vmatpush.msra.mxu0 0.0
      %3813 = vmatpush.msra.mxu0 0.0
      %3814 = vmatpush.msra.mxu0 0.0
      %3815 = vmatpush.msra.mxu0 0.0
      %3816 = vmatpush.msra.mxu0 %v3785
      %3817 = vmatmul.f32.gmra.mxu0 %v3790
      %v3818 = vpop.f32.mrf.mxu0
      %v3819 = vadd.f32 0.0, %v3818
      %3820 = vmatmul.f32.gmra.mxu0 %v3793
      %v3821 = vpop.f32.mrf.mxu0
      %v3822 = vadd.f32 0.0, %v3821
      %3823 = vmatmul.f32.gmra.mxu0 %v3796
      %v3824 = vpop.f32.mrf.mxu0
      %v3825 = vadd.f32 0.0, %v3824
      %3826 = vmatmul.f32.gmra.mxu0 %v3799
      %v3827 = vpop.f32.mrf.mxu0
      %v3828 = vadd.f32 0.0, %v3827
      %3829 = vdwg.mxu0
      %3830 = vmatpush.msra.mxu0 0.0
      %3831 = vmatpush.msra.mxu0 0.0
      %3832 = vmatpush.msra.mxu0 0.0
      %3833 = vmatpush.msra.mxu0 0.0
      %3834 = vmatpush.msra.mxu0 0.0
      %3835 = vmatpush.msra.mxu0 0.0
      %3836 = vmatpush.msra.mxu0 0.0
      %3837 = vmatpush.msra.mxu0 0.0
      %3838 = vmatpush.msra.mxu0 0.0
      %3839 = vmatpush.msra.mxu0 0.0
      %3840 = vmatpush.msra.mxu0 0.0
      %3841 = vmatpush.msra.mxu0 0.0
      %3842 = vmatpush.msra.mxu0 0.0
      %3843 = vmatpush.msra.mxu0 0.0
      %3844 = vmatpush.msra.mxu0 0.0
      %3845 = vmatpush.msra.mxu0 %v3788
      %3846 = vmatmul.f32.gmra.mxu0 %v3790
      %v3847 = vpop.f32.mrf.mxu0
      %v3848 = vadd.f32 0.0, %v3847
      %3849 = vmatmul.f32.gmra.mxu0 %v3793
      %v3850 = vpop.f32.mrf.mxu0
      %v3851 = vadd.f32 0.0, %v3850
      %3852 = vmatmul.f32.gmra.mxu0 %v3796
      %v3853 = vpop.f32.mrf.mxu0
      %v3854 = vadd.f32 0.0, %v3853
      %3855 = vmatmul.f32.gmra.mxu0 %v3799
      %v3856 = vpop.f32.mrf.mxu0
      %v3857 = vadd.f32 0.0, %v3856
      %3858 = vdwg.mxu0
      %v3859 = vadd.f32 %v3768, %v3819
      %v3860 = vadd.f32 %v3769, %v3848
      %v3861 = vadd.f32 %v3770, %v3822
      %v3862 = vadd.f32 %v3771, %v3851
      %v3863 = vadd.f32 %v3772, %v3825
      %v3864 = vadd.f32 %v3773, %v3854
      %v3865 = vadd.f32 %v3774, %v3828
      %v3866 = vadd.f32 %v3775, %v3857
      %s3867 = scalar_lea.vmem %s9, 224
      %v3868 = vld [vmem:[%s3867] sm:$0xff]
      %v3869 = vld [vmem:[%s3867 + $0x8] sm:$0xff]
      %v3870 = vld [vmem:[%s3867 + $0x10] sm:$0xff]
      %v3871 = vld [vmem:[%s3867 + $0x18] sm:$0xff]
      %3872 = vrot.lane.b32.xlu0 %v2508, 112
      %v3873 = vpop.permute.xlu0 %3872
      %3874 = vrot.lane.b32.xlu0 %v2509, 112
      %v3875 = vpop.permute.xlu0 %3874
      %v3876 = vsel %vm1972, %v3873, %v3875
      %v3879 = vsel %vm1972, %v3875, 0.0
      %v3881 = vsel %vm658, %v3868, 0
      %v3884 = vsel %vm658, %v3869, 0
      %v3887 = vsel %vm658, %v3870, 0
      %v3890 = vsel %vm658, %v3871, 0
      %3892 = vmatpush.msra.mxu0 0.0
      %3893 = vmatpush.msra.mxu0 0.0
      %3894 = vmatpush.msra.mxu0 0.0
      %3895 = vmatpush.msra.mxu0 0.0
      %3896 = vmatpush.msra.mxu0 0.0
      %3897 = vmatpush.msra.mxu0 0.0
      %3898 = vmatpush.msra.mxu0 0.0
      %3899 = vmatpush.msra.mxu0 0.0
      %3900 = vmatpush.msra.mxu0 0.0
      %3901 = vmatpush.msra.mxu0 0.0
      %3902 = vmatpush.msra.mxu0 0.0
      %3903 = vmatpush.msra.mxu0 0.0
      %3904 = vmatpush.msra.mxu0 0.0
      %3905 = vmatpush.msra.mxu0 0.0
      %3906 = vmatpush.msra.mxu0 0.0
      %3907 = vmatpush.msra.mxu0 %v3876
      %3908 = vmatmul.f32.gmra.mxu0 %v3881
      %v3909 = vpop.f32.mrf.mxu0
      %v3910 = vadd.f32 0.0, %v3909
      %3911 = vmatmul.f32.gmra.mxu0 %v3884
      %v3912 = vpop.f32.mrf.mxu0
      %v3913 = vadd.f32 0.0, %v3912
      %3914 = vmatmul.f32.gmra.mxu0 %v3887
      %v3915 = vpop.f32.mrf.mxu0
      %v3916 = vadd.f32 0.0, %v3915
      %3917 = vmatmul.f32.gmra.mxu0 %v3890
      %v3918 = vpop.f32.mrf.mxu0
      %v3919 = vadd.f32 0.0, %v3918
      %3920 = vdwg.mxu0
      %3921 = vmatpush.msra.mxu0 0.0
      %3922 = vmatpush.msra.mxu0 0.0
      %3923 = vmatpush.msra.mxu0 0.0
      %3924 = vmatpush.msra.mxu0 0.0
      %3925 = vmatpush.msra.mxu0 0.0
      %3926 = vmatpush.msra.mxu0 0.0
      %3927 = vmatpush.msra.mxu0 0.0
      %3928 = vmatpush.msra.mxu0 0.0
      %3929 = vmatpush.msra.mxu0 0.0
      %3930 = vmatpush.msra.mxu0 0.0
      %3931 = vmatpush.msra.mxu0 0.0
      %3932 = vmatpush.msra.mxu0 0.0
      %3933 = vmatpush.msra.mxu0 0.0
      %3934 = vmatpush.msra.mxu0 0.0
      %3935 = vmatpush.msra.mxu0 0.0
      %3936 = vmatpush.msra.mxu0 %v3879
      %3937 = vmatmul.f32.gmra.mxu0 %v3881
      %v3938 = vpop.f32.mrf.mxu0
      %v3939 = vadd.f32 0.0, %v3938
      %3940 = vmatmul.f32.gmra.mxu0 %v3884
      %v3941 = vpop.f32.mrf.mxu0
      %v3942 = vadd.f32 0.0, %v3941
      %3943 = vmatmul.f32.gmra.mxu0 %v3887
      %v3944 = vpop.f32.mrf.mxu0
      %v3945 = vadd.f32 0.0, %v3944
      %3946 = vmatmul.f32.gmra.mxu0 %v3890
      %v3947 = vpop.f32.mrf.mxu0
      %v3948 = vadd.f32 0.0, %v3947
      %3949 = vdwg.mxu0
      %v3950 = vadd.f32 %v3859, %v3910
      %v3951 = vadd.f32 %v3860, %v3939
      %v3952 = vadd.f32 %v3861, %v3913
      %v3953 = vadd.f32 %v3862, %v3942
      %v3954 = vadd.f32 %v3863, %v3916
      %v3955 = vadd.f32 %v3864, %v3945
      %v3956 = vadd.f32 %v3865, %v3919
      %v3957 = vadd.f32 %v3866, %v3948
      %s3958 = scalar_lea.vmem %s8, 256
      %v3959 = vld [vmem:[%s3958] sm:$0xff]
      %v3960 = vld [vmem:[%s3958 + $0x8] sm:$0xff]
      %v3961 = vld [vmem:[%s3958 + $0x10] sm:$0xff]
      %v3962 = vld [vmem:[%s3958 + $0x18] sm:$0xff]
      %3963 = vrot.lane.b32.xlu0 %v2502, 111
      %v3964 = vpop.permute.xlu0 %3963
      %3965 = vrot.lane.b32.xlu0 %v2503, 111
      %v3966 = vpop.permute.xlu0 %3965
      %v3967 = vsel %vm2162, %v3964, %v3966
      %v3970 = vsel %vm2162, %v3966, 0.0
      %v3971 = vsel %vm1018, %v3967, 0.0
      %v3972 = vsel %vm1019, %v3970, 0.0
      %v3974 = vsel %vm658, %v3959, 0
      %v3977 = vsel %vm658, %v3960, 0
      %v3980 = vsel %vm658, %v3961, 0
      %v3983 = vsel %vm658, %v3962, 0
      %3985 = vmatpush.msra.mxu0 0.0
      %3986 = vmatpush.msra.mxu0 0.0
      %3987 = vmatpush.msra.mxu0 0.0
      %3988 = vmatpush.msra.mxu0 0.0
      %3989 = vmatpush.msra.mxu0 0.0
      %3990 = vmatpush.msra.mxu0 0.0
      %3991 = vmatpush.msra.mxu0 0.0
      %3992 = vmatpush.msra.mxu0 0.0
      %3993 = vmatpush.msra.mxu0 0.0
      %3994 = vmatpush.msra.mxu0 0.0
      %3995 = vmatpush.msra.mxu0 0.0
      %3996 = vmatpush.msra.mxu0 0.0
      %3997 = vmatpush.msra.mxu0 0.0
      %3998 = vmatpush.msra.mxu0 0.0
      %3999 = vmatpush.msra.mxu0 0.0
      %4000 = vmatpush.msra.mxu0 %v3971
      %4001 = vmatmul.f32.gmra.mxu0 %v3974
      %v4002 = vpop.f32.mrf.mxu0
      %v4003 = vadd.f32 0.0, %v4002
      %4004 = vmatmul.f32.gmra.mxu0 %v3977
      %v4005 = vpop.f32.mrf.mxu0
      %v4006 = vadd.f32 0.0, %v4005
      %4007 = vmatmul.f32.gmra.mxu0 %v3980
      %v4008 = vpop.f32.mrf.mxu0
      %v4009 = vadd.f32 0.0, %v4008
      %4010 = vmatmul.f32.gmra.mxu0 %v3983
      %v4011 = vpop.f32.mrf.mxu0
      %v4012 = vadd.f32 0.0, %v4011
      %4013 = vdwg.mxu0
      %4014 = vmatpush.msra.mxu0 0.0
      %4015 = vmatpush.msra.mxu0 0.0
      %4016 = vmatpush.msra.mxu0 0.0
      %4017 = vmatpush.msra.mxu0 0.0
      %4018 = vmatpush.msra.mxu0 0.0
      %4019 = vmatpush.msra.mxu0 0.0
      %4020 = vmatpush.msra.mxu0 0.0
      %4021 = vmatpush.msra.mxu0 0.0
      %4022 = vmatpush.msra.mxu0 0.0
      %4023 = vmatpush.msra.mxu0 0.0
      %4024 = vmatpush.msra.mxu0 0.0
      %4025 = vmatpush.msra.mxu0 0.0
      %4026 = vmatpush.msra.mxu0 0.0
      %4027 = vmatpush.msra.mxu0 0.0
      %4028 = vmatpush.msra.mxu0 0.0
      %4029 = vmatpush.msra.mxu0 %v3972
      %4030 = vmatmul.f32.gmra.mxu0 %v3974
      %v4031 = vpop.f32.mrf.mxu0
      %v4032 = vadd.f32 0.0, %v4031
      %4033 = vmatmul.f32.gmra.mxu0 %v3977
      %v4034 = vpop.f32.mrf.mxu0
      %v4035 = vadd.f32 0.0, %v4034
      %4036 = vmatmul.f32.gmra.mxu0 %v3980
      %v4037 = vpop.f32.mrf.mxu0
      %v4038 = vadd.f32 0.0, %v4037
      %4039 = vmatmul.f32.gmra.mxu0 %v3983
      %v4040 = vpop.f32.mrf.mxu0
      %v4041 = vadd.f32 0.0, %v4040
      %4042 = vdwg.mxu0
      %v4043 = vadd.f32 %v3950, %v4003
      %v4044 = vadd.f32 %v3951, %v4032
      %v4045 = vadd.f32 %v3952, %v4006
      %v4046 = vadd.f32 %v3953, %v4035
      %v4047 = vadd.f32 %v3954, %v4009
      %v4048 = vadd.f32 %v3955, %v4038
      %v4049 = vadd.f32 %v3956, %v4012
      %v4050 = vadd.f32 %v3957, %v4041
      %s4051 = scalar_lea.vmem %s9, 256
      %v4052 = vld [vmem:[%s4051] sm:$0xff]
      %v4053 = vld [vmem:[%s4051 + $0x8] sm:$0xff]
      %v4054 = vld [vmem:[%s4051 + $0x10] sm:$0xff]
      %v4055 = vld [vmem:[%s4051 + $0x18] sm:$0xff]
      %4056 = vrot.lane.b32.xlu0 %v2508, 111
      %v4057 = vpop.permute.xlu0 %4056
      %4058 = vrot.lane.b32.xlu0 %v2509, 111
      %v4059 = vpop.permute.xlu0 %4058
      %v4060 = vsel %vm2162, %v4057, %v4059
      %v4063 = vsel %vm2162, %v4059, 0.0
      %v4064 = vsel %vm1018, %v4060, 0.0
      %v4065 = vsel %vm1019, %v4063, 0.0
      %v4067 = vsel %vm658, %v4052, 0
      %v4070 = vsel %vm658, %v4053, 0
      %v4073 = vsel %vm658, %v4054, 0
      %v4076 = vsel %vm658, %v4055, 0
      %4078 = vmatpush.msra.mxu0 0.0
      %4079 = vmatpush.msra.mxu0 0.0
      %4080 = vmatpush.msra.mxu0 0.0
      %4081 = vmatpush.msra.mxu0 0.0
      %4082 = vmatpush.msra.mxu0 0.0
      %4083 = vmatpush.msra.mxu0 0.0
      %4084 = vmatpush.msra.mxu0 0.0
      %4085 = vmatpush.msra.mxu0 0.0
      %4086 = vmatpush.msra.mxu0 0.0
      %4087 = vmatpush.msra.mxu0 0.0
      %4088 = vmatpush.msra.mxu0 0.0
      %4089 = vmatpush.msra.mxu0 0.0
      %4090 = vmatpush.msra.mxu0 0.0
      %4091 = vmatpush.msra.mxu0 0.0
      %4092 = vmatpush.msra.mxu0 0.0
      %4093 = vmatpush.msra.mxu0 %v4064
      %4094 = vmatmul.f32.gmra.mxu0 %v4067
      %v4095 = vpop.f32.mrf.mxu0
      %v4096 = vadd.f32 0.0, %v4095
      %4097 = vmatmul.f32.gmra.mxu0 %v4070
      %v4098 = vpop.f32.mrf.mxu0
      %v4099 = vadd.f32 0.0, %v4098
      %4100 = vmatmul.f32.gmra.mxu0 %v4073
      %v4101 = vpop.f32.mrf.mxu0
      %v4102 = vadd.f32 0.0, %v4101
      %4103 = vmatmul.f32.gmra.mxu0 %v4076
      %v4104 = vpop.f32.mrf.mxu0
      %v4105 = vadd.f32 0.0, %v4104
      %4106 = vdwg.mxu0
      %4107 = vmatpush.msra.mxu0 0.0
      %4108 = vmatpush.msra.mxu0 0.0
      %4109 = vmatpush.msra.mxu0 0.0
      %4110 = vmatpush.msra.mxu0 0.0
      %4111 = vmatpush.msra.mxu0 0.0
      %4112 = vmatpush.msra.mxu0 0.0
      %4113 = vmatpush.msra.mxu0 0.0
      %4114 = vmatpush.msra.mxu0 0.0
      %4115 = vmatpush.msra.mxu0 0.0
      %4116 = vmatpush.msra.mxu0 0.0
      %4117 = vmatpush.msra.mxu0 0.0
      %4118 = vmatpush.msra.mxu0 0.0
      %4119 = vmatpush.msra.mxu0 0.0
      %4120 = vmatpush.msra.mxu0 0.0
      %4121 = vmatpush.msra.mxu0 0.0
      %4122 = vmatpush.msra.mxu0 %v4065
      %4123 = vmatmul.f32.gmra.mxu0 %v4067
      %v4124 = vpop.f32.mrf.mxu0
      %v4125 = vadd.f32 0.0, %v4124
      %4126 = vmatmul.f32.gmra.mxu0 %v4070
      %v4127 = vpop.f32.mrf.mxu0
      %v4128 = vadd.f32 0.0, %v4127
      %4129 = vmatmul.f32.gmra.mxu0 %v4073
      %v4130 = vpop.f32.mrf.mxu0
      %v4131 = vadd.f32 0.0, %v4130
      %4132 = vmatmul.f32.gmra.mxu0 %v4076
      %v4133 = vpop.f32.mrf.mxu0
      %v4134 = vadd.f32 0.0, %v4133
      %4135 = vdwg.mxu0
      %v4136 = vadd.f32 %v4043, %v4096
      %v4137 = vadd.f32 %v4044, %v4125
      %v4138 = vadd.f32 %v4045, %v4099
      %v4139 = vadd.f32 %v4046, %v4128
      %v4140 = vadd.f32 %v4047, %v4102
      %v4141 = vadd.f32 %v4048, %v4131
      %v4142 = vadd.f32 %v4049, %v4105
      %v4143 = vadd.f32 %v4050, %v4134
      %v4144 = vld [vmem:[%s10] sm:$0xff]
      %v4145 = vld [vmem:[%s10 + $0x8] sm:$0xff]
      %v4146 = vld [vmem:[%s10 + $0x10] sm:$0xff]
      %v4147 = vld [vmem:[%s10 + $0x18] sm:$0xff]
      %4149 = vset.pattern.permute.xlu0 0
      %4150 = vperm.xlu0 %4149, %v4144
      %v4151 = vpop.permute.xlu0 %4150
      %4154 = vset.pattern.permute.xlu0 0
      %4155 = vperm.xlu0 %4154, %v4145
      %v4156 = vpop.permute.xlu0 %4155
      %4159 = vset.pattern.permute.xlu0 0
      %4160 = vperm.xlu0 %4159, %v4146
      %v4161 = vpop.permute.xlu0 %4160
      %4164 = vset.pattern.permute.xlu0 0
      %4165 = vperm.xlu0 %4164, %v4147
      %v4166 = vpop.permute.xlu0 %4165
      %v4168 = vadd.f32 %v4136, %v4151
      %v4169 = vadd.f32 %v4137, %v4151
      %v4170 = vadd.f32 %v4138, %v4156
      %v4171 = vadd.f32 %v4139, %v4156
      %v4172 = vadd.f32 %v4140, %v4161
      %v4173 = vadd.f32 %v4141, %v4161
      %v4174 = vadd.f32 %v4142, %v4166
      %v4175 = vadd.f32 %v4143, %v4166
      %v4176 = vxor.u32 %v4168, 2147483648
      %v4177 = vxor.u32 %v4169, 2147483648
      %v4178 = vmul.f32 %v4176, 1.442695
      %v4179 = vpow.pop %v4178
      %v4180 = vmul.f32 %v4177, 1.442695
      %v4181 = vpow.pop %v4180
      %v4182 = vadd.f32 %v4179, 1.0
      %v4183 = vadd.f32 %v4181, 1.0
      %v4184 = vrcp.pop %v4182
      %v4185 = vmul.f32 %v4182, %v4184
      %v4186 = vsub.f32 1.0, %v4185
      %v4187 = vmul.f32 %v4184, %v4186
      %v4188 = vadd.f32 %v4184, %v4187
      %vm4189 = vweird.f32 %v4182
      %vm4190 = vweird.f32 %v4184
      %vm4191 = vmor %vm4189, %vm4190
      %v4192 = vsel %vm4191, %v4184, %v4188
      %v4193 = vand.u32 2147483647, %v4182
      %vm4194 = vcmp.eq.f32.partialorder %v4193, 8.507059e+37
      %v4195 = vand.u32 %v4182, 2147483648
      %v4196 = vor.u32 1.1754944e-38, %v4195
      %v4197 = vsel %vm4194, %v4196, %v4192
      %v4198 = vmul.f32 1.0, %v4197
      %v4199 = vrcp.pop %v4183
      %v4200 = vmul.f32 %v4183, %v4199
      %v4201 = vsub.f32 1.0, %v4200
      %v4202 = vmul.f32 %v4199, %v4201
      %v4203 = vadd.f32 %v4199, %v4202
      %vm4204 = vweird.f32 %v4183
      %vm4205 = vweird.f32 %v4199
      %vm4206 = vmor %vm4204, %vm4205
      %v4207 = vsel %vm4206, %v4199, %v4203
      %v4208 = vand.u32 2147483647, %v4183
      %vm4209 = vcmp.eq.f32.partialorder %v4208, 8.507059e+37
      %v4210 = vand.u32 %v4183, 2147483648
      %v4211 = vor.u32 1.1754944e-38, %v4210
      %v4212 = vsel %vm4209, %v4211, %v4207
      %v4213 = vmul.f32 1.0, %v4212
      %v4214 = vxor.u32 %v4170, 2147483648
      %v4215 = vxor.u32 %v4171, 2147483648
      %v4216 = vmul.f32 %v4214, 1.442695
      %v4217 = vpow.pop %v4216
      %v4218 = vmul.f32 %v4215, 1.442695
      %v4219 = vpow.pop %v4218
      %v4220 = vadd.f32 %v4217, 1.0
      %v4221 = vadd.f32 %v4219, 1.0
      %v4222 = vrcp.pop %v4220
      %v4223 = vmul.f32 %v4220, %v4222
      %v4224 = vsub.f32 1.0, %v4223
      %v4225 = vmul.f32 %v4222, %v4224
      %v4226 = vadd.f32 %v4222, %v4225
      %vm4227 = vweird.f32 %v4220
      %vm4228 = vweird.f32 %v4222
      %vm4229 = vmor %vm4227, %vm4228
      %v4230 = vsel %vm4229, %v4222, %v4226
      %v4231 = vand.u32 2147483647, %v4220
      %vm4232 = vcmp.eq.f32.partialorder %v4231, 8.507059e+37
      %v4233 = vand.u32 %v4220, 2147483648
      %v4234 = vor.u32 1.1754944e-38, %v4233
      %v4235 = vsel %vm4232, %v4234, %v4230
      %v4236 = vmul.f32 1.0, %v4235
      %v4237 = vrcp.pop %v4221
      %v4238 = vmul.f32 %v4221, %v4237
      %v4239 = vsub.f32 1.0, %v4238
      %v4240 = vmul.f32 %v4237, %v4239
      %v4241 = vadd.f32 %v4237, %v4240
      %vm4242 = vweird.f32 %v4221
      %vm4243 = vweird.f32 %v4237
      %vm4244 = vmor %vm4242, %vm4243
      %v4245 = vsel %vm4244, %v4237, %v4241
      %v4246 = vand.u32 2147483647, %v4221
      %vm4247 = vcmp.eq.f32.partialorder %v4246, 8.507059e+37
      %v4248 = vand.u32 %v4221, 2147483648
      %v4249 = vor.u32 1.1754944e-38, %v4248
      %v4250 = vsel %vm4247, %v4249, %v4245
      %v4251 = vmul.f32 1.0, %v4250
      %v4252 = vxor.u32 %v4172, 2147483648
      %v4253 = vxor.u32 %v4173, 2147483648
      %v4254 = vmul.f32 %v4252, 1.442695
      %v4255 = vpow.pop %v4254
      %v4256 = vmul.f32 %v4253, 1.442695
      %v4257 = vpow.pop %v4256
      %v4258 = vadd.f32 %v4255, 1.0
      %v4259 = vadd.f32 %v4257, 1.0
      %v4260 = vrcp.pop %v4258
      %v4261 = vmul.f32 %v4258, %v4260
      %v4262 = vsub.f32 1.0, %v4261
      %v4263 = vmul.f32 %v4260, %v4262
      %v4264 = vadd.f32 %v4260, %v4263
      %vm4265 = vweird.f32 %v4258
      %vm4266 = vweird.f32 %v4260
      %vm4267 = vmor %vm4265, %vm4266
      %v4268 = vsel %vm4267, %v4260, %v4264
      %v4269 = vand.u32 2147483647, %v4258
      %vm4270 = vcmp.eq.f32.partialorder %v4269, 8.507059e+37
      %v4271 = vand.u32 %v4258, 2147483648
      %v4272 = vor.u32 1.1754944e-38, %v4271
      %v4273 = vsel %vm4270, %v4272, %v4268
      %v4274 = vmul.f32 1.0, %v4273
      %v4275 = vrcp.pop %v4259
      %v4276 = vmul.f32 %v4259, %v4275
      %v4277 = vsub.f32 1.0, %v4276
      %v4278 = vmul.f32 %v4275, %v4277
      %v4279 = vadd.f32 %v4275, %v4278
      %vm4280 = vweird.f32 %v4259
      %vm4281 = vweird.f32 %v4275
      %vm4282 = vmor %vm4280, %vm4281
      %v4283 = vsel %vm4282, %v4275, %v4279
      %v4284 = vand.u32 2147483647, %v4259
      %vm4285 = vcmp.eq.f32.partialorder %v4284, 8.507059e+37
      %v4286 = vand.u32 %v4259, 2147483648
      %v4287 = vor.u32 1.1754944e-38, %v4286
      %v4288 = vsel %vm4285, %v4287, %v4283
      %v4289 = vmul.f32 1.0, %v4288
      %v4290 = vtanh.pop %v4174
      %v4291 = vtanh.pop %v4175
      %v4292 = vmul.f32 %v4236, %v2510
      %v4293 = vmul.f32 %v4251, %v2511
      %v4294 = vmul.f32 %v4198, %v4290
      %v4295 = vmul.f32 %v4213, %v4291
      %v4296 = vadd.f32 %v4292, %v4294
      %v4297 = vadd.f32 %v4293, %v4295
      %v4298 = vtanh.pop %v4296
      %v4299 = vtanh.pop %v4297
      %v4300 = vmul.f32 %v4274, %v4298
      %v4301 = vmul.f32 %v4289, %v4299
      %4302 = vst [vmem:[%s579] sm:$0xff] %v4300
      %4303 = vst [vmem:[%s579 + $0x8] sm:$0xff] %v4301
      %4304 = vst [vmem:[%s584] sm:$0xff] %v4296
      %4305 = vst [vmem:[%s584 + $0x8] sm:$0xff] %v4297
      %p4306 = scmp.lt.s32.totalorder %s26, 1
      %s4307 = scalar_select %p4306, %s26, 1
      %s4308 = smul.addr %s4307, 2
      %s4309 = smul.addr %s4308, 8
      %s4310 = scalar_lea.vmem %s11, %s4309
      %p4311 = scmp.lt.s32.totalorder %s26, 1
      %s4312 = scalar_select %p4311, %s26, 1
      %s4313 = smul.addr %s4312, 2
      %s4314 = smul.addr %s4313, 8
      %s4315 = scalar_lea.vmem %s12, %s4314
      %p4316 = scmp.lt.s32.totalorder %s26, 1
      %s4317 = scalar_select %p4316, %s26, 1
      %s4318 = smul.addr %s4317, 2
      %s4319 = smul.addr %s4318, 8
      %s4320 = scalar_lea.vmem %s13, %s4319
      %p4321 = scmp.lt.s32.totalorder %s26, 1
      %s4322 = scalar_select %p4321, %s26, 1
      %s4323 = smul.addr %s4322, 2
      %s4324 = smul.addr %s4323, 8
      %s4325 = scalar_lea.vmem %s14, %s4324
      // Predicated region
      $region65: #{convlstm2_forward.1} parent=63 // pred_check
        %p4326 = pneg %p300
      $region66: #{convlstm2_forward.1} parent=63 // pred_check_branch
        %4328 = sbr.rel (%p4326) target = $region68
      $region67: #{convlstm2_forward.1} parent=63 // pred_region
        _
      $region68: #{convlstm2_forward.1} parent=63 // pred_fallthru
        _
      // Predicated region
      $region69: #{convlstm2_forward.1} parent=63 // pred_check
        %p4329 = pneg %p326
      $region70: #{convlstm2_forward.1} parent=63 // pred_check_branch
        %4331 = sbr.rel (%p4329) target = $region72
      $region71: #{convlstm2_forward.1} parent=63 // pred_region
        _
      $region72: #{convlstm2_forward.1} parent=63 // pred_fallthru
        _
      // Predicated region
      $region73: #{convlstm2_forward.1} parent=63 // pred_check
        %p4332 = pneg %p352
      $region74: #{convlstm2_forward.1} parent=63 // pred_check_branch
        %4334 = sbr.rel (%p4332) target = $region76
      $region75: #{convlstm2_forward.1} parent=63 // pred_region
        _
      $region76: #{convlstm2_forward.1} parent=63 // pred_fallthru
        _
      // Predicated region
      $region77: #{convlstm2_forward.1} parent=63 // pred_check
        %p4335 = pneg %p378
      $region78: #{convlstm2_forward.1} parent=63 // pred_check_branch
        %4337 = sbr.rel (%p4335) target = $region80
      $region79: #{convlstm2_forward.1} parent=63 // pred_region
        _
      $region80: #{convlstm2_forward.1} parent=63 // pred_fallthru
        _
    $region64: #{convlstm2_forward.1} parent=5 // pred_fallthru
      _
    %p4338 = scmp.le.s32.totalorder 2, %s21
    // Predicated region
    $region81: #{convlstm2_forward.1} parent=5 // pred_check
      %p4339 = pneg %p4338
    $region82: #{convlstm2_forward.1} parent=5 // pred_check_branch
      %4341 = sbr.rel (%p4339) target = $region84
    $region83: #{convlstm2_forward.1} parent=5 // pred_region
      %s4342 = ssub.s32 %s21, 2
      // Predicated region
      $region85: #{convlstm2_forward.1} parent=83 // pred_check
        %p4343 = pneg %p306
      $region86: #{convlstm2_forward.1} parent=83 // pred_check_branch
        %4345 = sbr.rel (%p4343) target = $region88
      $region87: #{convlstm2_forward.1} parent=83 // pred_region
        %p4346 = scmp.lt.s32.totalorder %s27, 1
        %s4347 = scalar_select %p4346, %s27, 1
        %s4348 = smul.addr %s4347, 2
        %s4349 = smul.addr %s4348, 8
        %s4350 = scalar_lea.vmem %s11, %s4349
      $region88: #{convlstm2_forward.1} parent=83 // pred_fallthru
        _
      // Predicated region
      $region89: #{convlstm2_forward.1} parent=83 // pred_check
        %p4351 = pneg %p332
      $region90: #{convlstm2_forward.1} parent=83 // pred_check_branch
        %4353 = sbr.rel (%p4351) target = $region92
      $region91: #{convlstm2_forward.1} parent=83 // pred_region
        %p4354 = scmp.lt.s32.totalorder %s27, 1
        %s4355 = scalar_select %p4354, %s27, 1
        %s4356 = smul.addr %s4355, 2
        %s4357 = smul.addr %s4356, 8
        %s4358 = scalar_lea.vmem %s12, %s4357
      $region92: #{convlstm2_forward.1} parent=83 // pred_fallthru
        _
      // Predicated region
      $region93: #{convlstm2_forward.1} parent=83 // pred_check
        %p4359 = pneg %p358
      $region94: #{convlstm2_forward.1} parent=83 // pred_check_branch
        %4361 = sbr.rel (%p4359) target = $region96
      $region95: #{convlstm2_forward.1} parent=83 // pred_region
        %p4362 = scmp.lt.s32.totalorder %s27, 1
        %s4363 = scalar_select %p4362, %s27, 1
        %s4364 = smul.addr %s4363, 2
        %s4365 = smul.addr %s4364, 8
        %s4366 = scalar_lea.vmem %s13, %s4365
      $region96: #{convlstm2_forward.1} parent=83 // pred_fallthru
        _
      // Predicated region
      $region97: #{convlstm2_forward.1} parent=83 // pred_check
        %p4367 = pneg %p384
      $region98: #{convlstm2_forward.1} parent=83 // pred_check_branch
        %4369 = sbr.rel (%p4367) target = $region100
      $region99: #{convlstm2_forward.1} parent=83 // pred_region
        %p4370 = scmp.lt.s32.totalorder %s27, 1
        %s4371 = scalar_select %p4370, %s27, 1
        %s4372 = smul.addr %s4371, 2
        %s4373 = smul.addr %s4372, 8
        %s4374 = scalar_lea.vmem %s14, %s4373
      $region100: #{convlstm2_forward.1} parent=83 // pred_fallthru
        _
    $region84: #{convlstm2_forward.1} parent=5 // pred_fallthru
      _
  $region6: #{convlstm2_forward.1} parent=0 // loop_footer
    %s25 = sadd.s32 1, %s21
  $region7: #{convlstm2_forward.1} parent=0 // loop_footer_branch
    %20 = sbr.rel target = $region3
  $region8: #{convlstm2_forward.1} parent=0 // loop_exit
    _

</llo_original>
